<compile_context>
chip_gen: v7x
topology: tpu7x:2x2x1
jax: 0.10.0
libtpu: 0.0.40
codegen_flags: <defaults>
</compile_context>

<pallas_src>
import functools

import jax
import jax.numpy as jnp
from jax import lax
from jax.experimental import pallas as pl
from jax.experimental.pallas import tpu as pltpu

T_STEPS = 1000  # DiffusionModel(T=1000)


# ----------------------------------------------------------------------------
# Fused Pallas kernel: time-MLP + conv3x3 + time-bias + swish + conv3x3
# ----------------------------------------------------------------------------
def _fused_score_kernel(feat_ref, x_ref,
                        wt1_ref, bt1_ref, wt2_ref, bt2_ref,
                        wc1_ref, bc1_ref, wc2t_ref, bc2_ref,
                        o_ref,
                        xpad_ref, hpad_ref, p1_ref, p2_ref,
                        *, H, W, cin, chid, cout):
    """One batch example per grid step.

    feat_ref : (1, 1, E)        Gaussian-Fourier time features
    x_ref    : (1, H, W, cin)   NHWC input (unpadded)
    wt1/bt1  : (E, E), (1, E)   time MLP layer 1
    wt2/bt2  : (E, chid),(1,chid) time MLP layer 2 (-> per-example channel bias)
    wc1_ref  : (9*cin, chid)    conv1 taps, im2col layout
    bc1_ref  : (1, chid)
    wc2t_ref : (cout, 9*chid)   conv2 taps, transposed im2col layout
    bc2_ref  : (cout, 1)
    o_ref    : (1, cout, H*W)   lane-dense output (reshaped to NCHW by wrapper)

    scratch:
    xpad_ref : (H+2, W+2, cin)  zero-halo padded input
    hpad_ref : (H+2, W+2, chid) zero-halo padded intermediate h (stays in VMEM)
    p1_ref   : (H*W, 9*cin)     im2col patches for conv1
    p2_ref   : (H*W, 9*chid)    im2col patches for conv2
    """
    HW = H * W

    # ---- time MLP (folded in; two tiny MXU dots) ---------------------------
    f = feat_ref[0]                                                     # (1, E)
    t1 = jnp.dot(f, wt1_ref[...], preferred_element_type=jnp.float32) + bt1_ref[...]
    t1 = t1 * jax.nn.sigmoid(t1)                                        # swish
    tbias = (jnp.dot(t1, wt2_ref[...], preferred_element_type=jnp.float32)
             + bt2_ref[...])                                            # (1, chid)

    # ---- conv1: halo in VMEM scratch, im2col, single wide-K matmul ---------
    xpad_ref[...] = jnp.zeros_like(xpad_ref)
    xpad_ref[1:H + 1, 1:W + 1, :] = x_ref[0]
    xp = xpad_ref[...]                                                  # (H+2, W+2, cin)
    for k in range(9):
        ky, kx = k // 3, k % 3
        p1_ref[:, k * cin:(k + 1) * cin] = (
            xp[ky:ky + H, kx:kx + W, :].reshape(HW, cin))
    h1 = jnp.dot(p1_ref[...], wc1_ref[...],
                 preferred_element_type=jnp.float32)                    # (HW, chid)
    h1 = h1 + bc1_ref[...] + tbias
    h1 = h1 * jax.nn.sigmoid(h1)                                        # swish

    # ---- conv2: h stays in VMEM; output built lane-dense as (cout, HW) -----
    hpad_ref[...] = jnp.zeros_like(hpad_ref)
    hpad_ref[1:H + 1, 1:W + 1, :] = h1.reshape(H, W, chid)
    hp = hpad_ref[...]                                                  # (H+2, W+2, chid)
    for k in range(9):
        ky, kx = k // 3, k % 3
        p2_ref[:, k * chid:(k + 1) * chid] = (
            hp[ky:ky + H, kx:kx + W, :].reshape(HW, chid))
    # (cout, 9*chid) x (HW, 9*chid) contracted over the shared K axis
    out = lax.dot_general(
        wc2t_ref[...], p2_ref[...],
        dimension_numbers=(((1,), (1,)), ((), ())),
        preferred_element_type=jnp.float32)                             # (cout, HW)
    o_ref[0] = out + bc2_ref[...]                                       # lane-dense store


def fused_score_pallas(x_nhwc, feat, p):
    n, H, W, cin = x_nhwc.shape
    chid = p["w_c1"].shape[-1]
    cout = p["w_c2"].shape[-1]
    embed = p["w_t1"].shape[0]
    HW = H * W

    wc1r = p["w_c1"].reshape(9 * cin, chid)                 # im2col conv1 weights
    wc2t = p["w_c2"].reshape(9 * chid, cout).T              # (cout, 9*chid)
    feat3 = feat.reshape(n, 1, embed)

    kernel = functools.partial(
        _fused_score_kernel, H=H, W=W, cin=cin, chid=chid, cout=cout)

    out = pl.pallas_call(
        kernel,
        out_shape=jax.ShapeDtypeStruct((n, cout, HW), jnp.float32),
        grid=(n,),
        in_specs=[
            pl.BlockSpec((1, 1, embed), lambda i: (i, 0, 0)),      # feat
            pl.BlockSpec((1, H, W, cin), lambda i: (i, 0, 0, 0)),  # x (NHWC)
            pl.BlockSpec((embed, embed), lambda i: (0, 0)),        # w_t1
            pl.BlockSpec((1, embed), lambda i: (0, 0)),            # b_t1
            pl.BlockSpec((embed, chid), lambda i: (0, 0)),         # w_t2
            pl.BlockSpec((1, chid), lambda i: (0, 0)),             # b_t2
            pl.BlockSpec((9 * cin, chid), lambda i: (0, 0)),       # w_c1 (im2col)
            pl.BlockSpec((1, chid), lambda i: (0, 0)),             # b_c1
            pl.BlockSpec((cout, 9 * chid), lambda i: (0, 0)),      # w_c2^T (im2col)
            pl.BlockSpec((cout, 1), lambda i: (0, 0)),             # b_c2
        ],
        out_specs=pl.BlockSpec((1, cout, HW), lambda i: (i, 0, 0)),
        scratch_shapes=[
            pltpu.VMEM((H + 2, W + 2, cin), jnp.float32),
            pltpu.VMEM((H + 2, W + 2, chid), jnp.float32),
            pltpu.VMEM((HW, 9 * cin), jnp.float32),
            pltpu.VMEM((HW, 9 * chid), jnp.float32),
        ],
        compiler_params=pltpu.CompilerParams(
            dimension_semantics=("parallel",)),
    )(feat3, x_nhwc,
      p["w_t1"], p["b_t1"].reshape(1, -1),
      p["w_t2"], p["b_t2"].reshape(1, -1),
      wc1r, p["b_c1"].reshape(1, -1),
      wc2t, p["b_c2"].reshape(-1, 1))

    # (N, cout, H*W) -> (N, cout, H, W): free, contiguous reshape to NCHW.
    return out.reshape(n, cout, H, W)


# ----------------------------------------------------------------------------
# Score model (synthetic, deterministic) + DiffusionModel forward
# ----------------------------------------------------------------------------
def make_params(cin=4, chid=32, embed=32):
    key = jax.random.PRNGKey(0)
    ks = jax.random.split(key, 5)
    f32 = jnp.float32
    return {
        "wf":   (jax.random.normal(ks[0], (embed // 2,)) * 30.0).astype(f32),
        "w_t1": (jax.random.normal(ks[1], (embed, embed)) * 0.1).astype(f32),
        "b_t1": jnp.zeros((embed,), f32),
        "w_t2": (jax.random.normal(ks[2], (embed, chid)) * 0.1).astype(f32),
        "b_t2": jnp.zeros((chid,), f32),
        "w_c1": (jax.random.normal(ks[3], (3, 3, cin, chid)) * 0.1).astype(f32),
        "b_c1": jnp.zeros((chid,), f32),
        "w_c2": (jax.random.normal(ks[4], (3, 3, chid, cin)) * 0.1).astype(f32),
        "b_c2": jnp.zeros((cin,), f32),
    }


def score_model_pallas(x_nchw, t_norm, p):
    # Gaussian Fourier projection of normalized time (tiny elementwise glue).
    proj = t_norm[:, None] * p["wf"][None, :] * (2.0 * jnp.pi)
    feat = jnp.concatenate([jnp.sin(proj), jnp.cos(proj)], axis=-1)     # (N, E)
    x = jnp.transpose(x_nchw, (0, 2, 3, 1))                             # NCHW -> NHWC
    return fused_score_pallas(x, feat, p)                               # already NCHW


def diffusion_forward_pallas(XT_nchw, t, params, T=T_STEPS):
    # time_embedding(t) is the identity (see module docstring).
    t_emb = t.astype(jnp.float32)
    return score_model_pallas(XT_nchw, t_emb / (T - 1), params)


# ----------------------------------------------------------------------------
# Pure-JAX reference (for correctness check only)
# ----------------------------------------------------------------------------
def diffusion_forward_ref(XT_nchw, t, p, T=T_STEPS):
    t_norm = t.astype(jnp.float32) / (T - 1)
    proj = t_norm[:, None] * p["wf"][None, :] * (2.0 * jnp.pi)
    feat = jnp.concatenate([jnp.sin(proj), jnp.cos(proj)], axis=-1)
    h = feat @ p["w_t1"] + p["b_t1"]
    h = h * jax.nn.sigmoid(h)
    tbias = h @ p["w_t2"] + p["b_t2"]

    x = jnp.transpose(XT_nchw, (0, 2, 3, 1))

    def conv(v, w, b):
        return lax.conv_general_dilated(
            v, w, (1, 1), "SAME",
            dimension_numbers=("NHWC", "HWIO", "NHWC")) + b

    h1 = conv(x, p["w_c1"], p["b_c1"]) + tbias[:, None, None, :]
    h1 = h1 * jax.nn.sigmoid(h1)
    out = conv(h1, p["w_c2"], p["b_c2"])
    return jnp.transpose(out, (0, 3, 1, 2))


# ----------------------------------------------------------------------------
if __name__ == "__main__":
    N, C, H, W = 2, 4, 16, 16
    params = make_params(cin=C, chid=32, embed=32)

    key = jax.random.PRNGKey(0)
    kx, kt = jax.random.split(key)
    XT = jax.random.normal(kx, (N, C, H, W), jnp.float32)               # noisy input, NCHW
    t = jax.random.randint(kt, (N,), 0, T_STEPS).astype(jnp.float32)    # time indices

    out = jax.jit(diffusion_forward_pallas)(XT, t, params)
    out = jax.block_until_ready(out)

    ref = diffusion_forward_ref(XT, t, params)
    assert out.shape == (N, C, H, W)
    assert jnp.allclose(out, ref, atol=1e-3, rtol=1e-3), "mismatch vs JAX reference"

    print("KERNEL_OK")
</pallas_src>

<mosaic_0001>
module attributes {stable_mosaic.version = 11 : i64} {
  func.func @_fused_score_kernel(%arg0: i32, %arg1: memref<1x1x32xf32, #tpu.memory_space<vmem>>, %arg2: memref<1x16x16x4xf32, #tpu.memory_space<vmem>>, %arg3: memref<32x32xf32, #tpu.memory_space<vmem>>, %arg4: memref<1x32xf32, #tpu.memory_space<vmem>>, %arg5: memref<32x32xf32, #tpu.memory_space<vmem>>, %arg6: memref<1x32xf32, #tpu.memory_space<vmem>>, %arg7: memref<36x32xf32, #tpu.memory_space<vmem>>, %arg8: memref<1x32xf32, #tpu.memory_space<vmem>>, %arg9: memref<4x288xf32, #tpu.memory_space<vmem>>, %arg10: memref<4x1xf32, #tpu.memory_space<vmem>>, %arg11: memref<1x4x256xf32, #tpu.memory_space<vmem>>, %arg12: memref<18x18x4xf32, #tpu.memory_space<vmem>>, %arg13: memref<18x18x32xf32, #tpu.memory_space<vmem>>, %arg14: memref<256x36xf32, #tpu.memory_space<vmem>>, %arg15: memref<256x288xf32, #tpu.memory_space<vmem>>) attributes {dimension_semantics = [#tpu.dimension_semantics<parallel>], iteration_bounds = array<i64: 2>, scalar_prefetch = 0 : i64, scratch_operands = 4 : i64, tpu.core_type = #tpu.core_type<tc>, window_params = [{transform_indices = @transform_0, window_bounds = array<i64: 1, 1, 32>}, {transform_indices = @transform_1, window_bounds = array<i64: 1, 16, 16, 4>}, {pipeline_mode = #tpu.pipeline_mode<synchronous>, transform_indices = @transform_2, window_bounds = array<i64: 32, 32>}, {pipeline_mode = #tpu.pipeline_mode<synchronous>, transform_indices = @transform_3, window_bounds = array<i64: 1, 32>}, {pipeline_mode = #tpu.pipeline_mode<synchronous>, transform_indices = @transform_4, window_bounds = array<i64: 32, 32>}, {pipeline_mode = #tpu.pipeline_mode<synchronous>, transform_indices = @transform_5, window_bounds = array<i64: 1, 32>}, {pipeline_mode = #tpu.pipeline_mode<synchronous>, transform_indices = @transform_6, window_bounds = array<i64: 36, 32>}, {pipeline_mode = #tpu.pipeline_mode<synchronous>, transform_indices = @transform_7, window_bounds = array<i64: 1, 32>}, {pipeline_mode = #tpu.pipeline_mode<synchronous>, transform_indices = @transform_8, window_bounds = array<i64: 4, 288>}, {pipeline_mode = #tpu.pipeline_mode<synchronous>, transform_indices = @transform_9, window_bounds = array<i64: 4, 1>}, {transform_indices = @transform_10, window_bounds = array<i64: 1, 4, 256>}]} {
    %c0 = arith.constant 0 : index
    %c0_0 = arith.constant 0 : index
    %c0_1 = arith.constant 0 : index
    %0 = vector.load %arg1[%c0, %c0_0, %c0_1] : memref<1x1x32xf32, #tpu.memory_space<vmem>>, vector<1x1x32xf32>
    %1 = vector.shape_cast %0 : vector<1x1x32xf32> to vector<1x32xf32>
    %c0_2 = arith.constant 0 : index
    %c0_3 = arith.constant 0 : index
    %2 = vector.load %arg3[%c0_2, %c0_3] : memref<32x32xf32, #tpu.memory_space<vmem>>, vector<32x32xf32>
    %cst = arith.constant dense<0.000000e+00> : vector<1x32xf32>
    %3 = tpu.matmul %1, %2, %cst {dimension_numbers = #tpu.dot_dimension_numbers<[1], [0], [0], [1], [0, 0, 1, 1], [], []>} : vector<1x32xf32>, vector<32x32xf32>, vector<1x32xf32> -> vector<1x32xf32>
    %c0_4 = arith.constant 0 : index
    %c0_5 = arith.constant 0 : index
    %4 = vector.load %arg4[%c0_4, %c0_5] : memref<1x32xf32, #tpu.memory_space<vmem>>, vector<1x32xf32>
    %5 = arith.addf %3, %4 : vector<1x32xf32>
    %6 = arith.negf %5 : vector<1x32xf32>
    %7 = math.exp %6 : vector<1x32xf32>
    %cst_6 = arith.constant 1.000000e+00 : f32
    %8 = vector.broadcast %cst_6 : f32 to vector<1x32xf32>
    %9 = arith.addf %8, %7 : vector<1x32xf32>
    %10 = arith.divf %8, %9 : vector<1x32xf32>
    %11 = arith.mulf %5, %10 : vector<1x32xf32>
    %c0_7 = arith.constant 0 : index
    %c0_8 = arith.constant 0 : index
    %12 = vector.load %arg5[%c0_7, %c0_8] : memref<32x32xf32, #tpu.memory_space<vmem>>, vector<32x32xf32>
    %cst_9 = arith.constant dense<0.000000e+00> : vector<1x32xf32>
    %13 = tpu.matmul %11, %12, %cst_9 {dimension_numbers = #tpu.dot_dimension_numbers<[1], [0], [0], [1], [0, 0, 1, 1], [], []>} : vector<1x32xf32>, vector<32x32xf32>, vector<1x32xf32> -> vector<1x32xf32>
    %c0_10 = arith.constant 0 : index
    %c0_11 = arith.constant 0 : index
    %14 = vector.load %arg6[%c0_10, %c0_11] : memref<1x32xf32, #tpu.memory_space<vmem>>, vector<1x32xf32>
    %15 = arith.addf %13, %14 : vector<1x32xf32>
    %cst_12 = arith.constant 0.000000e+00 : f32
    %16 = vector.broadcast %cst_12 : f32 to vector<18x18x4xf32>
    %c0_13 = arith.constant 0 : index
    %c0_14 = arith.constant 0 : index
    %c0_15 = arith.constant 0 : index
    %17 = vector.load %arg12[%c0_13, %c0_14, %c0_15] : memref<18x18x4xf32, #tpu.memory_space<vmem>>, vector<18x18x4xf32>
    tpu.vector_store %arg12[%c0_13, %c0_14, %c0_15], %16 {strides = array<i32>} : memref<18x18x4xf32, #tpu.memory_space<vmem>>, vector<18x18x4xf32>,
    %c0_16 = arith.constant 0 : index
    %c0_17 = arith.constant 0 : index
    %c0_18 = arith.constant 0 : index
    %c0_19 = arith.constant 0 : index
    %18 = vector.load %arg2[%c0_16, %c0_17, %c0_18, %c0_19] : memref<1x16x16x4xf32, #tpu.memory_space<vmem>>, vector<1x16x16x4xf32>
    %19 = vector.shape_cast %18 : vector<1x16x16x4xf32> to vector<16x16x4xf32>
    %c1 = arith.constant 1 : index
    %c1_20 = arith.constant 1 : index
    %c0_21 = arith.constant 0 : index
    %20 = vector.load %arg12[%c1, %c1_20, %c0_21] : memref<18x18x4xf32, #tpu.memory_space<vmem>>, vector<16x16x4xf32>
    tpu.vector_store %arg12[%c1, %c1_20, %c0_21], %19 {strides = array<i32>} : memref<18x18x4xf32, #tpu.memory_space<vmem>>, vector<16x16x4xf32>,
    %c0_22 = arith.constant 0 : index
    %c0_23 = arith.constant 0 : index
    %c0_24 = arith.constant 0 : index
    %21 = vector.load %arg12[%c0_22, %c0_23, %c0_24] : memref<18x18x4xf32, #tpu.memory_space<vmem>>, vector<18x18x4xf32>
    %22 = vector.extract_strided_slice %21 {offsets = [0, 0, 0], sizes = [16, 16, 4], strides = [1, 1, 1]} : vector<18x18x4xf32> to vector<16x16x4xf32>
    %23 = vector.shape_cast %22 : vector<16x16x4xf32> to vector<256x4xf32>
    %c0_25 = arith.constant 0 : index
    %c0_26 = arith.constant 0 : index
    %24 = vector.load %arg14[%c0_25, %c0_26] : memref<256x36xf32, #tpu.memory_space<vmem>>, vector<256x4xf32>
    tpu.vector_store %arg14[%c0_25, %c0_26], %23 {strides = array<i32>} : memref<256x36xf32, #tpu.memory_space<vmem>>, vector<256x4xf32>,
    %25 = vector.extract_strided_slice %21 {offsets = [0, 1, 0], sizes = [16, 16, 4], strides = [1, 1, 1]} : vector<18x18x4xf32> to vector<16x16x4xf32>
    %26 = vector.shape_cast %25 : vector<16x16x4xf32> to vector<256x4xf32>
    %c0_27 = arith.constant 0 : index
    %c4 = arith.constant 4 : index
    %27 = vector.load %arg14[%c0_27, %c4] : memref<256x36xf32, #tpu.memory_space<vmem>>, vector<256x4xf32>
    tpu.vector_store %arg14[%c0_27, %c4], %26 {strides = array<i32>} : memref<256x36xf32, #tpu.memory_space<vmem>>, vector<256x4xf32>,
    %28 = vector.extract_strided_slice %21 {offsets = [0, 2, 0], sizes = [16, 16, 4], strides = [1, 1, 1]} : vector<18x18x4xf32> to vector<16x16x4xf32>
    %29 = vector.shape_cast %28 : vector<16x16x4xf32> to vector<256x4xf32>
    %c0_28 = arith.constant 0 : index
    %c8 = arith.constant 8 : index
    %30 = vector.load %arg14[%c0_28, %c8] : memref<256x36xf32, #tpu.memory_space<vmem>>, vector<256x4xf32>
    tpu.vector_store %arg14[%c0_28, %c8], %29 {strides = array<i32>} : memref<256x36xf32, #tpu.memory_space<vmem>>, vector<256x4xf32>,
    %31 = vector.extract_strided_slice %21 {offsets = [1, 0, 0], sizes = [16, 16, 4], strides = [1, 1, 1]} : vector<18x18x4xf32> to vector<16x16x4xf32>
    %32 = vector.shape_cast %31 : vector<16x16x4xf32> to vector<256x4xf32>
    %c0_29 = arith.constant 0 : index
    %c12 = arith.constant 12 : index
    %33 = vector.load %arg14[%c0_29, %c12] : memref<256x36xf32, #tpu.memory_space<vmem>>, vector<256x4xf32>
    tpu.vector_store %arg14[%c0_29, %c12], %32 {strides = array<i32>} : memref<256x36xf32, #tpu.memory_space<vmem>>, vector<256x4xf32>,
    %34 = vector.extract_strided_slice %21 {offsets = [1, 1, 0], sizes = [16, 16, 4], strides = [1, 1, 1]} : vector<18x18x4xf32> to vector<16x16x4xf32>
    %35 = vector.shape_cast %34 : vector<16x16x4xf32> to vector<256x4xf32>
    %c0_30 = arith.constant 0 : index
    %c16 = arith.constant 16 : index
    %36 = vector.load %arg14[%c0_30, %c16] : memref<256x36xf32, #tpu.memory_space<vmem>>, vector<256x4xf32>
    tpu.vector_store %arg14[%c0_30, %c16], %35 {strides = array<i32>} : memref<256x36xf32, #tpu.memory_space<vmem>>, vector<256x4xf32>,
    %37 = vector.extract_strided_slice %21 {offsets = [1, 2, 0], sizes = [16, 16, 4], strides = [1, 1, 1]} : vector<18x18x4xf32> to vector<16x16x4xf32>
    %38 = vector.shape_cast %37 : vector<16x16x4xf32> to vector<256x4xf32>
    %c0_31 = arith.constant 0 : index
    %c20 = arith.constant 20 : index
    %39 = vector.load %arg14[%c0_31, %c20] : memref<256x36xf32, #tpu.memory_space<vmem>>, vector<256x4xf32>
    tpu.vector_store %arg14[%c0_31, %c20], %38 {strides = array<i32>} : memref<256x36xf32, #tpu.memory_space<vmem>>, vector<256x4xf32>,
    %40 = vector.extract_strided_slice %21 {offsets = [2, 0, 0], sizes = [16, 16, 4], strides = [1, 1, 1]} : vector<18x18x4xf32> to vector<16x16x4xf32>
    %41 = vector.shape_cast %40 : vector<16x16x4xf32> to vector<256x4xf32>
    %c0_32 = arith.constant 0 : index
    %c24 = arith.constant 24 : index
    %42 = vector.load %arg14[%c0_32, %c24] : memref<256x36xf32, #tpu.memory_space<vmem>>, vector<256x4xf32>
    tpu.vector_store %arg14[%c0_32, %c24], %41 {strides = array<i32>} : memref<256x36xf32, #tpu.memory_space<vmem>>, vector<256x4xf32>,
    %43 = vector.extract_strided_slice %21 {offsets = [2, 1, 0], sizes = [16, 16, 4], strides = [1, 1, 1]} : vector<18x18x4xf32> to vector<16x16x4xf32>
    %44 = vector.shape_cast %43 : vector<16x16x4xf32> to vector<256x4xf32>
    %c0_33 = arith.constant 0 : index
    %c28 = arith.constant 28 : index
    %45 = vector.load %arg14[%c0_33, %c28] : memref<256x36xf32, #tpu.memory_space<vmem>>, vector<256x4xf32>
    tpu.vector_store %arg14[%c0_33, %c28], %44 {strides = array<i32>} : memref<256x36xf32, #tpu.memory_space<vmem>>, vector<256x4xf32>,
    %46 = vector.extract_strided_slice %21 {offsets = [2, 2, 0], sizes = [16, 16, 4], strides = [1, 1, 1]} : vector<18x18x4xf32> to vector<16x16x4xf32>
    %47 = vector.shape_cast %46 : vector<16x16x4xf32> to vector<256x4xf32>
    %c0_34 = arith.constant 0 : index
    %c32 = arith.constant 32 : index
    %48 = vector.load %arg14[%c0_34, %c32] : memref<256x36xf32, #tpu.memory_space<vmem>>, vector<256x4xf32>
    tpu.vector_store %arg14[%c0_34, %c32], %47 {strides = array<i32>} : memref<256x36xf32, #tpu.memory_space<vmem>>, vector<256x4xf32>,
    %c0_35 = arith.constant 0 : index
    %c0_36 = arith.constant 0 : index
    %49 = vector.load %arg14[%c0_35, %c0_36] : memref<256x36xf32, #tpu.memory_space<vmem>>, vector<256x36xf32>
    %c0_37 = arith.constant 0 : index
    %c0_38 = arith.constant 0 : index
    %50 = vector.load %arg7[%c0_37, %c0_38] : memref<36x32xf32, #tpu.memory_space<vmem>>, vector<36x32xf32>
    %cst_39 = arith.constant dense<0.000000e+00> : vector<256x32xf32>
    %51 = tpu.matmul %49, %50, %cst_39 {dimension_numbers = #tpu.dot_dimension_numbers<[1], [0], [0], [1], [0, 0, 1, 1], [], []>} : vector<256x36xf32>, vector<36x32xf32>, vector<256x32xf32> -> vector<256x32xf32>
    %c0_40 = arith.constant 0 : index
    %c0_41 = arith.constant 0 : index
    %52 = vector.load %arg8[%c0_40, %c0_41] : memref<1x32xf32, #tpu.memory_space<vmem>>, vector<1x32xf32>
    %53 = vector.broadcast %52 : vector<1x32xf32> to vector<256x32xf32>
    %54 = arith.addf %51, %53 : vector<256x32xf32>
    %55 = vector.broadcast %15 : vector<1x32xf32> to vector<256x32xf32>
    %56 = arith.addf %54, %55 : vector<256x32xf32>
    %57 = arith.negf %56 : vector<256x32xf32>
    %58 = math.exp %57 : vector<256x32xf32>
    %cst_42 = arith.constant 1.000000e+00 : f32
    %59 = vector.broadcast %cst_42 : f32 to vector<256x32xf32>
    %60 = arith.addf %59, %58 : vector<256x32xf32>
    %61 = arith.divf %59, %60 : vector<256x32xf32>
    %62 = arith.mulf %56, %61 : vector<256x32xf32>
    %cst_43 = arith.constant 0.000000e+00 : f32
    %63 = vector.broadcast %cst_43 : f32 to vector<18x18x32xf32>
    %c0_44 = arith.constant 0 : index
    %c0_45 = arith.constant 0 : index
    %c0_46 = arith.constant 0 : index
    %64 = vector.load %arg13[%c0_44, %c0_45, %c0_46] : memref<18x18x32xf32, #tpu.memory_space<vmem>>, vector<18x18x32xf32>
    tpu.vector_store %arg13[%c0_44, %c0_45, %c0_46], %63 {strides = array<i32>} : memref<18x18x32xf32, #tpu.memory_space<vmem>>, vector<18x18x32xf32>,
    %65 = vector.shape_cast %62 : vector<256x32xf32> to vector<16x16x32xf32>
    %c1_47 = arith.constant 1 : index
    %c1_48 = arith.constant 1 : index
    %c0_49 = arith.constant 0 : index
    %66 = vector.load %arg13[%c1_47, %c1_48, %c0_49] : memref<18x18x32xf32, #tpu.memory_space<vmem>>, vector<16x16x32xf32>
    tpu.vector_store %arg13[%c1_47, %c1_48, %c0_49], %65 {strides = array<i32>} : memref<18x18x32xf32, #tpu.memory_space<vmem>>, vector<16x16x32xf32>,
    %c0_50 = arith.constant 0 : index
    %c0_51 = arith.constant 0 : index
    %c0_52 = arith.constant 0 : index
    %67 = vector.load %arg13[%c0_50, %c0_51, %c0_52] : memref<18x18x32xf32, #tpu.memory_space<vmem>>, vector<18x18x32xf32>
    %68 = vector.extract_strided_slice %67 {offsets = [0, 0, 0], sizes = [16, 16, 32], strides = [1, 1, 1]} : vector<18x18x32xf32> to vector<16x16x32xf32>
    %69 = vector.shape_cast %68 : vector<16x16x32xf32> to vector<256x32xf32>
    %c0_53 = arith.constant 0 : index
    %c0_54 = arith.constant 0 : index
    %70 = vector.load %arg15[%c0_53, %c0_54] : memref<256x288xf32, #tpu.memory_space<vmem>>, vector<256x32xf32>
    tpu.vector_store %arg15[%c0_53, %c0_54], %69 {strides = array<i32>} : memref<256x288xf32, #tpu.memory_space<vmem>>, vector<256x32xf32>,
    %71 = vector.extract_strided_slice %67 {offsets = [0, 1, 0], sizes = [16, 16, 32], strides = [1, 1, 1]} : vector<18x18x32xf32> to vector<16x16x32xf32>
    %72 = vector.shape_cast %71 : vector<16x16x32xf32> to vector<256x32xf32>
    %c0_55 = arith.constant 0 : index
    %c32_56 = arith.constant 32 : index
    %73 = vector.load %arg15[%c0_55, %c32_56] : memref<256x288xf32, #tpu.memory_space<vmem>>, vector<256x32xf32>
    tpu.vector_store %arg15[%c0_55, %c32_56], %72 {strides = array<i32>} : memref<256x288xf32, #tpu.memory_space<vmem>>, vector<256x32xf32>,
    %74 = vector.extract_strided_slice %67 {offsets = [0, 2, 0], sizes = [16, 16, 32], strides = [1, 1, 1]} : vector<18x18x32xf32> to vector<16x16x32xf32>
    %75 = vector.shape_cast %74 : vector<16x16x32xf32> to vector<256x32xf32>
    %c0_57 = arith.constant 0 : index
    %c64 = arith.constant 64 : index
    %76 = vector.load %arg15[%c0_57, %c64] : memref<256x288xf32, #tpu.memory_space<vmem>>, vector<256x32xf32>
    tpu.vector_store %arg15[%c0_57, %c64], %75 {strides = array<i32>} : memref<256x288xf32, #tpu.memory_space<vmem>>, vector<256x32xf32>,
    %77 = vector.extract_strided_slice %67 {offsets = [1, 0, 0], sizes = [16, 16, 32], strides = [1, 1, 1]} : vector<18x18x32xf32> to vector<16x16x32xf32>
    %78 = vector.shape_cast %77 : vector<16x16x32xf32> to vector<256x32xf32>
    %c0_58 = arith.constant 0 : index
    %c96 = arith.constant 96 : index
    %79 = vector.load %arg15[%c0_58, %c96] : memref<256x288xf32, #tpu.memory_space<vmem>>, vector<256x32xf32>
    tpu.vector_store %arg15[%c0_58, %c96], %78 {strides = array<i32>} : memref<256x288xf32, #tpu.memory_space<vmem>>, vector<256x32xf32>,
    %80 = vector.extract_strided_slice %67 {offsets = [1, 1, 0], sizes = [16, 16, 32], strides = [1, 1, 1]} : vector<18x18x32xf32> to vector<16x16x32xf32>
    %81 = vector.shape_cast %80 : vector<16x16x32xf32> to vector<256x32xf32>
    %c0_59 = arith.constant 0 : index
    %c128 = arith.constant 128 : index
    %82 = vector.load %arg15[%c0_59, %c128] : memref<256x288xf32, #tpu.memory_space<vmem>>, vector<256x32xf32>
    tpu.vector_store %arg15[%c0_59, %c128], %81 {strides = array<i32>} : memref<256x288xf32, #tpu.memory_space<vmem>>, vector<256x32xf32>,
    %83 = vector.extract_strided_slice %67 {offsets = [1, 2, 0], sizes = [16, 16, 32], strides = [1, 1, 1]} : vector<18x18x32xf32> to vector<16x16x32xf32>
    %84 = vector.shape_cast %83 : vector<16x16x32xf32> to vector<256x32xf32>
    %c0_60 = arith.constant 0 : index
    %c160 = arith.constant 160 : index
    %85 = vector.load %arg15[%c0_60, %c160] : memref<256x288xf32, #tpu.memory_space<vmem>>, vector<256x32xf32>
    tpu.vector_store %arg15[%c0_60, %c160], %84 {strides = array<i32>} : memref<256x288xf32, #tpu.memory_space<vmem>>, vector<256x32xf32>,
    %86 = vector.extract_strided_slice %67 {offsets = [2, 0, 0], sizes = [16, 16, 32], strides = [1, 1, 1]} : vector<18x18x32xf32> to vector<16x16x32xf32>
    %87 = vector.shape_cast %86 : vector<16x16x32xf32> to vector<256x32xf32>
    %c0_61 = arith.constant 0 : index
    %c192 = arith.constant 192 : index
    %88 = vector.load %arg15[%c0_61, %c192] : memref<256x288xf32, #tpu.memory_space<vmem>>, vector<256x32xf32>
    tpu.vector_store %arg15[%c0_61, %c192], %87 {strides = array<i32>} : memref<256x288xf32, #tpu.memory_space<vmem>>, vector<256x32xf32>,
    %89 = vector.extract_strided_slice %67 {offsets = [2, 1, 0], sizes = [16, 16, 32], strides = [1, 1, 1]} : vector<18x18x32xf32> to vector<16x16x32xf32>
    %90 = vector.shape_cast %89 : vector<16x16x32xf32> to vector<256x32xf32>
    %c0_62 = arith.constant 0 : index
    %c224 = arith.constant 224 : index
    %91 = vector.load %arg15[%c0_62, %c224] : memref<256x288xf32, #tpu.memory_space<vmem>>, vector<256x32xf32>
    tpu.vector_store %arg15[%c0_62, %c224], %90 {strides = array<i32>} : memref<256x288xf32, #tpu.memory_space<vmem>>, vector<256x32xf32>,
    %92 = vector.extract_strided_slice %67 {offsets = [2, 2, 0], sizes = [16, 16, 32], strides = [1, 1, 1]} : vector<18x18x32xf32> to vector<16x16x32xf32>
    %93 = vector.shape_cast %92 : vector<16x16x32xf32> to vector<256x32xf32>
    %c0_63 = arith.constant 0 : index
    %c256 = arith.constant 256 : index
    %94 = vector.load %arg15[%c0_63, %c256] : memref<256x288xf32, #tpu.memory_space<vmem>>, vector<256x32xf32>
    tpu.vector_store %arg15[%c0_63, %c256], %93 {strides = array<i32>} : memref<256x288xf32, #tpu.memory_space<vmem>>, vector<256x32xf32>,
    %c0_64 = arith.constant 0 : index
    %c0_65 = arith.constant 0 : index
    %95 = vector.load %arg9[%c0_64, %c0_65] : memref<4x288xf32, #tpu.memory_space<vmem>>, vector<4x288xf32>
    %c0_66 = arith.constant 0 : index
    %c0_67 = arith.constant 0 : index
    %96 = vector.load %arg15[%c0_66, %c0_67] : memref<256x288xf32, #tpu.memory_space<vmem>>, vector<256x288xf32>
    %cst_68 = arith.constant dense<0.000000e+00> : vector<4x256xf32>
    %97 = tpu.matmul %95, %96, %cst_68 {dimension_numbers = #tpu.dot_dimension_numbers<[1], [1], [0], [0], [0, 0, 1, 0], [], []>} : vector<4x288xf32>, vector<256x288xf32>, vector<4x256xf32> -> vector<4x256xf32>
    %c0_69 = arith.constant 0 : index
    %c0_70 = arith.constant 0 : index
    %98 = vector.load %arg10[%c0_69, %c0_70] : memref<4x1xf32, #tpu.memory_space<vmem>>, vector<4x1xf32>
    %99 = vector.broadcast %98 : vector<4x1xf32> to vector<4x256xf32>
    %100 = arith.addf %97, %99 : vector<4x256xf32>
    %c0_71 = arith.constant 0 : index
    %c0_72 = arith.constant 0 : index
    %c0_73 = arith.constant 0 : index
    %101 = vector.load %arg11[%c0_71, %c0_72, %c0_73] : memref<1x4x256xf32, #tpu.memory_space<vmem>>, vector<1x4x256xf32>
    %102 = vector.shape_cast %101 : vector<1x4x256xf32> to vector<4x256xf32>
    %103 = vector.shape_cast %100 : vector<4x256xf32> to vector<1x4x256xf32>
    tpu.vector_store %arg11[%c0_71, %c0_72, %c0_73], %103 {strides = array<i32>} : memref<1x4x256xf32, #tpu.memory_space<vmem>>, vector<1x4x256xf32>,
    return
  }
  func.func @transform_0(%arg0: i32) -> (i32, i32, i32) {
    %c0_i32 = arith.constant 0 : i32
    %c0_i32_0 = arith.constant 0 : i32
    %c0_i32_1 = arith.constant 0 : i32
    return %arg0, %c0_i32, %c0_i32_0 : i32, i32, i32
  }
  func.func @transform_1(%arg0: i32) -> (i32, i32, i32, i32) {
    %c0_i32 = arith.constant 0 : i32
    %c0_i32_0 = arith.constant 0 : i32
    %c0_i32_1 = arith.constant 0 : i32
    %c0_i32_2 = arith.constant 0 : i32
    return %arg0, %c0_i32, %c0_i32_0, %c0_i32_1 : i32, i32, i32, i32
  }
  func.func @transform_2(%arg0: i32) -> (i32, i32) {
    %c0_i32 = arith.constant 0 : i32
    %c0_i32_0 = arith.constant 0 : i32
    %c0_i32_1 = arith.constant 0 : i32
    return %c0_i32, %c0_i32_0 : i32, i32
  }
  func.func @transform_3(%arg0: i32) -> (i32, i32) {
    %c0_i32 = arith.constant 0 : i32
    %c0_i32_0 = arith.constant 0 : i32
    %c0_i32_1 = arith.constant 0 : i32
    return %c0_i32, %c0_i32_0 : i32, i32
  }
  func.func @transform_4(%arg0: i32) -> (i32, i32) {
    %c0_i32 = arith.constant 0 : i32
    %c0_i32_0 = arith.constant 0 : i32
    %c0_i32_1 = arith.constant 0 : i32
    return %c0_i32, %c0_i32_0 : i32, i32
  }
  func.func @transform_5(%arg0: i32) -> (i32, i32) {
    %c0_i32 = arith.constant 0 : i32
    %c0_i32_0 = arith.constant 0 : i32
    %c0_i32_1 = arith.constant 0 : i32
    return %c0_i32, %c0_i32_0 : i32, i32
  }
  func.func @transform_6(%arg0: i32) -> (i32, i32) {
    %c0_i32 = arith.constant 0 : i32
    %c0_i32_0 = arith.constant 0 : i32
    %c0_i32_1 = arith.constant 0 : i32
    return %c0_i32, %c0_i32_0 : i32, i32
  }
  func.func @transform_7(%arg0: i32) -> (i32, i32) {
    %c0_i32 = arith.constant 0 : i32
    %c0_i32_0 = arith.constant 0 : i32
    %c0_i32_1 = arith.constant 0 : i32
    return %c0_i32, %c0_i32_0 : i32, i32
  }
  func.func @transform_8(%arg0: i32) -> (i32, i32) {
    %c0_i32 = arith.constant 0 : i32
    %c0_i32_0 = arith.constant 0 : i32
    %c0_i32_1 = arith.constant 0 : i32
    return %c0_i32, %c0_i32_0 : i32, i32
  }
  func.func @transform_9(%arg0: i32) -> (i32, i32) {
    %c0_i32 = arith.constant 0 : i32
    %c0_i32_0 = arith.constant 0 : i32
    %c0_i32_1 = arith.constant 0 : i32
    return %c0_i32, %c0_i32_0 : i32, i32
  }
  func.func @transform_10(%arg0: i32) -> (i32, i32, i32) {
    %c0_i32 = arith.constant 0 : i32
    %c0_i32_0 = arith.constant 0 : i32
    %c0_i32_1 = arith.constant 0 : i32
    return %arg0, %c0_i32, %c0_i32_0 : i32, i32, i32
  }
}

</mosaic_0001>

<llo_original>
// kernel: diffusion_forward_pallas.1
$region0: #{diffusion_forward_pallas.1}
  #allocation0 [shape = 'u32[]', space=smem, size = 0x4, offset = 0x4, fixed_abs, tag = 'smem constant byte address 0x4 - core index']
  #allocation1 [shape = 'u32[144,128]{1,0:T(1,128)}', space=vmem, size = 0x12000, scoped, tag = 'internal scratch']
  #allocation2 [shape = 'f32[18,18,4]{2,1,0:T(8,128)}', space=vmem, size = 0x36000, scoped, tag = 'scratch operand']
  #allocation3 [shape = 'f32[18,18,32]{2,1,0:T(8,128)}', space=vmem, size = 0x36000, scoped, tag = 'scratch operand']
  #allocation4 [shape = 'f32[256,36]{1,0:T(8,128)}', space=vmem, size = 0x20000, scoped, tag = 'scratch operand']
  #allocation5 [shape = 'f32[256,288]{1,0:T(8,128)}', space=vmem, size = 0x60000, scoped, tag = 'scratch operand']
  %s0 = inlined_call_operand.vmem [shape: f32[2,1,32], index: 0, kind: input, shape index: {}]
  %s1 = inlined_call_operand.vmem [shape: f32[2,16,16,4], index: 1, kind: input, shape index: {}]
  %s2 = inlined_call_operand.vmem [shape: f32[32,32], index: 2, kind: input, shape index: {}]
  %s3 = inlined_call_operand.vmem [shape: f32[1,32], index: 3, kind: input, shape index: {}]
  %s4 = inlined_call_operand.vmem [shape: f32[32,32], index: 4, kind: input, shape index: {}]
  %s5 = inlined_call_operand.vmem [shape: f32[1,32], index: 5, kind: input, shape index: {}]
  %s6 = inlined_call_operand.vmem [shape: f32[36,32], index: 6, kind: input, shape index: {}]
  %s7 = inlined_call_operand.vmem [shape: f32[1,32], index: 7, kind: input, shape index: {}]
  %s8 = inlined_call_operand.vmem [shape: f32[4,288], index: 8, kind: input, shape index: {}]
  %s9 = inlined_call_operand.vmem [shape: f32[4,1], index: 9, kind: input, shape index: {}]
  %s10 = inlined_call_operand.vmem [shape: f32[2,4,256], index: 10, kind: output, shape index: {}]
  %s11 = sld [smem:[#allocation0]]
  $region73: #{diffusion_forward_pallas.1} parent=0
    _
  %s13 = ssub.s32 1, %s11
  %s14 = scalar_select 0, %s13, %s11
  loop: start=0, step=1, limit=4
  $region2: #{diffusion_forward_pallas.1} parent=0 // loop_pre_header
    _
  $region3: #{diffusion_forward_pallas.1} parent=0 // loop_header
    %s16 = sphi 0, %s20
    %p17 = scmp.ge.s32.totalorder %s16, 4
    %s26 = sphi 0, %s28
    %s29 = sphi 0, %s26
    %s30 = sphi 0, %s29
    %s46 = sphi 0, %s30
    %s52 = sphi 0, %s54
    %s55 = sphi 0, %s52
    %s56 = sphi 0, %s55
    %s72 = sphi 0, %s56
    %s76 = sphi 0, %s76
    %s78 = sphi 0, %s76
    %s79 = sphi 0, %s78
    %s93 = sphi 0, %s79
    %s97 = sphi 0, %s97
    %s99 = sphi 0, %s97
    %s100 = sphi 0, %s99
    %s114 = sphi 0, %s100
    %s118 = sphi 0, %s118
    %s120 = sphi 0, %s118
    %s121 = sphi 0, %s120
    %s135 = sphi 0, %s121
    %s139 = sphi 0, %s139
    %s141 = sphi 0, %s139
    %s142 = sphi 0, %s141
    %s156 = sphi 0, %s142
    %s160 = sphi 0, %s160
    %s162 = sphi 0, %s160
    %s163 = sphi 0, %s162
    %s177 = sphi 0, %s163
    %s181 = sphi 0, %s181
    %s183 = sphi 0, %s181
    %s184 = sphi 0, %s183
    %s198 = sphi 0, %s184
    %s202 = sphi 0, %s202
    %s204 = sphi 0, %s202
    %s205 = sphi 0, %s204
    %s219 = sphi 0, %s205
    %s223 = sphi 0, %s223
    %s225 = sphi 0, %s223
    %s226 = sphi 0, %s225
    %s240 = sphi 0, %s226
    %s246 = sphi 0, %s248
    %s249 = sphi 0, %s246
    %s250 = sphi 0, %s249
    %s266 = sphi 0, %s250
  $region4: #{diffusion_forward_pallas.1} parent=0 // loop_header_branch
    %19 = sbr.rel (%p17) target = $region8
  $region5: #{diffusion_forward_pallas.1} parent=0 // loop_body
    %s21 = ssub.s32 %s16, 1
    %s22 = ssub.s32 %s16, 2
    %s23 = sadd.s32 %s16, 1
    %s24 = ssub.s32 %s16, %s23
    %p25 = scmp.eq.s32.totalorder %s24, 0
    %s27 = sadd.s32 %s26, 1
    %s28 = scalar_select %p25, %s26, %s27
    %p31 = pneg %p25
    %p32 = scmp.eq.s32.totalorder %s16, 1
    %p33 = por %p31, %p32
    %p34 = scmp.ne.s32.totalorder %s26, %s29
    %p35 = scmp.eq.s32.totalorder %s16, 0
    %p36 = por %p34, %p35
    %p37 = scmp.ne.s32.totalorder %s26, %s29
    %p38 = scmp.eq.s32.totalorder %s21, 1
    %p39 = por %p37, %p38
    %p40 = scmp.ne.s32.totalorder %s29, %s30
    %p41 = scmp.eq.s32.totalorder %s21, 0
    %p42 = por %p40, %p41
    %p43 = scmp.ne.s32.totalorder %s29, %s30
    %p44 = scmp.eq.s32.totalorder %s22, 1
    %p45 = por %p43, %p44
    %p47 = scmp.ne.s32.totalorder %s30, %s46
    %p48 = scmp.eq.s32.totalorder %s22, 0
    %p49 = por %p47, %p48
    %s50 = ssub.s32 %s16, %s23
    %p51 = scmp.eq.s32.totalorder %s50, 0
    %s53 = sadd.s32 %s52, 1
    %s54 = scalar_select %p51, %s52, %s53
    %p57 = pneg %p51
    %p58 = scmp.eq.s32.totalorder %s16, 1
    %p59 = por %p57, %p58
    %p60 = scmp.ne.s32.totalorder %s52, %s55
    %p61 = scmp.eq.s32.totalorder %s16, 0
    %p62 = por %p60, %p61
    %p63 = scmp.ne.s32.totalorder %s52, %s55
    %p64 = scmp.eq.s32.totalorder %s21, 1
    %p65 = por %p63, %p64
    %p66 = scmp.ne.s32.totalorder %s55, %s56
    %p67 = scmp.eq.s32.totalorder %s21, 0
    %p68 = por %p66, %p67
    %p69 = scmp.ne.s32.totalorder %s55, %s56
    %p70 = scmp.eq.s32.totalorder %s22, 1
    %p71 = por %p69, %p70
    %p73 = scmp.ne.s32.totalorder %s56, %s72
    %p74 = scmp.eq.s32.totalorder %s22, 0
    %p75 = por %p73, %p74
    %s77 = sadd.s32 %s76, 1
    %p80 = scmp.eq.s32.totalorder %s16, 1
    %p81 = scmp.ne.s32.totalorder %s76, %s78
    %p82 = scmp.eq.s32.totalorder %s16, 0
    %p83 = por %p81, %p82
    %p84 = scmp.ne.s32.totalorder %s76, %s78
    %p85 = scmp.eq.s32.totalorder %s21, 1
    %p86 = por %p84, %p85
    %p87 = scmp.ne.s32.totalorder %s78, %s79
    %p88 = scmp.eq.s32.totalorder %s21, 0
    %p89 = por %p87, %p88
    %p90 = scmp.ne.s32.totalorder %s78, %s79
    %p91 = scmp.eq.s32.totalorder %s22, 1
    %p92 = por %p90, %p91
    %p94 = scmp.ne.s32.totalorder %s79, %s93
    %p95 = scmp.eq.s32.totalorder %s22, 0
    %p96 = por %p94, %p95
    %s98 = sadd.s32 %s97, 1
    %p101 = scmp.eq.s32.totalorder %s16, 1
    %p102 = scmp.ne.s32.totalorder %s97, %s99
    %p103 = scmp.eq.s32.totalorder %s16, 0
    %p104 = por %p102, %p103
    %p105 = scmp.ne.s32.totalorder %s97, %s99
    %p106 = scmp.eq.s32.totalorder %s21, 1
    %p107 = por %p105, %p106
    %p108 = scmp.ne.s32.totalorder %s99, %s100
    %p109 = scmp.eq.s32.totalorder %s21, 0
    %p110 = por %p108, %p109
    %p111 = scmp.ne.s32.totalorder %s99, %s100
    %p112 = scmp.eq.s32.totalorder %s22, 1
    %p113 = por %p111, %p112
    %p115 = scmp.ne.s32.totalorder %s100, %s114
    %p116 = scmp.eq.s32.totalorder %s22, 0
    %p117 = por %p115, %p116
    %s119 = sadd.s32 %s118, 1
    %p122 = scmp.eq.s32.totalorder %s16, 1
    %p123 = scmp.ne.s32.totalorder %s118, %s120
    %p124 = scmp.eq.s32.totalorder %s16, 0
    %p125 = por %p123, %p124
    %p126 = scmp.ne.s32.totalorder %s118, %s120
    %p127 = scmp.eq.s32.totalorder %s21, 1
    %p128 = por %p126, %p127
    %p129 = scmp.ne.s32.totalorder %s120, %s121
    %p130 = scmp.eq.s32.totalorder %s21, 0
    %p131 = por %p129, %p130
    %p132 = scmp.ne.s32.totalorder %s120, %s121
    %p133 = scmp.eq.s32.totalorder %s22, 1
    %p134 = por %p132, %p133
    %p136 = scmp.ne.s32.totalorder %s121, %s135
    %p137 = scmp.eq.s32.totalorder %s22, 0
    %p138 = por %p136, %p137
    %s140 = sadd.s32 %s139, 1
    %p143 = scmp.eq.s32.totalorder %s16, 1
    %p144 = scmp.ne.s32.totalorder %s139, %s141
    %p145 = scmp.eq.s32.totalorder %s16, 0
    %p146 = por %p144, %p145
    %p147 = scmp.ne.s32.totalorder %s139, %s141
    %p148 = scmp.eq.s32.totalorder %s21, 1
    %p149 = por %p147, %p148
    %p150 = scmp.ne.s32.totalorder %s141, %s142
    %p151 = scmp.eq.s32.totalorder %s21, 0
    %p152 = por %p150, %p151
    %p153 = scmp.ne.s32.totalorder %s141, %s142
    %p154 = scmp.eq.s32.totalorder %s22, 1
    %p155 = por %p153, %p154
    %p157 = scmp.ne.s32.totalorder %s142, %s156
    %p158 = scmp.eq.s32.totalorder %s22, 0
    %p159 = por %p157, %p158
    %s161 = sadd.s32 %s160, 1
    %p164 = scmp.eq.s32.totalorder %s16, 1
    %p165 = scmp.ne.s32.totalorder %s160, %s162
    %p166 = scmp.eq.s32.totalorder %s16, 0
    %p167 = por %p165, %p166
    %p168 = scmp.ne.s32.totalorder %s160, %s162
    %p169 = scmp.eq.s32.totalorder %s21, 1
    %p170 = por %p168, %p169
    %p171 = scmp.ne.s32.totalorder %s162, %s163
    %p172 = scmp.eq.s32.totalorder %s21, 0
    %p173 = por %p171, %p172
    %p174 = scmp.ne.s32.totalorder %s162, %s163
    %p175 = scmp.eq.s32.totalorder %s22, 1
    %p176 = por %p174, %p175
    %p178 = scmp.ne.s32.totalorder %s163, %s177
    %p179 = scmp.eq.s32.totalorder %s22, 0
    %p180 = por %p178, %p179
    %s182 = sadd.s32 %s181, 1
    %p185 = scmp.eq.s32.totalorder %s16, 1
    %p186 = scmp.ne.s32.totalorder %s181, %s183
    %p187 = scmp.eq.s32.totalorder %s16, 0
    %p188 = por %p186, %p187
    %p189 = scmp.ne.s32.totalorder %s181, %s183
    %p190 = scmp.eq.s32.totalorder %s21, 1
    %p191 = por %p189, %p190
    %p192 = scmp.ne.s32.totalorder %s183, %s184
    %p193 = scmp.eq.s32.totalorder %s21, 0
    %p194 = por %p192, %p193
    %p195 = scmp.ne.s32.totalorder %s183, %s184
    %p196 = scmp.eq.s32.totalorder %s22, 1
    %p197 = por %p195, %p196
    %p199 = scmp.ne.s32.totalorder %s184, %s198
    %p200 = scmp.eq.s32.totalorder %s22, 0
    %p201 = por %p199, %p200
    %s203 = sadd.s32 %s202, 1
    %p206 = scmp.eq.s32.totalorder %s16, 1
    %p207 = scmp.ne.s32.totalorder %s202, %s204
    %p208 = scmp.eq.s32.totalorder %s16, 0
    %p209 = por %p207, %p208
    %p210 = scmp.ne.s32.totalorder %s202, %s204
    %p211 = scmp.eq.s32.totalorder %s21, 1
    %p212 = por %p210, %p211
    %p213 = scmp.ne.s32.totalorder %s204, %s205
    %p214 = scmp.eq.s32.totalorder %s21, 0
    %p215 = por %p213, %p214
    %p216 = scmp.ne.s32.totalorder %s204, %s205
    %p217 = scmp.eq.s32.totalorder %s22, 1
    %p218 = por %p216, %p217
    %p220 = scmp.ne.s32.totalorder %s205, %s219
    %p221 = scmp.eq.s32.totalorder %s22, 0
    %p222 = por %p220, %p221
    %s224 = sadd.s32 %s223, 1
    %p227 = scmp.eq.s32.totalorder %s16, 1
    %p228 = scmp.ne.s32.totalorder %s223, %s225
    %p229 = scmp.eq.s32.totalorder %s16, 0
    %p230 = por %p228, %p229
    %p231 = scmp.ne.s32.totalorder %s223, %s225
    %p232 = scmp.eq.s32.totalorder %s21, 1
    %p233 = por %p231, %p232
    %p234 = scmp.ne.s32.totalorder %s225, %s226
    %p235 = scmp.eq.s32.totalorder %s21, 0
    %p236 = por %p234, %p235
    %p237 = scmp.ne.s32.totalorder %s225, %s226
    %p238 = scmp.eq.s32.totalorder %s22, 1
    %p239 = por %p237, %p238
    %p241 = scmp.ne.s32.totalorder %s226, %s240
    %p242 = scmp.eq.s32.totalorder %s22, 0
    %p243 = por %p241, %p242
    %s244 = ssub.s32 %s16, %s23
    %p245 = scmp.eq.s32.totalorder %s244, 0
    %s247 = sadd.s32 %s246, 1
    %s248 = scalar_select %p245, %s246, %s247
    %p251 = pneg %p245
    %p252 = scmp.eq.s32.totalorder %s16, 1
    %p253 = por %p251, %p252
    %p254 = scmp.ne.s32.totalorder %s246, %s249
    %p255 = scmp.eq.s32.totalorder %s16, 0
    %p256 = por %p254, %p255
    %p257 = scmp.ne.s32.totalorder %s246, %s249
    %p258 = scmp.eq.s32.totalorder %s21, 1
    %p259 = por %p257, %p258
    %p260 = scmp.ne.s32.totalorder %s249, %s250
    %p261 = scmp.eq.s32.totalorder %s21, 0
    %p262 = por %p260, %p261
    %p263 = scmp.ne.s32.totalorder %s249, %s250
    %p264 = scmp.eq.s32.totalorder %s22, 1
    %p265 = por %p263, %p264
    %p267 = scmp.ne.s32.totalorder %s250, %s266
    %p268 = scmp.eq.s32.totalorder %s22, 0
    %p269 = por %p267, %p268
    %p270 = scmp.le.s32.totalorder 1, %s16
    %p271 = scmp.lt.s32.totalorder %s16, 3
    %p272 = pnand %p270, %p271
    %p273 = pneg %p272
    // Predicated region
    $region9: #{diffusion_forward_pallas.1} parent=5 // pred_check
      _
    $region10: #{diffusion_forward_pallas.1} parent=5 // pred_check_branch
      %275 = sbr.rel (%p272) target = $region12
    $region11: #{diffusion_forward_pallas.1} parent=5 // pred_region
      %s276 = ssub.s32 %s16, 1
      // Predicated region
      $region13: #{diffusion_forward_pallas.1} parent=11 // pred_check
        %p277 = pneg %p89
      $region14: #{diffusion_forward_pallas.1} parent=11 // pred_check_branch
        %279 = sbr.rel (%p277) target = $region16
      $region15: #{diffusion_forward_pallas.1} parent=11 // pred_region
        _
      $region16: #{diffusion_forward_pallas.1} parent=11 // pred_fallthru
        _
      // Predicated region
      $region17: #{diffusion_forward_pallas.1} parent=11 // pred_check
        %p280 = pneg %p110
      $region18: #{diffusion_forward_pallas.1} parent=11 // pred_check_branch
        %282 = sbr.rel (%p280) target = $region20
      $region19: #{diffusion_forward_pallas.1} parent=11 // pred_region
        _
      $region20: #{diffusion_forward_pallas.1} parent=11 // pred_fallthru
        _
      // Predicated region
      $region21: #{diffusion_forward_pallas.1} parent=11 // pred_check
        %p283 = pneg %p131
      $region22: #{diffusion_forward_pallas.1} parent=11 // pred_check_branch
        %285 = sbr.rel (%p283) target = $region24
      $region23: #{diffusion_forward_pallas.1} parent=11 // pred_region
        _
      $region24: #{diffusion_forward_pallas.1} parent=11 // pred_fallthru
        _
      // Predicated region
      $region25: #{diffusion_forward_pallas.1} parent=11 // pred_check
        %p286 = pneg %p152
      $region26: #{diffusion_forward_pallas.1} parent=11 // pred_check_branch
        %288 = sbr.rel (%p286) target = $region28
      $region27: #{diffusion_forward_pallas.1} parent=11 // pred_region
        _
      $region28: #{diffusion_forward_pallas.1} parent=11 // pred_fallthru
        _
      // Predicated region
      $region29: #{diffusion_forward_pallas.1} parent=11 // pred_check
        %p289 = pneg %p173
      $region30: #{diffusion_forward_pallas.1} parent=11 // pred_check_branch
        %291 = sbr.rel (%p289) target = $region32
      $region31: #{diffusion_forward_pallas.1} parent=11 // pred_region
        _
      $region32: #{diffusion_forward_pallas.1} parent=11 // pred_fallthru
        _
      // Predicated region
      $region33: #{diffusion_forward_pallas.1} parent=11 // pred_check
        %p292 = pneg %p194
      $region34: #{diffusion_forward_pallas.1} parent=11 // pred_check_branch
        %294 = sbr.rel (%p292) target = $region36
      $region35: #{diffusion_forward_pallas.1} parent=11 // pred_region
        _
      $region36: #{diffusion_forward_pallas.1} parent=11 // pred_fallthru
        _
      // Predicated region
      $region37: #{diffusion_forward_pallas.1} parent=11 // pred_check
        %p295 = pneg %p215
      $region38: #{diffusion_forward_pallas.1} parent=11 // pred_check_branch
        %297 = sbr.rel (%p295) target = $region40
      $region39: #{diffusion_forward_pallas.1} parent=11 // pred_region
        _
      $region40: #{diffusion_forward_pallas.1} parent=11 // pred_fallthru
        _
      // Predicated region
      $region41: #{diffusion_forward_pallas.1} parent=11 // pred_check
        %p298 = pneg %p236
      $region42: #{diffusion_forward_pallas.1} parent=11 // pred_check_branch
        %300 = sbr.rel (%p298) target = $region44
      $region43: #{diffusion_forward_pallas.1} parent=11 // pred_region
        _
      $region44: #{diffusion_forward_pallas.1} parent=11 // pred_fallthru
        _
    $region12: #{diffusion_forward_pallas.1} parent=5 // pred_fallthru
      _
    %p301 = scmp.lt.s32.totalorder %s16, 2
    // Predicated region
    $region45: #{diffusion_forward_pallas.1} parent=5 // pred_check
      %p302 = pneg %p301
    $region46: #{diffusion_forward_pallas.1} parent=5 // pred_check_branch
      %304 = sbr.rel (%p302) target = $region48
    $region47: #{diffusion_forward_pallas.1} parent=5 // pred_region
      // Predicated region
      $region49: #{diffusion_forward_pallas.1} parent=47 // pred_check
        %p305 = pneg %p36
      $region50: #{diffusion_forward_pallas.1} parent=47 // pred_check_branch
        %307 = sbr.rel (%p305) target = $region52
      $region51: #{diffusion_forward_pallas.1} parent=47 // pred_region
        %p308 = scmp.lt.s32.totalorder %s16, 1
        %s309 = scalar_select %p308, %s16, 1
        %s310 = scalar_lea.vmem %s0, %s309
      $region52: #{diffusion_forward_pallas.1} parent=47 // pred_fallthru
        _
      // Predicated region
      $region53: #{diffusion_forward_pallas.1} parent=47 // pred_check
        %p311 = pneg %p62
      $region54: #{diffusion_forward_pallas.1} parent=47 // pred_check_branch
        %313 = sbr.rel (%p311) target = $region56
      $region55: #{diffusion_forward_pallas.1} parent=47 // pred_region
        %p314 = scmp.lt.s32.totalorder %s16, 1
        %s315 = scalar_select %p314, %s16, 1
        %s316 = smul.addr %s315, 32
        %s317 = smul.addr %s316, 8
        %s318 = scalar_lea.vmem %s1, %s317
      $region56: #{diffusion_forward_pallas.1} parent=47 // pred_fallthru
        _
    $region48: #{diffusion_forward_pallas.1} parent=5 // pred_fallthru
      _
    %p319 = scmp.le.s32.totalorder 1, %s16
    %p320 = scmp.lt.s32.totalorder %s16, 3
    %p321 = pnand %p319, %p320
    %p322 = pneg %p321
    // Predicated region
    $region57: #{diffusion_forward_pallas.1} parent=5 // pred_check
      _
    $region58: #{diffusion_forward_pallas.1} parent=5 // pred_check_branch
      %324 = sbr.rel (%p321) target = $region60
    $region59: #{diffusion_forward_pallas.1} parent=5 // pred_region
      %s325 = ssub.s32 %s16, 1
      %p326 = scmp.lt.s32.totalorder %s21, 1
      %s327 = scalar_select %p326, %s21, 1
      %s328 = scalar_lea.vmem %s0, %s327
      %p329 = pneg %p42
      %p330 = pneg %p39
      %p331 = scmp.lt.s32.totalorder %s21, 1
      %s332 = scalar_select %p331, %s21, 1
      %s333 = smul.addr %s332, 32
      %s334 = smul.addr %s333, 8
      %s335 = scalar_lea.vmem %s1, %s334
      %p336 = pneg %p68
      %p337 = pneg %p65
      %p338 = pneg %p89
      %p339 = pneg %p86
      %p340 = pneg %p110
      %p341 = pneg %p107
      %p342 = pneg %p131
      %p343 = pneg %p128
      %p344 = pneg %p152
      %p345 = pneg %p149
      %p346 = pneg %p173
      %p347 = pneg %p170
      %p348 = pneg %p194
      %p349 = pneg %p191
      %p350 = pneg %p215
      %p351 = pneg %p212
      %p352 = pneg %p236
      %p353 = pneg %p233
      %p354 = pneg %p262
      %p355 = pneg %p259
      %p356 = scmp.lt.s32.totalorder %s21, 1
      %s357 = scalar_select %p356, %s21, 1
      %s358 = smul.addr %s357, 2
      %s359 = smul.addr %s358, 4
      %s360 = scalar_lea.vmem %s10, %s359
      %p361 = scmp.lt.s32.totalorder %s21, 1
      %s362 = scalar_select %p361, %s21, 1
      %s363 = scalar_lea.vmem %s0, %s362
      %p364 = scmp.lt.s32.totalorder %s21, 1
      %s365 = scalar_select %p364, %s21, 1
      %s366 = smul.addr %s365, 32
      %s367 = smul.addr %s366, 8
      %s368 = scalar_lea.vmem %s1, %s367
      %p369 = scmp.lt.s32.totalorder %s21, 1
      %s370 = scalar_select %p369, %s21, 1
      %s371 = smul.addr %s370, 2
      %s372 = smul.addr %s371, 4
      %s373 = scalar_lea.vmem %s10, %s372
      %v374 = vld [vmem:[%s363] sm:$0x1]
      %v375 = vld [vmem:[%s2] sm:$0xff]
      %v376 = vld [vmem:[%s2 + $0x8] sm:$0xff]
      %v377 = vld [vmem:[%s2 + $0x10] sm:$0xff]
      %v378 = vld [vmem:[%s2 + $0x18] sm:$0xff]
      %v379 = vld [vmem:[%s3] sm:$0x1]
      %vm380 = vcmask 261120
      %v382 = vsel %vm380, %v374, 0
      %384 = vmatprep.subr.mxu0 0.0
      %385 = vmatpush1.msra.mxu0 %v375
      %386 = vmatprep.subr.mxu0 0.0
      %387 = vmatpush1.msra.mxu0 %v376
      %388 = vmatprep.subr.mxu0 0.0
      %389 = vmatpush1.msra.mxu0 %v377
      %390 = vmatprep.subr.mxu0 0.0
      %391 = vmatpush1.msra.mxu0 %v378
      %392 = vmatprep.subr.mxu0 0.0
      %393 = vmatpush1.msra.mxu0 0.0
      %394 = vmatprep.subr.mxu0 0.0
      %395 = vmatpush1.msra.mxu0 0.0
      %396 = vmatprep.subr.mxu0 0.0
      %397 = vmatpush1.msra.mxu0 0.0
      %398 = vmatprep.subr.mxu0 0.0
      %399 = vmatpush1.msra.mxu0 0.0
      %400 = vmatprep.subr.mxu0 0.0
      %401 = vmatpush1.msra.mxu0 0.0
      %402 = vmatprep.subr.mxu0 0.0
      %403 = vmatpush1.msra.mxu0 0.0
      %404 = vmatprep.subr.mxu0 0.0
      %405 = vmatpush1.msra.mxu0 0.0
      %406 = vmatprep.subr.mxu0 0.0
      %407 = vmatpush1.msra.mxu0 0.0
      %408 = vmatprep.subr.mxu0 0.0
      %409 = vmatpush1.msra.mxu0 0.0
      %410 = vmatprep.subr.mxu0 0.0
      %411 = vmatpush1.msra.mxu0 0.0
      %412 = vmatprep.subr.mxu0 0.0
      %413 = vmatpush1.msra.mxu0 0.0
      %414 = vmatprep.subr.mxu0 0.0
      %415 = vmatpush1.msra.mxu0 0.0
      %416 = vmatprep.subr.mxu0 0.0
      %417 = vmatpush1.msra.mxu0 0.0
      %418 = vmatprep.subr.mxu0 0.0
      %419 = vmatpush1.msra.mxu0 0.0
      %420 = vmatprep.subr.mxu0 0.0
      %421 = vmatpush1.msra.mxu0 0.0
      %422 = vmatprep.subr.mxu0 0.0
      %423 = vmatpush1.msra.mxu0 0.0
      %424 = vmatprep.subr.mxu0 0.0
      %425 = vmatpush1.msra.mxu0 0.0
      %426 = vmatprep.subr.mxu0 0.0
      %427 = vmatpush1.msra.mxu0 0.0
      %428 = vmatprep.subr.mxu0 0.0
      %429 = vmatpush1.msra.mxu0 0.0
      %430 = vmatprep.subr.mxu0 0.0
      %431 = vmatpush1.msra.mxu0 0.0
      %432 = vmatprep.subr.mxu0 0.0
      %433 = vmatpush1.msra.mxu0 0.0
      %434 = vmatprep.subr.mxu0 0.0
      %435 = vmatpush1.msra.mxu0 0.0
      %436 = vmatprep.subr.mxu0 0.0
      %437 = vmatpush1.msra.mxu0 0.0
      %438 = vmatprep.subr.mxu0 0.0
      %439 = vmatpush1.msra.mxu0 0.0
      %440 = vmatprep.subr.mxu0 0.0
      %441 = vmatpush1.msra.mxu0 0.0
      %442 = vmatprep.subr.mxu0 0.0
      %443 = vmatpush1.msra.mxu0 0.0
      %444 = vmatprep.subr.mxu0 0.0
      %445 = vmatpush1.msra.mxu0 0.0
      %446 = vmatprep.subr.mxu0 0.0
      %447 = vmatpush1.msra.mxu0 0.0
      %448 = vmatprep.mubr.f32.mxu0 0.0
      %449 = vmatmul.mubr.f32.gmra.mrb[0].mxu0 %v382
      %v450 = vpop.f32.mrb[0].mxu0
      %v451 = vadd.f32 %v379, %v450
      %v452 = vpop.f32.mrb[0].mxu0
      %453 = vdwg.mxu0
      %v454 = vxor.u32 %v451, 2147483648
      %v455 = vmul.f32 %v454, 1.442695
      %v456 = vpow.pop %v455
      %v457 = vadd.f32 %v456, 1.0
      %v458 = vrcp.pop %v457
      %v459 = vmul.f32 1.0, %v458
      %v460 = vmul.f32 %v451, %v459
      %v461 = vld [vmem:[%s4] sm:$0xff]
      %v462 = vld [vmem:[%s4 + $0x8] sm:$0xff]
      %v463 = vld [vmem:[%s4 + $0x10] sm:$0xff]
      %v464 = vld [vmem:[%s4 + $0x18] sm:$0xff]
      %v465 = vld [vmem:[%s5] sm:$0x1]
      %v467 = vsel %vm380, %v460, 0
      %469 = vmatprep.subr.mxu0 0.0
      %470 = vmatpush1.msra.mxu0 %v461
      %471 = vmatprep.subr.mxu0 0.0
      %472 = vmatpush1.msra.mxu0 %v462
      %473 = vmatprep.subr.mxu0 0.0
      %474 = vmatpush1.msra.mxu0 %v463
      %475 = vmatprep.subr.mxu0 0.0
      %476 = vmatpush1.msra.mxu0 %v464
      %477 = vmatprep.subr.mxu0 0.0
      %478 = vmatpush1.msra.mxu0 0.0
      %479 = vmatprep.subr.mxu0 0.0
      %480 = vmatpush1.msra.mxu0 0.0
      %481 = vmatprep.subr.mxu0 0.0
      %482 = vmatpush1.msra.mxu0 0.0
      %483 = vmatprep.subr.mxu0 0.0
      %484 = vmatpush1.msra.mxu0 0.0
      %485 = vmatprep.subr.mxu0 0.0
      %486 = vmatpush1.msra.mxu0 0.0
      %487 = vmatprep.subr.mxu0 0.0
      %488 = vmatpush1.msra.mxu0 0.0
      %489 = vmatprep.subr.mxu0 0.0
      %490 = vmatpush1.msra.mxu0 0.0
      %491 = vmatprep.subr.mxu0 0.0
      %492 = vmatpush1.msra.mxu0 0.0
      %493 = vmatprep.subr.mxu0 0.0
      %494 = vmatpush1.msra.mxu0 0.0
      %495 = vmatprep.subr.mxu0 0.0
      %496 = vmatpush1.msra.mxu0 0.0
      %497 = vmatprep.subr.mxu0 0.0
      %498 = vmatpush1.msra.mxu0 0.0
      %499 = vmatprep.subr.mxu0 0.0
      %500 = vmatpush1.msra.mxu0 0.0
      %501 = vmatprep.subr.mxu0 0.0
      %502 = vmatpush1.msra.mxu0 0.0
      %503 = vmatprep.subr.mxu0 0.0
      %504 = vmatpush1.msra.mxu0 0.0
      %505 = vmatprep.subr.mxu0 0.0
      %506 = vmatpush1.msra.mxu0 0.0
      %507 = vmatprep.subr.mxu0 0.0
      %508 = vmatpush1.msra.mxu0 0.0
      %509 = vmatprep.subr.mxu0 0.0
      %510 = vmatpush1.msra.mxu0 0.0
      %511 = vmatprep.subr.mxu0 0.0
      %512 = vmatpush1.msra.mxu0 0.0
      %513 = vmatprep.subr.mxu0 0.0
      %514 = vmatpush1.msra.mxu0 0.0
      %515 = vmatprep.subr.mxu0 0.0
      %516 = vmatpush1.msra.mxu0 0.0
      %517 = vmatprep.subr.mxu0 0.0
      %518 = vmatpush1.msra.mxu0 0.0
      %519 = vmatprep.subr.mxu0 0.0
      %520 = vmatpush1.msra.mxu0 0.0
      %521 = vmatprep.subr.mxu0 0.0
      %522 = vmatpush1.msra.mxu0 0.0
      %523 = vmatprep.subr.mxu0 0.0
      %524 = vmatpush1.msra.mxu0 0.0
      %525 = vmatprep.subr.mxu0 0.0
      %526 = vmatpush1.msra.mxu0 0.0
      %527 = vmatprep.subr.mxu0 0.0
      %528 = vmatpush1.msra.mxu0 0.0
      %529 = vmatprep.subr.mxu0 0.0
      %530 = vmatpush1.msra.mxu0 0.0
      %531 = vmatprep.subr.mxu0 0.0
      %532 = vmatpush1.msra.mxu0 0.0
      %533 = vmatprep.mubr.f32.mxu0 0.0
      %534 = vmatmul.mubr.f32.gmra.mrb[0].mxu0 %v467
      %v535 = vpop.f32.mrb[0].mxu0
      %v536 = vadd.f32 %v465, %v535
      %v537 = vpop.f32.mrb[0].mxu0
      %538 = vdwg.mxu0
      %vm539 = vcmask 31744
      %540 = vst.msk [vmem:[#allocation2] sm:$0xff] %vm539, 0.0
      %541 = vst.msk [vmem:[#allocation2 + $0x8] sm:$0xff] %vm539, 0.0
      %vm542 = vcmask 25600
      %543 = vst.msk [vmem:[#allocation2 + $0x10] sm:$0x3] %vm542, 0.0
      %544 = vst.msk [vmem:[#allocation2 + $0x18] sm:$0xff] %vm539, 0.0
      %545 = vst.msk [vmem:[#allocation2 + $0x20] sm:$0xff] %vm539, 0.0
      %546 = vst.msk [vmem:[#allocation2 + $0x28] sm:$0x3] %vm542, 0.0
      %547 = vst.msk [vmem:[#allocation2 + $0x30] sm:$0xff] %vm539, 0.0
      %548 = vst.msk [vmem:[#allocation2 + $0x38] sm:$0xff] %vm539, 0.0
      %549 = vst.msk [vmem:[#allocation2 + $0x40] sm:$0x3] %vm542, 0.0
      %550 = vst.msk [vmem:[#allocation2 + $0x48] sm:$0xff] %vm539, 0.0
      %551 = vst.msk [vmem:[#allocation2 + $0x50] sm:$0xff] %vm539, 0.0
      %552 = vst.msk [vmem:[#allocation2 + $0x58] sm:$0x3] %vm542, 0.0
      %553 = vst.msk [vmem:[#allocation2 + $0x60] sm:$0xff] %vm539, 0.0
      %554 = vst.msk [vmem:[#allocation2 + $0x68] sm:$0xff] %vm539, 0.0
      %555 = vst.msk [vmem:[#allocation2 + $0x70] sm:$0x3] %vm542, 0.0
      %556 = vst.msk [vmem:[#allocation2 + $0x78] sm:$0xff] %vm539, 0.0
      %557 = vst.msk [vmem:[#allocation2 + $0x80] sm:$0xff] %vm539, 0.0
      %558 = vst.msk [vmem:[#allocation2 + $0x88] sm:$0x3] %vm542, 0.0
      %559 = vst.msk [vmem:[#allocation2 + $0x90] sm:$0xff] %vm539, 0.0
      %560 = vst.msk [vmem:[#allocation2 + $0x98] sm:$0xff] %vm539, 0.0
      %561 = vst.msk [vmem:[#allocation2 + $0xa0] sm:$0x3] %vm542, 0.0
      %562 = vst.msk [vmem:[#allocation2 + $0xa8] sm:$0xff] %vm539, 0.0
      %563 = vst.msk [vmem:[#allocation2 + $0xb0] sm:$0xff] %vm539, 0.0
      %564 = vst.msk [vmem:[#allocation2 + $0xb8] sm:$0x3] %vm542, 0.0
      %565 = vst.msk [vmem:[#allocation2 + $0xc0] sm:$0xff] %vm539, 0.0
      %566 = vst.msk [vmem:[#allocation2 + $0xc8] sm:$0xff] %vm539, 0.0
      %567 = vst.msk [vmem:[#allocation2 + $0xd0] sm:$0x3] %vm542, 0.0
      %568 = vst.msk [vmem:[#allocation2 + $0xd8] sm:$0xff] %vm539, 0.0
      %569 = vst.msk [vmem:[#allocation2 + $0xe0] sm:$0xff] %vm539, 0.0
      %570 = vst.msk [vmem:[#allocation2 + $0xe8] sm:$0x3] %vm542, 0.0
      %571 = vst.msk [vmem:[#allocation2 + $0xf0] sm:$0xff] %vm539, 0.0
      %572 = vst.msk [vmem:[#allocation2 + $0xf8] sm:$0xff] %vm539, 0.0
      %573 = vst.msk [vmem:[#allocation2 + $0x100] sm:$0x3] %vm542, 0.0
      %574 = vst.msk [vmem:[#allocation2 + $0x108] sm:$0xff] %vm539, 0.0
      %575 = vst.msk [vmem:[#allocation2 + $0x110] sm:$0xff] %vm539, 0.0
      %576 = vst.msk [vmem:[#allocation2 + $0x118] sm:$0x3] %vm542, 0.0
      %577 = vst.msk [vmem:[#allocation2 + $0x120] sm:$0xff] %vm539, 0.0
      %578 = vst.msk [vmem:[#allocation2 + $0x128] sm:$0xff] %vm539, 0.0
      %579 = vst.msk [vmem:[#allocation2 + $0x130] sm:$0x3] %vm542, 0.0
      %580 = vst.msk [vmem:[#allocation2 + $0x138] sm:$0xff] %vm539, 0.0
      %581 = vst.msk [vmem:[#allocation2 + $0x140] sm:$0xff] %vm539, 0.0
      %582 = vst.msk [vmem:[#allocation2 + $0x148] sm:$0x3] %vm542, 0.0
      %583 = vst.msk [vmem:[#allocation2 + $0x150] sm:$0xff] %vm539, 0.0
      %584 = vst.msk [vmem:[#allocation2 + $0x158] sm:$0xff] %vm539, 0.0
      %585 = vst.msk [vmem:[#allocation2 + $0x160] sm:$0x3] %vm542, 0.0
      %586 = vst.msk [vmem:[#allocation2 + $0x168] sm:$0xff] %vm539, 0.0
      %587 = vst.msk [vmem:[#allocation2 + $0x170] sm:$0xff] %vm539, 0.0
      %588 = vst.msk [vmem:[#allocation2 + $0x178] sm:$0x3] %vm542, 0.0
      %589 = vst.msk [vmem:[#allocation2 + $0x180] sm:$0xff] %vm539, 0.0
      %590 = vst.msk [vmem:[#allocation2 + $0x188] sm:$0xff] %vm539, 0.0
      %591 = vst.msk [vmem:[#allocation2 + $0x190] sm:$0x3] %vm542, 0.0
      %592 = vst.msk [vmem:[#allocation2 + $0x198] sm:$0xff] %vm539, 0.0
      %593 = vst.msk [vmem:[#allocation2 + $0x1a0] sm:$0xff] %vm539, 0.0
      %594 = vst.msk [vmem:[#allocation2 + $0x1a8] sm:$0x3] %vm542, 0.0
      %v595 = vld [vmem:[%s368] sm:$0xff]
      %v596 = vld [vmem:[%s368 + $0x8] sm:$0xff]
      %v597 = vld [vmem:[%s368 + $0x10] sm:$0xff]
      %v598 = vld [vmem:[%s368 + $0x18] sm:$0xff]
      %v599 = vld [vmem:[%s368 + $0x20] sm:$0xff]
      %v600 = vld [vmem:[%s368 + $0x28] sm:$0xff]
      %v601 = vld [vmem:[%s368 + $0x30] sm:$0xff]
      %v602 = vld [vmem:[%s368 + $0x38] sm:$0xff]
      %v603 = vld [vmem:[%s368 + $0x40] sm:$0xff]
      %v604 = vld [vmem:[%s368 + $0x48] sm:$0xff]
      %v605 = vld [vmem:[%s368 + $0x50] sm:$0xff]
      %v606 = vld [vmem:[%s368 + $0x58] sm:$0xff]
      %v607 = vld [vmem:[%s368 + $0x60] sm:$0xff]
      %v608 = vld [vmem:[%s368 + $0x68] sm:$0xff]
      %v609 = vld [vmem:[%s368 + $0x70] sm:$0xff]
      %v610 = vld [vmem:[%s368 + $0x78] sm:$0xff]
      %v611 = vld [vmem:[%s368 + $0x80] sm:$0xff]
      %v612 = vld [vmem:[%s368 + $0x88] sm:$0xff]
      %v613 = vld [vmem:[%s368 + $0x90] sm:$0xff]
      %v614 = vld [vmem:[%s368 + $0x98] sm:$0xff]
      %v615 = vld [vmem:[%s368 + $0xa0] sm:$0xff]
      %v616 = vld [vmem:[%s368 + $0xa8] sm:$0xff]
      %v617 = vld [vmem:[%s368 + $0xb0] sm:$0xff]
      %v618 = vld [vmem:[%s368 + $0xb8] sm:$0xff]
      %v619 = vld [vmem:[%s368 + $0xc0] sm:$0xff]
      %v620 = vld [vmem:[%s368 + $0xc8] sm:$0xff]
      %v621 = vld [vmem:[%s368 + $0xd0] sm:$0xff]
      %v622 = vld [vmem:[%s368 + $0xd8] sm:$0xff]
      %v623 = vld [vmem:[%s368 + $0xe0] sm:$0xff]
      %v624 = vld [vmem:[%s368 + $0xe8] sm:$0xff]
      %v625 = vld [vmem:[%s368 + $0xf0] sm:$0xff]
      %v626 = vld [vmem:[%s368 + $0xf8] sm:$0xff]
      %s627 = scalar_lea.vmem [#allocation2], 24
      %628 = vst.msk [vmem:[%s627 + $0x1] sm:$0xff] %vm539, %v595
      %629 = vst.msk [vmem:[%s627 + $0x9] sm:$0xff] %vm539, %v596
      %630 = vst.msk [vmem:[%s627 + $0x19] sm:$0xff] %vm539, %v597
      %631 = vst.msk [vmem:[%s627 + $0x21] sm:$0xff] %vm539, %v598
      %632 = vst.msk [vmem:[%s627 + $0x31] sm:$0xff] %vm539, %v599
      %633 = vst.msk [vmem:[%s627 + $0x39] sm:$0xff] %vm539, %v600
      %634 = vst.msk [vmem:[%s627 + $0x49] sm:$0xff] %vm539, %v601
      %635 = vst.msk [vmem:[%s627 + $0x51] sm:$0xff] %vm539, %v602
      %636 = vst.msk [vmem:[%s627 + $0x61] sm:$0xff] %vm539, %v603
      %637 = vst.msk [vmem:[%s627 + $0x69] sm:$0xff] %vm539, %v604
      %638 = vst.msk [vmem:[%s627 + $0x79] sm:$0xff] %vm539, %v605
      %639 = vst.msk [vmem:[%s627 + $0x81] sm:$0xff] %vm539, %v606
      %640 = vst.msk [vmem:[%s627 + $0x91] sm:$0xff] %vm539, %v607
      %641 = vst.msk [vmem:[%s627 + $0x99] sm:$0xff] %vm539, %v608
      %642 = vst.msk [vmem:[%s627 + $0xa9] sm:$0xff] %vm539, %v609
      %643 = vst.msk [vmem:[%s627 + $0xb1] sm:$0xff] %vm539, %v610
      %644 = vst.msk [vmem:[%s627 + $0xc1] sm:$0xff] %vm539, %v611
      %645 = vst.msk [vmem:[%s627 + $0xc9] sm:$0xff] %vm539, %v612
      %646 = vst.msk [vmem:[%s627 + $0xd9] sm:$0xff] %vm539, %v613
      %647 = vst.msk [vmem:[%s627 + $0xe1] sm:$0xff] %vm539, %v614
      %648 = vst.msk [vmem:[%s627 + $0xf1] sm:$0xff] %vm539, %v615
      %649 = vst.msk [vmem:[%s627 + $0xf9] sm:$0xff] %vm539, %v616
      %650 = vst.msk [vmem:[%s627 + $0x109] sm:$0xff] %vm539, %v617
      %651 = vst.msk [vmem:[%s627 + $0x111] sm:$0xff] %vm539, %v618
      %652 = vst.msk [vmem:[%s627 + $0x121] sm:$0xff] %vm539, %v619
      %653 = vst.msk [vmem:[%s627 + $0x129] sm:$0xff] %vm539, %v620
      %654 = vst.msk [vmem:[%s627 + $0x139] sm:$0xff] %vm539, %v621
      %655 = vst.msk [vmem:[%s627 + $0x141] sm:$0xff] %vm539, %v622
      %656 = vst.msk [vmem:[%s627 + $0x151] sm:$0xff] %vm539, %v623
      %657 = vst.msk [vmem:[%s627 + $0x159] sm:$0xff] %vm539, %v624
      %658 = vst.msk [vmem:[%s627 + $0x169] sm:$0xff] %vm539, %v625
      %659 = vst.msk [vmem:[%s627 + $0x171] sm:$0xff] %vm539, %v626
      %v660 = vld [vmem:[#allocation2] sm:$0xff]
      %v661 = vld [vmem:[#allocation2 + $0x8] sm:$0xff]
      %v662 = vld [vmem:[#allocation2 + $0x10] sm:$0x3]
      %v663 = vld [vmem:[#allocation2 + $0x18] sm:$0xff]
      %v664 = vld [vmem:[#allocation2 + $0x20] sm:$0xff]
      %v665 = vld [vmem:[#allocation2 + $0x28] sm:$0x3]
      %v666 = vld [vmem:[#allocation2 + $0x30] sm:$0xff]
      %v667 = vld [vmem:[#allocation2 + $0x38] sm:$0xff]
      %v668 = vld [vmem:[#allocation2 + $0x40] sm:$0x3]
      %v669 = vld [vmem:[#allocation2 + $0x48] sm:$0xff]
      %v670 = vld [vmem:[#allocation2 + $0x50] sm:$0xff]
      %v671 = vld [vmem:[#allocation2 + $0x58] sm:$0x3]
      %v672 = vld [vmem:[#allocation2 + $0x60] sm:$0xff]
      %v673 = vld [vmem:[#allocation2 + $0x68] sm:$0xff]
      %v674 = vld [vmem:[#allocation2 + $0x70] sm:$0x3]
      %v675 = vld [vmem:[#allocation2 + $0x78] sm:$0xff]
      %v676 = vld [vmem:[#allocation2 + $0x80] sm:$0xff]
      %v677 = vld [vmem:[#allocation2 + $0x88] sm:$0x3]
      %v678 = vld [vmem:[#allocation2 + $0x90] sm:$0xff]
      %v679 = vld [vmem:[#allocation2 + $0x98] sm:$0xff]
      %v680 = vld [vmem:[#allocation2 + $0xa0] sm:$0x3]
      %v681 = vld [vmem:[#allocation2 + $0xa8] sm:$0xff]
      %v682 = vld [vmem:[#allocation2 + $0xb0] sm:$0xff]
      %v683 = vld [vmem:[#allocation2 + $0xb8] sm:$0x3]
      %v684 = vld [vmem:[#allocation2 + $0xc0] sm:$0xff]
      %v685 = vld [vmem:[#allocation2 + $0xc8] sm:$0xff]
      %v686 = vld [vmem:[#allocation2 + $0xd0] sm:$0x3]
      %v687 = vld [vmem:[#allocation2 + $0xd8] sm:$0xff]
      %v688 = vld [vmem:[#allocation2 + $0xe0] sm:$0xff]
      %v689 = vld [vmem:[#allocation2 + $0xe8] sm:$0x3]
      %v690 = vld [vmem:[#allocation2 + $0xf0] sm:$0xff]
      %v691 = vld [vmem:[#allocation2 + $0xf8] sm:$0xff]
      %v692 = vld [vmem:[#allocation2 + $0x100] sm:$0x3]
      %v693 = vld [vmem:[#allocation2 + $0x108] sm:$0xff]
      %v694 = vld [vmem:[#allocation2 + $0x110] sm:$0xff]
      %v695 = vld [vmem:[#allocation2 + $0x118] sm:$0x3]
      %v696 = vld [vmem:[#allocation2 + $0x120] sm:$0xff]
      %v697 = vld [vmem:[#allocation2 + $0x128] sm:$0xff]
      %v698 = vld [vmem:[#allocation2 + $0x130] sm:$0x3]
      %v699 = vld [vmem:[#allocation2 + $0x138] sm:$0xff]
      %v700 = vld [vmem:[#allocation2 + $0x140] sm:$0xff]
      %v701 = vld [vmem:[#allocation2 + $0x148] sm:$0x3]
      %v702 = vld [vmem:[#allocation2 + $0x150] sm:$0xff]
      %v703 = vld [vmem:[#allocation2 + $0x158] sm:$0xff]
      %v704 = vld [vmem:[#allocation2 + $0x160] sm:$0x3]
      %v705 = vld [vmem:[#allocation2 + $0x168] sm:$0xff]
      %v706 = vld [vmem:[#allocation2 + $0x170] sm:$0xff]
      %v707 = vld [vmem:[#allocation2 + $0x178] sm:$0x3]
      %v708 = vld [vmem:[#allocation2 + $0x180] sm:$0xff]
      %v709 = vld [vmem:[#allocation2 + $0x188] sm:$0xff]
      %v710 = vld [vmem:[#allocation2 + $0x190] sm:$0x3]
      %v711 = vld [vmem:[#allocation2 + $0x198] sm:$0xff]
      %v712 = vld [vmem:[#allocation2 + $0x1a0] sm:$0xff]
      %v713 = vld [vmem:[#allocation2 + $0x1a8] sm:$0x3]
      %714 = vst.msk [vmem:[#allocation4] sm:$0xff] %vm539, %v660
      %715 = vst.msk [vmem:[#allocation4 + $0x8] sm:$0xff] %vm539, %v661
      %716 = vst.msk [vmem:[#allocation4 + $0x10] sm:$0xff] %vm539, %v663
      %717 = vst.msk [vmem:[#allocation4 + $0x18] sm:$0xff] %vm539, %v664
      %718 = vst.msk [vmem:[#allocation4 + $0x20] sm:$0xff] %vm539, %v666
      %719 = vst.msk [vmem:[#allocation4 + $0x28] sm:$0xff] %vm539, %v667
      %720 = vst.msk [vmem:[#allocation4 + $0x30] sm:$0xff] %vm539, %v669
      %721 = vst.msk [vmem:[#allocation4 + $0x38] sm:$0xff] %vm539, %v670
      %722 = vst.msk [vmem:[#allocation4 + $0x40] sm:$0xff] %vm539, %v672
      %723 = vst.msk [vmem:[#allocation4 + $0x48] sm:$0xff] %vm539, %v673
      %724 = vst.msk [vmem:[#allocation4 + $0x50] sm:$0xff] %vm539, %v675
      %725 = vst.msk [vmem:[#allocation4 + $0x58] sm:$0xff] %vm539, %v676
      %726 = vst.msk [vmem:[#allocation4 + $0x60] sm:$0xff] %vm539, %v678
      %727 = vst.msk [vmem:[#allocation4 + $0x68] sm:$0xff] %vm539, %v679
      %728 = vst.msk [vmem:[#allocation4 + $0x70] sm:$0xff] %vm539, %v681
      %729 = vst.msk [vmem:[#allocation4 + $0x78] sm:$0xff] %vm539, %v682
      %730 = vst.msk [vmem:[#allocation4 + $0x80] sm:$0xff] %vm539, %v684
      %731 = vst.msk [vmem:[#allocation4 + $0x88] sm:$0xff] %vm539, %v685
      %732 = vst.msk [vmem:[#allocation4 + $0x90] sm:$0xff] %vm539, %v687
      %733 = vst.msk [vmem:[#allocation4 + $0x98] sm:$0xff] %vm539, %v688
      %734 = vst.msk [vmem:[#allocation4 + $0xa0] sm:$0xff] %vm539, %v690
      %735 = vst.msk [vmem:[#allocation4 + $0xa8] sm:$0xff] %vm539, %v691
      %736 = vst.msk [vmem:[#allocation4 + $0xb0] sm:$0xff] %vm539, %v693
      %737 = vst.msk [vmem:[#allocation4 + $0xb8] sm:$0xff] %vm539, %v694
      %738 = vst.msk [vmem:[#allocation4 + $0xc0] sm:$0xff] %vm539, %v696
      %739 = vst.msk [vmem:[#allocation4 + $0xc8] sm:$0xff] %vm539, %v697
      %740 = vst.msk [vmem:[#allocation4 + $0xd0] sm:$0xff] %vm539, %v699
      %741 = vst.msk [vmem:[#allocation4 + $0xd8] sm:$0xff] %vm539, %v700
      %742 = vst.msk [vmem:[#allocation4 + $0xe0] sm:$0xff] %vm539, %v702
      %743 = vst.msk [vmem:[#allocation4 + $0xe8] sm:$0xff] %vm539, %v703
      %744 = vst.msk [vmem:[#allocation4 + $0xf0] sm:$0xff] %vm539, %v705
      %745 = vst.msk [vmem:[#allocation4 + $0xf8] sm:$0xff] %vm539, %v706
      %vm794 = vcmask 1046528
      %v795 = vrot.slane %v660, 1
      %v796 = vrot.slane %v661, 1
      %v797 = vsel %vm794, %v795, %v796
      %v798 = vrot.slane %v662, 1
      %v799 = vsel %vm794, %v796, %v798
      %v800 = vrot.slane %v663, 1
      %v801 = vrot.slane %v664, 1
      %v802 = vsel %vm794, %v800, %v801
      %v803 = vrot.slane %v665, 1
      %v804 = vsel %vm794, %v801, %v803
      %v805 = vrot.slane %v666, 1
      %v806 = vrot.slane %v667, 1
      %v807 = vsel %vm794, %v805, %v806
      %v808 = vrot.slane %v668, 1
      %v809 = vsel %vm794, %v806, %v808
      %v810 = vrot.slane %v669, 1
      %v811 = vrot.slane %v670, 1
      %v812 = vsel %vm794, %v810, %v811
      %v813 = vrot.slane %v671, 1
      %v814 = vsel %vm794, %v811, %v813
      %v815 = vrot.slane %v672, 1
      %v816 = vrot.slane %v673, 1
      %v817 = vsel %vm794, %v815, %v816
      %v818 = vrot.slane %v674, 1
      %v819 = vsel %vm794, %v816, %v818
      %v820 = vrot.slane %v675, 1
      %v821 = vrot.slane %v676, 1
      %v822 = vsel %vm794, %v820, %v821
      %v823 = vrot.slane %v677, 1
      %v824 = vsel %vm794, %v821, %v823
      %v825 = vrot.slane %v678, 1
      %v826 = vrot.slane %v679, 1
      %v827 = vsel %vm794, %v825, %v826
      %v828 = vrot.slane %v680, 1
      %v829 = vsel %vm794, %v826, %v828
      %v830 = vrot.slane %v681, 1
      %v831 = vrot.slane %v682, 1
      %v832 = vsel %vm794, %v830, %v831
      %v833 = vrot.slane %v683, 1
      %v834 = vsel %vm794, %v831, %v833
      %v835 = vrot.slane %v684, 1
      %v836 = vrot.slane %v685, 1
      %v837 = vsel %vm794, %v835, %v836
      %v838 = vrot.slane %v686, 1
      %v839 = vsel %vm794, %v836, %v838
      %v840 = vrot.slane %v687, 1
      %v841 = vrot.slane %v688, 1
      %v842 = vsel %vm794, %v840, %v841
      %v843 = vrot.slane %v689, 1
      %v844 = vsel %vm794, %v841, %v843
      %v845 = vrot.slane %v690, 1
      %v846 = vrot.slane %v691, 1
      %v847 = vsel %vm794, %v845, %v846
      %v848 = vrot.slane %v692, 1
      %v849 = vsel %vm794, %v846, %v848
      %v850 = vrot.slane %v693, 1
      %v851 = vrot.slane %v694, 1
      %v852 = vsel %vm794, %v850, %v851
      %v853 = vrot.slane %v695, 1
      %v854 = vsel %vm794, %v851, %v853
      %v855 = vrot.slane %v696, 1
      %v856 = vrot.slane %v697, 1
      %v857 = vsel %vm794, %v855, %v856
      %v858 = vrot.slane %v698, 1
      %v859 = vsel %vm794, %v856, %v858
      %v860 = vrot.slane %v699, 1
      %v861 = vrot.slane %v700, 1
      %v862 = vsel %vm794, %v860, %v861
      %v863 = vrot.slane %v701, 1
      %v864 = vsel %vm794, %v861, %v863
      %v865 = vrot.slane %v702, 1
      %v866 = vrot.slane %v703, 1
      %v867 = vsel %vm794, %v865, %v866
      %v868 = vrot.slane %v704, 1
      %v869 = vsel %vm794, %v866, %v868
      %v870 = vrot.slane %v705, 1
      %v871 = vrot.slane %v706, 1
      %v872 = vsel %vm794, %v870, %v871
      %v873 = vrot.slane %v707, 1
      %v874 = vsel %vm794, %v871, %v873
      %875 = vrot.lane.b32.xlu0 %v797, 4
      %v876 = vpop.permute.xlu0 %875
      %877 = vrot.lane.b32.xlu0 %v799, 4
      %v878 = vpop.permute.xlu0 %877
      %879 = vrot.lane.b32.xlu0 %v802, 4
      %v880 = vpop.permute.xlu0 %879
      %881 = vrot.lane.b32.xlu0 %v804, 4
      %v882 = vpop.permute.xlu0 %881
      %883 = vrot.lane.b32.xlu0 %v807, 4
      %v884 = vpop.permute.xlu0 %883
      %885 = vrot.lane.b32.xlu0 %v809, 4
      %v886 = vpop.permute.xlu0 %885
      %887 = vrot.lane.b32.xlu0 %v812, 4
      %v888 = vpop.permute.xlu0 %887
      %889 = vrot.lane.b32.xlu0 %v814, 4
      %v890 = vpop.permute.xlu0 %889
      %891 = vrot.lane.b32.xlu0 %v817, 4
      %v892 = vpop.permute.xlu0 %891
      %893 = vrot.lane.b32.xlu0 %v819, 4
      %v894 = vpop.permute.xlu0 %893
      %895 = vrot.lane.b32.xlu0 %v822, 4
      %v896 = vpop.permute.xlu0 %895
      %897 = vrot.lane.b32.xlu0 %v824, 4
      %v898 = vpop.permute.xlu0 %897
      %899 = vrot.lane.b32.xlu0 %v827, 4
      %v900 = vpop.permute.xlu0 %899
      %901 = vrot.lane.b32.xlu0 %v829, 4
      %v902 = vpop.permute.xlu0 %901
      %903 = vrot.lane.b32.xlu0 %v832, 4
      %v904 = vpop.permute.xlu0 %903
      %905 = vrot.lane.b32.xlu0 %v834, 4
      %v906 = vpop.permute.xlu0 %905
      %907 = vrot.lane.b32.xlu0 %v837, 4
      %v908 = vpop.permute.xlu0 %907
      %909 = vrot.lane.b32.xlu0 %v839, 4
      %v910 = vpop.permute.xlu0 %909
      %911 = vrot.lane.b32.xlu0 %v842, 4
      %v912 = vpop.permute.xlu0 %911
      %913 = vrot.lane.b32.xlu0 %v844, 4
      %v914 = vpop.permute.xlu0 %913
      %915 = vrot.lane.b32.xlu0 %v847, 4
      %v916 = vpop.permute.xlu0 %915
      %917 = vrot.lane.b32.xlu0 %v849, 4
      %v918 = vpop.permute.xlu0 %917
      %919 = vrot.lane.b32.xlu0 %v852, 4
      %v920 = vpop.permute.xlu0 %919
      %921 = vrot.lane.b32.xlu0 %v854, 4
      %v922 = vpop.permute.xlu0 %921
      %923 = vrot.lane.b32.xlu0 %v857, 4
      %v924 = vpop.permute.xlu0 %923
      %925 = vrot.lane.b32.xlu0 %v859, 4
      %v926 = vpop.permute.xlu0 %925
      %927 = vrot.lane.b32.xlu0 %v862, 4
      %v928 = vpop.permute.xlu0 %927
      %929 = vrot.lane.b32.xlu0 %v864, 4
      %v930 = vpop.permute.xlu0 %929
      %931 = vrot.lane.b32.xlu0 %v867, 4
      %v932 = vpop.permute.xlu0 %931
      %933 = vrot.lane.b32.xlu0 %v869, 4
      %v934 = vpop.permute.xlu0 %933
      %935 = vrot.lane.b32.xlu0 %v872, 4
      %v936 = vpop.permute.xlu0 %935
      %937 = vrot.lane.b32.xlu0 %v874, 4
      %v938 = vpop.permute.xlu0 %937
      %vm971 = vcmask 64544
      %972 = vst.msk [vmem:[#allocation4] sm:$0xff] %vm971, %v876
      %973 = vst.msk [vmem:[#allocation4 + $0x8] sm:$0xff] %vm971, %v878
      %974 = vst.msk [vmem:[#allocation4 + $0x10] sm:$0xff] %vm971, %v880
      %975 = vst.msk [vmem:[#allocation4 + $0x18] sm:$0xff] %vm971, %v882
      %976 = vst.msk [vmem:[#allocation4 + $0x20] sm:$0xff] %vm971, %v884
      %977 = vst.msk [vmem:[#allocation4 + $0x28] sm:$0xff] %vm971, %v886
      %978 = vst.msk [vmem:[#allocation4 + $0x30] sm:$0xff] %vm971, %v888
      %979 = vst.msk [vmem:[#allocation4 + $0x38] sm:$0xff] %vm971, %v890
      %980 = vst.msk [vmem:[#allocation4 + $0x40] sm:$0xff] %vm971, %v892
      %981 = vst.msk [vmem:[#allocation4 + $0x48] sm:$0xff] %vm971, %v894
      %982 = vst.msk [vmem:[#allocation4 + $0x50] sm:$0xff] %vm971, %v896
      %983 = vst.msk [vmem:[#allocation4 + $0x58] sm:$0xff] %vm971, %v898
      %984 = vst.msk [vmem:[#allocation4 + $0x60] sm:$0xff] %vm971, %v900
      %985 = vst.msk [vmem:[#allocation4 + $0x68] sm:$0xff] %vm971, %v902
      %986 = vst.msk [vmem:[#allocation4 + $0x70] sm:$0xff] %vm971, %v904
      %987 = vst.msk [vmem:[#allocation4 + $0x78] sm:$0xff] %vm971, %v906
      %988 = vst.msk [vmem:[#allocation4 + $0x80] sm:$0xff] %vm971, %v908
      %989 = vst.msk [vmem:[#allocation4 + $0x88] sm:$0xff] %vm971, %v910
      %990 = vst.msk [vmem:[#allocation4 + $0x90] sm:$0xff] %vm971, %v912
      %991 = vst.msk [vmem:[#allocation4 + $0x98] sm:$0xff] %vm971, %v914
      %992 = vst.msk [vmem:[#allocation4 + $0xa0] sm:$0xff] %vm971, %v916
      %993 = vst.msk [vmem:[#allocation4 + $0xa8] sm:$0xff] %vm971, %v918
      %994 = vst.msk [vmem:[#allocation4 + $0xb0] sm:$0xff] %vm971, %v920
      %995 = vst.msk [vmem:[#allocation4 + $0xb8] sm:$0xff] %vm971, %v922
      %996 = vst.msk [vmem:[#allocation4 + $0xc0] sm:$0xff] %vm971, %v924
      %997 = vst.msk [vmem:[#allocation4 + $0xc8] sm:$0xff] %vm971, %v926
      %998 = vst.msk [vmem:[#allocation4 + $0xd0] sm:$0xff] %vm971, %v928
      %999 = vst.msk [vmem:[#allocation4 + $0xd8] sm:$0xff] %vm971, %v930
      %1000 = vst.msk [vmem:[#allocation4 + $0xe0] sm:$0xff] %vm971, %v932
      %1001 = vst.msk [vmem:[#allocation4 + $0xe8] sm:$0xff] %vm971, %v934
      %1002 = vst.msk [vmem:[#allocation4 + $0xf0] sm:$0xff] %vm971, %v936
      %1003 = vst.msk [vmem:[#allocation4 + $0xf8] sm:$0xff] %vm971, %v938
      %vm1004 = vcmask 1045504
      %v1005 = vrot.slane %v660, 2
      %v1006 = vrot.slane %v661, 2
      %v1007 = vsel %vm1004, %v1005, %v1006
      %v1008 = vrot.slane %v662, 2
      %v1009 = vsel %vm1004, %v1006, %v1008
      %v1010 = vrot.slane %v663, 2
      %v1011 = vrot.slane %v664, 2
      %v1012 = vsel %vm1004, %v1010, %v1011
      %v1013 = vrot.slane %v665, 2
      %v1014 = vsel %vm1004, %v1011, %v1013
      %v1015 = vrot.slane %v666, 2
      %v1016 = vrot.slane %v667, 2
      %v1017 = vsel %vm1004, %v1015, %v1016
      %v1018 = vrot.slane %v668, 2
      %v1019 = vsel %vm1004, %v1016, %v1018
      %v1020 = vrot.slane %v669, 2
      %v1021 = vrot.slane %v670, 2
      %v1022 = vsel %vm1004, %v1020, %v1021
      %v1023 = vrot.slane %v671, 2
      %v1024 = vsel %vm1004, %v1021, %v1023
      %v1025 = vrot.slane %v672, 2
      %v1026 = vrot.slane %v673, 2
      %v1027 = vsel %vm1004, %v1025, %v1026
      %v1028 = vrot.slane %v674, 2
      %v1029 = vsel %vm1004, %v1026, %v1028
      %v1030 = vrot.slane %v675, 2
      %v1031 = vrot.slane %v676, 2
      %v1032 = vsel %vm1004, %v1030, %v1031
      %v1033 = vrot.slane %v677, 2
      %v1034 = vsel %vm1004, %v1031, %v1033
      %v1035 = vrot.slane %v678, 2
      %v1036 = vrot.slane %v679, 2
      %v1037 = vsel %vm1004, %v1035, %v1036
      %v1038 = vrot.slane %v680, 2
      %v1039 = vsel %vm1004, %v1036, %v1038
      %v1040 = vrot.slane %v681, 2
      %v1041 = vrot.slane %v682, 2
      %v1042 = vsel %vm1004, %v1040, %v1041
      %v1043 = vrot.slane %v683, 2
      %v1044 = vsel %vm1004, %v1041, %v1043
      %v1045 = vrot.slane %v684, 2
      %v1046 = vrot.slane %v685, 2
      %v1047 = vsel %vm1004, %v1045, %v1046
      %v1048 = vrot.slane %v686, 2
      %v1049 = vsel %vm1004, %v1046, %v1048
      %v1050 = vrot.slane %v687, 2
      %v1051 = vrot.slane %v688, 2
      %v1052 = vsel %vm1004, %v1050, %v1051
      %v1053 = vrot.slane %v689, 2
      %v1054 = vsel %vm1004, %v1051, %v1053
      %v1055 = vrot.slane %v690, 2
      %v1056 = vrot.slane %v691, 2
      %v1057 = vsel %vm1004, %v1055, %v1056
      %v1058 = vrot.slane %v692, 2
      %v1059 = vsel %vm1004, %v1056, %v1058
      %v1060 = vrot.slane %v693, 2
      %v1061 = vrot.slane %v694, 2
      %v1062 = vsel %vm1004, %v1060, %v1061
      %v1063 = vrot.slane %v695, 2
      %v1064 = vsel %vm1004, %v1061, %v1063
      %v1065 = vrot.slane %v696, 2
      %v1066 = vrot.slane %v697, 2
      %v1067 = vsel %vm1004, %v1065, %v1066
      %v1068 = vrot.slane %v698, 2
      %v1069 = vsel %vm1004, %v1066, %v1068
      %v1070 = vrot.slane %v699, 2
      %v1071 = vrot.slane %v700, 2
      %v1072 = vsel %vm1004, %v1070, %v1071
      %v1073 = vrot.slane %v701, 2
      %v1074 = vsel %vm1004, %v1071, %v1073
      %v1075 = vrot.slane %v702, 2
      %v1076 = vrot.slane %v703, 2
      %v1077 = vsel %vm1004, %v1075, %v1076
      %v1078 = vrot.slane %v704, 2
      %v1079 = vsel %vm1004, %v1076, %v1078
      %v1080 = vrot.slane %v705, 2
      %v1081 = vrot.slane %v706, 2
      %v1082 = vsel %vm1004, %v1080, %v1081
      %v1083 = vrot.slane %v707, 2
      %v1084 = vsel %vm1004, %v1081, %v1083
      %1085 = vrot.lane.b32.xlu0 %v1007, 8
      %v1086 = vpop.permute.xlu0 %1085
      %1087 = vrot.lane.b32.xlu0 %v1009, 8
      %v1088 = vpop.permute.xlu0 %1087
      %1089 = vrot.lane.b32.xlu0 %v1012, 8
      %v1090 = vpop.permute.xlu0 %1089
      %1091 = vrot.lane.b32.xlu0 %v1014, 8
      %v1092 = vpop.permute.xlu0 %1091
      %1093 = vrot.lane.b32.xlu0 %v1017, 8
      %v1094 = vpop.permute.xlu0 %1093
      %1095 = vrot.lane.b32.xlu0 %v1019, 8
      %v1096 = vpop.permute.xlu0 %1095
      %1097 = vrot.lane.b32.xlu0 %v1022, 8
      %v1098 = vpop.permute.xlu0 %1097
      %1099 = vrot.lane.b32.xlu0 %v1024, 8
      %v1100 = vpop.permute.xlu0 %1099
      %1101 = vrot.lane.b32.xlu0 %v1027, 8
      %v1102 = vpop.permute.xlu0 %1101
      %1103 = vrot.lane.b32.xlu0 %v1029, 8
      %v1104 = vpop.permute.xlu0 %1103
      %1105 = vrot.lane.b32.xlu0 %v1032, 8
      %v1106 = vpop.permute.xlu0 %1105
      %1107 = vrot.lane.b32.xlu0 %v1034, 8
      %v1108 = vpop.permute.xlu0 %1107
      %1109 = vrot.lane.b32.xlu0 %v1037, 8
      %v1110 = vpop.permute.xlu0 %1109
      %1111 = vrot.lane.b32.xlu0 %v1039, 8
      %v1112 = vpop.permute.xlu0 %1111
      %1113 = vrot.lane.b32.xlu0 %v1042, 8
      %v1114 = vpop.permute.xlu0 %1113
      %1115 = vrot.lane.b32.xlu0 %v1044, 8
      %v1116 = vpop.permute.xlu0 %1115
      %1117 = vrot.lane.b32.xlu0 %v1047, 8
      %v1118 = vpop.permute.xlu0 %1117
      %1119 = vrot.lane.b32.xlu0 %v1049, 8
      %v1120 = vpop.permute.xlu0 %1119
      %1121 = vrot.lane.b32.xlu0 %v1052, 8
      %v1122 = vpop.permute.xlu0 %1121
      %1123 = vrot.lane.b32.xlu0 %v1054, 8
      %v1124 = vpop.permute.xlu0 %1123
      %1125 = vrot.lane.b32.xlu0 %v1057, 8
      %v1126 = vpop.permute.xlu0 %1125
      %1127 = vrot.lane.b32.xlu0 %v1059, 8
      %v1128 = vpop.permute.xlu0 %1127
      %1129 = vrot.lane.b32.xlu0 %v1062, 8
      %v1130 = vpop.permute.xlu0 %1129
      %1131 = vrot.lane.b32.xlu0 %v1064, 8
      %v1132 = vpop.permute.xlu0 %1131
      %1133 = vrot.lane.b32.xlu0 %v1067, 8
      %v1134 = vpop.permute.xlu0 %1133
      %1135 = vrot.lane.b32.xlu0 %v1069, 8
      %v1136 = vpop.permute.xlu0 %1135
      %1137 = vrot.lane.b32.xlu0 %v1072, 8
      %v1138 = vpop.permute.xlu0 %1137
      %1139 = vrot.lane.b32.xlu0 %v1074, 8
      %v1140 = vpop.permute.xlu0 %1139
      %1141 = vrot.lane.b32.xlu0 %v1077, 8
      %v1142 = vpop.permute.xlu0 %1141
      %1143 = vrot.lane.b32.xlu0 %v1079, 8
      %v1144 = vpop.permute.xlu0 %1143
      %1145 = vrot.lane.b32.xlu0 %v1082, 8
      %v1146 = vpop.permute.xlu0 %1145
      %1147 = vrot.lane.b32.xlu0 %v1084, 8
      %v1148 = vpop.permute.xlu0 %1147
      %vm1181 = vcmask 97344
      %1182 = vst.msk [vmem:[#allocation4] sm:$0xff] %vm1181, %v1086
      %1183 = vst.msk [vmem:[#allocation4 + $0x8] sm:$0xff] %vm1181, %v1088
      %1184 = vst.msk [vmem:[#allocation4 + $0x10] sm:$0xff] %vm1181, %v1090
      %1185 = vst.msk [vmem:[#allocation4 + $0x18] sm:$0xff] %vm1181, %v1092
      %1186 = vst.msk [vmem:[#allocation4 + $0x20] sm:$0xff] %vm1181, %v1094
      %1187 = vst.msk [vmem:[#allocation4 + $0x28] sm:$0xff] %vm1181, %v1096
      %1188 = vst.msk [vmem:[#allocation4 + $0x30] sm:$0xff] %vm1181, %v1098
      %1189 = vst.msk [vmem:[#allocation4 + $0x38] sm:$0xff] %vm1181, %v1100
      %1190 = vst.msk [vmem:[#allocation4 + $0x40] sm:$0xff] %vm1181, %v1102
      %1191 = vst.msk [vmem:[#allocation4 + $0x48] sm:$0xff] %vm1181, %v1104
      %1192 = vst.msk [vmem:[#allocation4 + $0x50] sm:$0xff] %vm1181, %v1106
      %1193 = vst.msk [vmem:[#allocation4 + $0x58] sm:$0xff] %vm1181, %v1108
      %1194 = vst.msk [vmem:[#allocation4 + $0x60] sm:$0xff] %vm1181, %v1110
      %1195 = vst.msk [vmem:[#allocation4 + $0x68] sm:$0xff] %vm1181, %v1112
      %1196 = vst.msk [vmem:[#allocation4 + $0x70] sm:$0xff] %vm1181, %v1114
      %1197 = vst.msk [vmem:[#allocation4 + $0x78] sm:$0xff] %vm1181, %v1116
      %1198 = vst.msk [vmem:[#allocation4 + $0x80] sm:$0xff] %vm1181, %v1118
      %1199 = vst.msk [vmem:[#allocation4 + $0x88] sm:$0xff] %vm1181, %v1120
      %1200 = vst.msk [vmem:[#allocation4 + $0x90] sm:$0xff] %vm1181, %v1122
      %1201 = vst.msk [vmem:[#allocation4 + $0x98] sm:$0xff] %vm1181, %v1124
      %1202 = vst.msk [vmem:[#allocation4 + $0xa0] sm:$0xff] %vm1181, %v1126
      %1203 = vst.msk [vmem:[#allocation4 + $0xa8] sm:$0xff] %vm1181, %v1128
      %1204 = vst.msk [vmem:[#allocation4 + $0xb0] sm:$0xff] %vm1181, %v1130
      %1205 = vst.msk [vmem:[#allocation4 + $0xb8] sm:$0xff] %vm1181, %v1132
      %1206 = vst.msk [vmem:[#allocation4 + $0xc0] sm:$0xff] %vm1181, %v1134
      %1207 = vst.msk [vmem:[#allocation4 + $0xc8] sm:$0xff] %vm1181, %v1136
      %1208 = vst.msk [vmem:[#allocation4 + $0xd0] sm:$0xff] %vm1181, %v1138
      %1209 = vst.msk [vmem:[#allocation4 + $0xd8] sm:$0xff] %vm1181, %v1140
      %1210 = vst.msk [vmem:[#allocation4 + $0xe0] sm:$0xff] %vm1181, %v1142
      %1211 = vst.msk [vmem:[#allocation4 + $0xe8] sm:$0xff] %vm1181, %v1144
      %1212 = vst.msk [vmem:[#allocation4 + $0xf0] sm:$0xff] %vm1181, %v1146
      %1213 = vst.msk [vmem:[#allocation4 + $0xf8] sm:$0xff] %vm1181, %v1148
      %1216 = vrot.lane.b32.xlu0 %v663, 12
      %v1217 = vpop.permute.xlu0 %1216
      %1218 = vrot.lane.b32.xlu0 %v664, 12
      %v1219 = vpop.permute.xlu0 %1218
      %1220 = vrot.lane.b32.xlu0 %v666, 12
      %v1221 = vpop.permute.xlu0 %1220
      %1222 = vrot.lane.b32.xlu0 %v667, 12
      %v1223 = vpop.permute.xlu0 %1222
      %1224 = vrot.lane.b32.xlu0 %v669, 12
      %v1225 = vpop.permute.xlu0 %1224
      %1226 = vrot.lane.b32.xlu0 %v670, 12
      %v1227 = vpop.permute.xlu0 %1226
      %1228 = vrot.lane.b32.xlu0 %v672, 12
      %v1229 = vpop.permute.xlu0 %1228
      %1230 = vrot.lane.b32.xlu0 %v673, 12
      %v1231 = vpop.permute.xlu0 %1230
      %1232 = vrot.lane.b32.xlu0 %v675, 12
      %v1233 = vpop.permute.xlu0 %1232
      %1234 = vrot.lane.b32.xlu0 %v676, 12
      %v1235 = vpop.permute.xlu0 %1234
      %1236 = vrot.lane.b32.xlu0 %v678, 12
      %v1237 = vpop.permute.xlu0 %1236
      %1238 = vrot.lane.b32.xlu0 %v679, 12
      %v1239 = vpop.permute.xlu0 %1238
      %1240 = vrot.lane.b32.xlu0 %v681, 12
      %v1241 = vpop.permute.xlu0 %1240
      %1242 = vrot.lane.b32.xlu0 %v682, 12
      %v1243 = vpop.permute.xlu0 %1242
      %1244 = vrot.lane.b32.xlu0 %v684, 12
      %v1245 = vpop.permute.xlu0 %1244
      %1246 = vrot.lane.b32.xlu0 %v685, 12
      %v1247 = vpop.permute.xlu0 %1246
      %1248 = vrot.lane.b32.xlu0 %v687, 12
      %v1249 = vpop.permute.xlu0 %1248
      %1250 = vrot.lane.b32.xlu0 %v688, 12
      %v1251 = vpop.permute.xlu0 %1250
      %1252 = vrot.lane.b32.xlu0 %v690, 12
      %v1253 = vpop.permute.xlu0 %1252
      %1254 = vrot.lane.b32.xlu0 %v691, 12
      %v1255 = vpop.permute.xlu0 %1254
      %1256 = vrot.lane.b32.xlu0 %v693, 12
      %v1257 = vpop.permute.xlu0 %1256
      %1258 = vrot.lane.b32.xlu0 %v694, 12
      %v1259 = vpop.permute.xlu0 %1258
      %1260 = vrot.lane.b32.xlu0 %v696, 12
      %v1261 = vpop.permute.xlu0 %1260
      %1262 = vrot.lane.b32.xlu0 %v697, 12
      %v1263 = vpop.permute.xlu0 %1262
      %1264 = vrot.lane.b32.xlu0 %v699, 12
      %v1265 = vpop.permute.xlu0 %1264
      %1266 = vrot.lane.b32.xlu0 %v700, 12
      %v1267 = vpop.permute.xlu0 %1266
      %1268 = vrot.lane.b32.xlu0 %v702, 12
      %v1269 = vpop.permute.xlu0 %1268
      %1270 = vrot.lane.b32.xlu0 %v703, 12
      %v1271 = vpop.permute.xlu0 %1270
      %1272 = vrot.lane.b32.xlu0 %v705, 12
      %v1273 = vpop.permute.xlu0 %1272
      %1274 = vrot.lane.b32.xlu0 %v706, 12
      %v1275 = vpop.permute.xlu0 %1274
      %1276 = vrot.lane.b32.xlu0 %v708, 12
      %v1277 = vpop.permute.xlu0 %1276
      %1278 = vrot.lane.b32.xlu0 %v709, 12
      %v1279 = vpop.permute.xlu0 %1278
      %vm1312 = vcmask 130144
      %1313 = vst.msk [vmem:[#allocation4] sm:$0xff] %vm1312, %v1217
      %1314 = vst.msk [vmem:[#allocation4 + $0x8] sm:$0xff] %vm1312, %v1219
      %1315 = vst.msk [vmem:[#allocation4 + $0x10] sm:$0xff] %vm1312, %v1221
      %1316 = vst.msk [vmem:[#allocation4 + $0x18] sm:$0xff] %vm1312, %v1223
      %1317 = vst.msk [vmem:[#allocation4 + $0x20] sm:$0xff] %vm1312, %v1225
      %1318 = vst.msk [vmem:[#allocation4 + $0x28] sm:$0xff] %vm1312, %v1227
      %1319 = vst.msk [vmem:[#allocation4 + $0x30] sm:$0xff] %vm1312, %v1229
      %1320 = vst.msk [vmem:[#allocation4 + $0x38] sm:$0xff] %vm1312, %v1231
      %1321 = vst.msk [vmem:[#allocation4 + $0x40] sm:$0xff] %vm1312, %v1233
      %1322 = vst.msk [vmem:[#allocation4 + $0x48] sm:$0xff] %vm1312, %v1235
      %1323 = vst.msk [vmem:[#allocation4 + $0x50] sm:$0xff] %vm1312, %v1237
      %1324 = vst.msk [vmem:[#allocation4 + $0x58] sm:$0xff] %vm1312, %v1239
      %1325 = vst.msk [vmem:[#allocation4 + $0x60] sm:$0xff] %vm1312, %v1241
      %1326 = vst.msk [vmem:[#allocation4 + $0x68] sm:$0xff] %vm1312, %v1243
      %1327 = vst.msk [vmem:[#allocation4 + $0x70] sm:$0xff] %vm1312, %v1245
      %1328 = vst.msk [vmem:[#allocation4 + $0x78] sm:$0xff] %vm1312, %v1247
      %1329 = vst.msk [vmem:[#allocation4 + $0x80] sm:$0xff] %vm1312, %v1249
      %1330 = vst.msk [vmem:[#allocation4 + $0x88] sm:$0xff] %vm1312, %v1251
      %1331 = vst.msk [vmem:[#allocation4 + $0x90] sm:$0xff] %vm1312, %v1253
      %1332 = vst.msk [vmem:[#allocation4 + $0x98] sm:$0xff] %vm1312, %v1255
      %1333 = vst.msk [vmem:[#allocation4 + $0xa0] sm:$0xff] %vm1312, %v1257
      %1334 = vst.msk [vmem:[#allocation4 + $0xa8] sm:$0xff] %vm1312, %v1259
      %1335 = vst.msk [vmem:[#allocation4 + $0xb0] sm:$0xff] %vm1312, %v1261
      %1336 = vst.msk [vmem:[#allocation4 + $0xb8] sm:$0xff] %vm1312, %v1263
      %1337 = vst.msk [vmem:[#allocation4 + $0xc0] sm:$0xff] %vm1312, %v1265
      %1338 = vst.msk [vmem:[#allocation4 + $0xc8] sm:$0xff] %vm1312, %v1267
      %1339 = vst.msk [vmem:[#allocation4 + $0xd0] sm:$0xff] %vm1312, %v1269
      %1340 = vst.msk [vmem:[#allocation4 + $0xd8] sm:$0xff] %vm1312, %v1271
      %1341 = vst.msk [vmem:[#allocation4 + $0xe0] sm:$0xff] %vm1312, %v1273
      %1342 = vst.msk [vmem:[#allocation4 + $0xe8] sm:$0xff] %vm1312, %v1275
      %1343 = vst.msk [vmem:[#allocation4 + $0xf0] sm:$0xff] %vm1312, %v1277
      %1344 = vst.msk [vmem:[#allocation4 + $0xf8] sm:$0xff] %vm1312, %v1279
      %v1346 = vrot.slane %v708, 1
      %v1347 = vrot.slane %v709, 1
      %v1348 = vsel %vm794, %v1346, %v1347
      %v1349 = vrot.slane %v710, 1
      %v1350 = vsel %vm794, %v1347, %v1349
      %1351 = vrot.lane.b32.xlu0 %v802, 16
      %v1352 = vpop.permute.xlu0 %1351
      %1353 = vrot.lane.b32.xlu0 %v804, 16
      %v1354 = vpop.permute.xlu0 %1353
      %1355 = vrot.lane.b32.xlu0 %v807, 16
      %v1356 = vpop.permute.xlu0 %1355
      %1357 = vrot.lane.b32.xlu0 %v809, 16
      %v1358 = vpop.permute.xlu0 %1357
      %1359 = vrot.lane.b32.xlu0 %v812, 16
      %v1360 = vpop.permute.xlu0 %1359
      %1361 = vrot.lane.b32.xlu0 %v814, 16
      %v1362 = vpop.permute.xlu0 %1361
      %1363 = vrot.lane.b32.xlu0 %v817, 16
      %v1364 = vpop.permute.xlu0 %1363
      %1365 = vrot.lane.b32.xlu0 %v819, 16
      %v1366 = vpop.permute.xlu0 %1365
      %1367 = vrot.lane.b32.xlu0 %v822, 16
      %v1368 = vpop.permute.xlu0 %1367
      %1369 = vrot.lane.b32.xlu0 %v824, 16
      %v1370 = vpop.permute.xlu0 %1369
      %1371 = vrot.lane.b32.xlu0 %v827, 16
      %v1372 = vpop.permute.xlu0 %1371
      %1373 = vrot.lane.b32.xlu0 %v829, 16
      %v1374 = vpop.permute.xlu0 %1373
      %1375 = vrot.lane.b32.xlu0 %v832, 16
      %v1376 = vpop.permute.xlu0 %1375
      %1377 = vrot.lane.b32.xlu0 %v834, 16
      %v1378 = vpop.permute.xlu0 %1377
      %1379 = vrot.lane.b32.xlu0 %v837, 16
      %v1380 = vpop.permute.xlu0 %1379
      %1381 = vrot.lane.b32.xlu0 %v839, 16
      %v1382 = vpop.permute.xlu0 %1381
      %1383 = vrot.lane.b32.xlu0 %v842, 16
      %v1384 = vpop.permute.xlu0 %1383
      %1385 = vrot.lane.b32.xlu0 %v844, 16
      %v1386 = vpop.permute.xlu0 %1385
      %1387 = vrot.lane.b32.xlu0 %v847, 16
      %v1388 = vpop.permute.xlu0 %1387
      %1389 = vrot.lane.b32.xlu0 %v849, 16
      %v1390 = vpop.permute.xlu0 %1389
      %1391 = vrot.lane.b32.xlu0 %v852, 16
      %v1392 = vpop.permute.xlu0 %1391
      %1393 = vrot.lane.b32.xlu0 %v854, 16
      %v1394 = vpop.permute.xlu0 %1393
      %1395 = vrot.lane.b32.xlu0 %v857, 16
      %v1396 = vpop.permute.xlu0 %1395
      %1397 = vrot.lane.b32.xlu0 %v859, 16
      %v1398 = vpop.permute.xlu0 %1397
      %1399 = vrot.lane.b32.xlu0 %v862, 16
      %v1400 = vpop.permute.xlu0 %1399
      %1401 = vrot.lane.b32.xlu0 %v864, 16
      %v1402 = vpop.permute.xlu0 %1401
      %1403 = vrot.lane.b32.xlu0 %v867, 16
      %v1404 = vpop.permute.xlu0 %1403
      %1405 = vrot.lane.b32.xlu0 %v869, 16
      %v1406 = vpop.permute.xlu0 %1405
      %1407 = vrot.lane.b32.xlu0 %v872, 16
      %v1408 = vpop.permute.xlu0 %1407
      %1409 = vrot.lane.b32.xlu0 %v874, 16
      %v1410 = vpop.permute.xlu0 %1409
      %1411 = vrot.lane.b32.xlu0 %v1348, 16
      %v1412 = vpop.permute.xlu0 %1411
      %1413 = vrot.lane.b32.xlu0 %v1350, 16
      %v1414 = vpop.permute.xlu0 %1413
      %vm1447 = vcmask 162944
      %1448 = vst.msk [vmem:[#allocation4] sm:$0xff] %vm1447, %v1352
      %1449 = vst.msk [vmem:[#allocation4 + $0x8] sm:$0xff] %vm1447, %v1354
      %1450 = vst.msk [vmem:[#allocation4 + $0x10] sm:$0xff] %vm1447, %v1356
      %1451 = vst.msk [vmem:[#allocation4 + $0x18] sm:$0xff] %vm1447, %v1358
      %1452 = vst.msk [vmem:[#allocation4 + $0x20] sm:$0xff] %vm1447, %v1360
      %1453 = vst.msk [vmem:[#allocation4 + $0x28] sm:$0xff] %vm1447, %v1362
      %1454 = vst.msk [vmem:[#allocation4 + $0x30] sm:$0xff] %vm1447, %v1364
      %1455 = vst.msk [vmem:[#allocation4 + $0x38] sm:$0xff] %vm1447, %v1366
      %1456 = vst.msk [vmem:[#allocation4 + $0x40] sm:$0xff] %vm1447, %v1368
      %1457 = vst.msk [vmem:[#allocation4 + $0x48] sm:$0xff] %vm1447, %v1370
      %1458 = vst.msk [vmem:[#allocation4 + $0x50] sm:$0xff] %vm1447, %v1372
      %1459 = vst.msk [vmem:[#allocation4 + $0x58] sm:$0xff] %vm1447, %v1374
      %1460 = vst.msk [vmem:[#allocation4 + $0x60] sm:$0xff] %vm1447, %v1376
      %1461 = vst.msk [vmem:[#allocation4 + $0x68] sm:$0xff] %vm1447, %v1378
      %1462 = vst.msk [vmem:[#allocation4 + $0x70] sm:$0xff] %vm1447, %v1380
      %1463 = vst.msk [vmem:[#allocation4 + $0x78] sm:$0xff] %vm1447, %v1382
      %1464 = vst.msk [vmem:[#allocation4 + $0x80] sm:$0xff] %vm1447, %v1384
      %1465 = vst.msk [vmem:[#allocation4 + $0x88] sm:$0xff] %vm1447, %v1386
      %1466 = vst.msk [vmem:[#allocation4 + $0x90] sm:$0xff] %vm1447, %v1388
      %1467 = vst.msk [vmem:[#allocation4 + $0x98] sm:$0xff] %vm1447, %v1390
      %1468 = vst.msk [vmem:[#allocation4 + $0xa0] sm:$0xff] %vm1447, %v1392
      %1469 = vst.msk [vmem:[#allocation4 + $0xa8] sm:$0xff] %vm1447, %v1394
      %1470 = vst.msk [vmem:[#allocation4 + $0xb0] sm:$0xff] %vm1447, %v1396
      %1471 = vst.msk [vmem:[#allocation4 + $0xb8] sm:$0xff] %vm1447, %v1398
      %1472 = vst.msk [vmem:[#allocation4 + $0xc0] sm:$0xff] %vm1447, %v1400
      %1473 = vst.msk [vmem:[#allocation4 + $0xc8] sm:$0xff] %vm1447, %v1402
      %1474 = vst.msk [vmem:[#allocation4 + $0xd0] sm:$0xff] %vm1447, %v1404
      %1475 = vst.msk [vmem:[#allocation4 + $0xd8] sm:$0xff] %vm1447, %v1406
      %1476 = vst.msk [vmem:[#allocation4 + $0xe0] sm:$0xff] %vm1447, %v1408
      %1477 = vst.msk [vmem:[#allocation4 + $0xe8] sm:$0xff] %vm1447, %v1410
      %1478 = vst.msk [vmem:[#allocation4 + $0xf0] sm:$0xff] %vm1447, %v1412
      %1479 = vst.msk [vmem:[#allocation4 + $0xf8] sm:$0xff] %vm1447, %v1414
      %v1480 = vrot.slane %v708, 2
      %v1481 = vrot.slane %v709, 2
      %v1482 = vsel %vm1004, %v1480, %v1481
      %v1483 = vrot.slane %v710, 2
      %v1484 = vsel %vm1004, %v1481, %v1483
      %1485 = vrot.lane.b32.xlu0 %v1012, 20
      %v1486 = vpop.permute.xlu0 %1485
      %1487 = vrot.lane.b32.xlu0 %v1014, 20
      %v1488 = vpop.permute.xlu0 %1487
      %1489 = vrot.lane.b32.xlu0 %v1017, 20
      %v1490 = vpop.permute.xlu0 %1489
      %1491 = vrot.lane.b32.xlu0 %v1019, 20
      %v1492 = vpop.permute.xlu0 %1491
      %1493 = vrot.lane.b32.xlu0 %v1022, 20
      %v1494 = vpop.permute.xlu0 %1493
      %1495 = vrot.lane.b32.xlu0 %v1024, 20
      %v1496 = vpop.permute.xlu0 %1495
      %1497 = vrot.lane.b32.xlu0 %v1027, 20
      %v1498 = vpop.permute.xlu0 %1497
      %1499 = vrot.lane.b32.xlu0 %v1029, 20
      %v1500 = vpop.permute.xlu0 %1499
      %1501 = vrot.lane.b32.xlu0 %v1032, 20
      %v1502 = vpop.permute.xlu0 %1501
      %1503 = vrot.lane.b32.xlu0 %v1034, 20
      %v1504 = vpop.permute.xlu0 %1503
      %1505 = vrot.lane.b32.xlu0 %v1037, 20
      %v1506 = vpop.permute.xlu0 %1505
      %1507 = vrot.lane.b32.xlu0 %v1039, 20
      %v1508 = vpop.permute.xlu0 %1507
      %1509 = vrot.lane.b32.xlu0 %v1042, 20
      %v1510 = vpop.permute.xlu0 %1509
      %1511 = vrot.lane.b32.xlu0 %v1044, 20
      %v1512 = vpop.permute.xlu0 %1511
      %1513 = vrot.lane.b32.xlu0 %v1047, 20
      %v1514 = vpop.permute.xlu0 %1513
      %1515 = vrot.lane.b32.xlu0 %v1049, 20
      %v1516 = vpop.permute.xlu0 %1515
      %1517 = vrot.lane.b32.xlu0 %v1052, 20
      %v1518 = vpop.permute.xlu0 %1517
      %1519 = vrot.lane.b32.xlu0 %v1054, 20
      %v1520 = vpop.permute.xlu0 %1519
      %1521 = vrot.lane.b32.xlu0 %v1057, 20
      %v1522 = vpop.permute.xlu0 %1521
      %1523 = vrot.lane.b32.xlu0 %v1059, 20
      %v1524 = vpop.permute.xlu0 %1523
      %1525 = vrot.lane.b32.xlu0 %v1062, 20
      %v1526 = vpop.permute.xlu0 %1525
      %1527 = vrot.lane.b32.xlu0 %v1064, 20
      %v1528 = vpop.permute.xlu0 %1527
      %1529 = vrot.lane.b32.xlu0 %v1067, 20
      %v1530 = vpop.permute.xlu0 %1529
      %1531 = vrot.lane.b32.xlu0 %v1069, 20
      %v1532 = vpop.permute.xlu0 %1531
      %1533 = vrot.lane.b32.xlu0 %v1072, 20
      %v1534 = vpop.permute.xlu0 %1533
      %1535 = vrot.lane.b32.xlu0 %v1074, 20
      %v1536 = vpop.permute.xlu0 %1535
      %1537 = vrot.lane.b32.xlu0 %v1077, 20
      %v1538 = vpop.permute.xlu0 %1537
      %1539 = vrot.lane.b32.xlu0 %v1079, 20
      %v1540 = vpop.permute.xlu0 %1539
      %1541 = vrot.lane.b32.xlu0 %v1082, 20
      %v1542 = vpop.permute.xlu0 %1541
      %1543 = vrot.lane.b32.xlu0 %v1084, 20
      %v1544 = vpop.permute.xlu0 %1543
      %1545 = vrot.lane.b32.xlu0 %v1482, 20
      %v1546 = vpop.permute.xlu0 %1545
      %1547 = vrot.lane.b32.xlu0 %v1484, 20
      %v1548 = vpop.permute.xlu0 %1547
      %vm1581 = vcmask 195744
      %1582 = vst.msk [vmem:[#allocation4] sm:$0xff] %vm1581, %v1486
      %1583 = vst.msk [vmem:[#allocation4 + $0x8] sm:$0xff] %vm1581, %v1488
      %1584 = vst.msk [vmem:[#allocation4 + $0x10] sm:$0xff] %vm1581, %v1490
      %1585 = vst.msk [vmem:[#allocation4 + $0x18] sm:$0xff] %vm1581, %v1492
      %1586 = vst.msk [vmem:[#allocation4 + $0x20] sm:$0xff] %vm1581, %v1494
      %1587 = vst.msk [vmem:[#allocation4 + $0x28] sm:$0xff] %vm1581, %v1496
      %1588 = vst.msk [vmem:[#allocation4 + $0x30] sm:$0xff] %vm1581, %v1498
      %1589 = vst.msk [vmem:[#allocation4 + $0x38] sm:$0xff] %vm1581, %v1500
      %1590 = vst.msk [vmem:[#allocation4 + $0x40] sm:$0xff] %vm1581, %v1502
      %1591 = vst.msk [vmem:[#allocation4 + $0x48] sm:$0xff] %vm1581, %v1504
      %1592 = vst.msk [vmem:[#allocation4 + $0x50] sm:$0xff] %vm1581, %v1506
      %1593 = vst.msk [vmem:[#allocation4 + $0x58] sm:$0xff] %vm1581, %v1508
      %1594 = vst.msk [vmem:[#allocation4 + $0x60] sm:$0xff] %vm1581, %v1510
      %1595 = vst.msk [vmem:[#allocation4 + $0x68] sm:$0xff] %vm1581, %v1512
      %1596 = vst.msk [vmem:[#allocation4 + $0x70] sm:$0xff] %vm1581, %v1514
      %1597 = vst.msk [vmem:[#allocation4 + $0x78] sm:$0xff] %vm1581, %v1516
      %1598 = vst.msk [vmem:[#allocation4 + $0x80] sm:$0xff] %vm1581, %v1518
      %1599 = vst.msk [vmem:[#allocation4 + $0x88] sm:$0xff] %vm1581, %v1520
      %1600 = vst.msk [vmem:[#allocation4 + $0x90] sm:$0xff] %vm1581, %v1522
      %1601 = vst.msk [vmem:[#allocation4 + $0x98] sm:$0xff] %vm1581, %v1524
      %1602 = vst.msk [vmem:[#allocation4 + $0xa0] sm:$0xff] %vm1581, %v1526
      %1603 = vst.msk [vmem:[#allocation4 + $0xa8] sm:$0xff] %vm1581, %v1528
      %1604 = vst.msk [vmem:[#allocation4 + $0xb0] sm:$0xff] %vm1581, %v1530
      %1605 = vst.msk [vmem:[#allocation4 + $0xb8] sm:$0xff] %vm1581, %v1532
      %1606 = vst.msk [vmem:[#allocation4 + $0xc0] sm:$0xff] %vm1581, %v1534
      %1607 = vst.msk [vmem:[#allocation4 + $0xc8] sm:$0xff] %vm1581, %v1536
      %1608 = vst.msk [vmem:[#allocation4 + $0xd0] sm:$0xff] %vm1581, %v1538
      %1609 = vst.msk [vmem:[#allocation4 + $0xd8] sm:$0xff] %vm1581, %v1540
      %1610 = vst.msk [vmem:[#allocation4 + $0xe0] sm:$0xff] %vm1581, %v1542
      %1611 = vst.msk [vmem:[#allocation4 + $0xe8] sm:$0xff] %vm1581, %v1544
      %1612 = vst.msk [vmem:[#allocation4 + $0xf0] sm:$0xff] %vm1581, %v1546
      %1613 = vst.msk [vmem:[#allocation4 + $0xf8] sm:$0xff] %vm1581, %v1548
      %1616 = vrot.lane.b32.xlu0 %v666, 24
      %v1617 = vpop.permute.xlu0 %1616
      %1618 = vrot.lane.b32.xlu0 %v667, 24
      %v1619 = vpop.permute.xlu0 %1618
      %1620 = vrot.lane.b32.xlu0 %v669, 24
      %v1621 = vpop.permute.xlu0 %1620
      %1622 = vrot.lane.b32.xlu0 %v670, 24
      %v1623 = vpop.permute.xlu0 %1622
      %1624 = vrot.lane.b32.xlu0 %v672, 24
      %v1625 = vpop.permute.xlu0 %1624
      %1626 = vrot.lane.b32.xlu0 %v673, 24
      %v1627 = vpop.permute.xlu0 %1626
      %1628 = vrot.lane.b32.xlu0 %v675, 24
      %v1629 = vpop.permute.xlu0 %1628
      %1630 = vrot.lane.b32.xlu0 %v676, 24
      %v1631 = vpop.permute.xlu0 %1630
      %1632 = vrot.lane.b32.xlu0 %v678, 24
      %v1633 = vpop.permute.xlu0 %1632
      %1634 = vrot.lane.b32.xlu0 %v679, 24
      %v1635 = vpop.permute.xlu0 %1634
      %1636 = vrot.lane.b32.xlu0 %v681, 24
      %v1637 = vpop.permute.xlu0 %1636
      %1638 = vrot.lane.b32.xlu0 %v682, 24
      %v1639 = vpop.permute.xlu0 %1638
      %1640 = vrot.lane.b32.xlu0 %v684, 24
      %v1641 = vpop.permute.xlu0 %1640
      %1642 = vrot.lane.b32.xlu0 %v685, 24
      %v1643 = vpop.permute.xlu0 %1642
      %1644 = vrot.lane.b32.xlu0 %v687, 24
      %v1645 = vpop.permute.xlu0 %1644
      %1646 = vrot.lane.b32.xlu0 %v688, 24
      %v1647 = vpop.permute.xlu0 %1646
      %1648 = vrot.lane.b32.xlu0 %v690, 24
      %v1649 = vpop.permute.xlu0 %1648
      %1650 = vrot.lane.b32.xlu0 %v691, 24
      %v1651 = vpop.permute.xlu0 %1650
      %1652 = vrot.lane.b32.xlu0 %v693, 24
      %v1653 = vpop.permute.xlu0 %1652
      %1654 = vrot.lane.b32.xlu0 %v694, 24
      %v1655 = vpop.permute.xlu0 %1654
      %1656 = vrot.lane.b32.xlu0 %v696, 24
      %v1657 = vpop.permute.xlu0 %1656
      %1658 = vrot.lane.b32.xlu0 %v697, 24
      %v1659 = vpop.permute.xlu0 %1658
      %1660 = vrot.lane.b32.xlu0 %v699, 24
      %v1661 = vpop.permute.xlu0 %1660
      %1662 = vrot.lane.b32.xlu0 %v700, 24
      %v1663 = vpop.permute.xlu0 %1662
      %1664 = vrot.lane.b32.xlu0 %v702, 24
      %v1665 = vpop.permute.xlu0 %1664
      %1666 = vrot.lane.b32.xlu0 %v703, 24
      %v1667 = vpop.permute.xlu0 %1666
      %1668 = vrot.lane.b32.xlu0 %v705, 24
      %v1669 = vpop.permute.xlu0 %1668
      %1670 = vrot.lane.b32.xlu0 %v706, 24
      %v1671 = vpop.permute.xlu0 %1670
      %1672 = vrot.lane.b32.xlu0 %v708, 24
      %v1673 = vpop.permute.xlu0 %1672
      %1674 = vrot.lane.b32.xlu0 %v709, 24
      %v1675 = vpop.permute.xlu0 %1674
      %1676 = vrot.lane.b32.xlu0 %v711, 24
      %v1677 = vpop.permute.xlu0 %1676
      %1678 = vrot.lane.b32.xlu0 %v712, 24
      %v1679 = vpop.permute.xlu0 %1678
      %vm1712 = vcmask 228544
      %1713 = vst.msk [vmem:[#allocation4] sm:$0xff] %vm1712, %v1617
      %1714 = vst.msk [vmem:[#allocation4 + $0x8] sm:$0xff] %vm1712, %v1619
      %1715 = vst.msk [vmem:[#allocation4 + $0x10] sm:$0xff] %vm1712, %v1621
      %1716 = vst.msk [vmem:[#allocation4 + $0x18] sm:$0xff] %vm1712, %v1623
      %1717 = vst.msk [vmem:[#allocation4 + $0x20] sm:$0xff] %vm1712, %v1625
      %1718 = vst.msk [vmem:[#allocation4 + $0x28] sm:$0xff] %vm1712, %v1627
      %1719 = vst.msk [vmem:[#allocation4 + $0x30] sm:$0xff] %vm1712, %v1629
      %1720 = vst.msk [vmem:[#allocation4 + $0x38] sm:$0xff] %vm1712, %v1631
      %1721 = vst.msk [vmem:[#allocation4 + $0x40] sm:$0xff] %vm1712, %v1633
      %1722 = vst.msk [vmem:[#allocation4 + $0x48] sm:$0xff] %vm1712, %v1635
      %1723 = vst.msk [vmem:[#allocation4 + $0x50] sm:$0xff] %vm1712, %v1637
      %1724 = vst.msk [vmem:[#allocation4 + $0x58] sm:$0xff] %vm1712, %v1639
      %1725 = vst.msk [vmem:[#allocation4 + $0x60] sm:$0xff] %vm1712, %v1641
      %1726 = vst.msk [vmem:[#allocation4 + $0x68] sm:$0xff] %vm1712, %v1643
      %1727 = vst.msk [vmem:[#allocation4 + $0x70] sm:$0xff] %vm1712, %v1645
      %1728 = vst.msk [vmem:[#allocation4 + $0x78] sm:$0xff] %vm1712, %v1647
      %1729 = vst.msk [vmem:[#allocation4 + $0x80] sm:$0xff] %vm1712, %v1649
      %1730 = vst.msk [vmem:[#allocation4 + $0x88] sm:$0xff] %vm1712, %v1651
      %1731 = vst.msk [vmem:[#allocation4 + $0x90] sm:$0xff] %vm1712, %v1653
      %1732 = vst.msk [vmem:[#allocation4 + $0x98] sm:$0xff] %vm1712, %v1655
      %1733 = vst.msk [vmem:[#allocation4 + $0xa0] sm:$0xff] %vm1712, %v1657
      %1734 = vst.msk [vmem:[#allocation4 + $0xa8] sm:$0xff] %vm1712, %v1659
      %1735 = vst.msk [vmem:[#allocation4 + $0xb0] sm:$0xff] %vm1712, %v1661
      %1736 = vst.msk [vmem:[#allocation4 + $0xb8] sm:$0xff] %vm1712, %v1663
      %1737 = vst.msk [vmem:[#allocation4 + $0xc0] sm:$0xff] %vm1712, %v1665
      %1738 = vst.msk [vmem:[#allocation4 + $0xc8] sm:$0xff] %vm1712, %v1667
      %1739 = vst.msk [vmem:[#allocation4 + $0xd0] sm:$0xff] %vm1712, %v1669
      %1740 = vst.msk [vmem:[#allocation4 + $0xd8] sm:$0xff] %vm1712, %v1671
      %1741 = vst.msk [vmem:[#allocation4 + $0xe0] sm:$0xff] %vm1712, %v1673
      %1742 = vst.msk [vmem:[#allocation4 + $0xe8] sm:$0xff] %vm1712, %v1675
      %1743 = vst.msk [vmem:[#allocation4 + $0xf0] sm:$0xff] %vm1712, %v1677
      %1744 = vst.msk [vmem:[#allocation4 + $0xf8] sm:$0xff] %vm1712, %v1679
      %v1746 = vrot.slane %v711, 1
      %v1747 = vrot.slane %v712, 1
      %v1748 = vsel %vm794, %v1746, %v1747
      %v1749 = vrot.slane %v713, 1
      %v1750 = vsel %vm794, %v1747, %v1749
      %1751 = vrot.lane.b32.xlu0 %v807, 28
      %v1752 = vpop.permute.xlu0 %1751
      %1753 = vrot.lane.b32.xlu0 %v809, 28
      %v1754 = vpop.permute.xlu0 %1753
      %1755 = vrot.lane.b32.xlu0 %v812, 28
      %v1756 = vpop.permute.xlu0 %1755
      %1757 = vrot.lane.b32.xlu0 %v814, 28
      %v1758 = vpop.permute.xlu0 %1757
      %1759 = vrot.lane.b32.xlu0 %v817, 28
      %v1760 = vpop.permute.xlu0 %1759
      %1761 = vrot.lane.b32.xlu0 %v819, 28
      %v1762 = vpop.permute.xlu0 %1761
      %1763 = vrot.lane.b32.xlu0 %v822, 28
      %v1764 = vpop.permute.xlu0 %1763
      %1765 = vrot.lane.b32.xlu0 %v824, 28
      %v1766 = vpop.permute.xlu0 %1765
      %1767 = vrot.lane.b32.xlu0 %v827, 28
      %v1768 = vpop.permute.xlu0 %1767
      %1769 = vrot.lane.b32.xlu0 %v829, 28
      %v1770 = vpop.permute.xlu0 %1769
      %1771 = vrot.lane.b32.xlu0 %v832, 28
      %v1772 = vpop.permute.xlu0 %1771
      %1773 = vrot.lane.b32.xlu0 %v834, 28
      %v1774 = vpop.permute.xlu0 %1773
      %1775 = vrot.lane.b32.xlu0 %v837, 28
      %v1776 = vpop.permute.xlu0 %1775
      %1777 = vrot.lane.b32.xlu0 %v839, 28
      %v1778 = vpop.permute.xlu0 %1777
      %1779 = vrot.lane.b32.xlu0 %v842, 28
      %v1780 = vpop.permute.xlu0 %1779
      %1781 = vrot.lane.b32.xlu0 %v844, 28
      %v1782 = vpop.permute.xlu0 %1781
      %1783 = vrot.lane.b32.xlu0 %v847, 28
      %v1784 = vpop.permute.xlu0 %1783
      %1785 = vrot.lane.b32.xlu0 %v849, 28
      %v1786 = vpop.permute.xlu0 %1785
      %1787 = vrot.lane.b32.xlu0 %v852, 28
      %v1788 = vpop.permute.xlu0 %1787
      %1789 = vrot.lane.b32.xlu0 %v854, 28
      %v1790 = vpop.permute.xlu0 %1789
      %1791 = vrot.lane.b32.xlu0 %v857, 28
      %v1792 = vpop.permute.xlu0 %1791
      %1793 = vrot.lane.b32.xlu0 %v859, 28
      %v1794 = vpop.permute.xlu0 %1793
      %1795 = vrot.lane.b32.xlu0 %v862, 28
      %v1796 = vpop.permute.xlu0 %1795
      %1797 = vrot.lane.b32.xlu0 %v864, 28
      %v1798 = vpop.permute.xlu0 %1797
      %1799 = vrot.lane.b32.xlu0 %v867, 28
      %v1800 = vpop.permute.xlu0 %1799
      %1801 = vrot.lane.b32.xlu0 %v869, 28
      %v1802 = vpop.permute.xlu0 %1801
      %1803 = vrot.lane.b32.xlu0 %v872, 28
      %v1804 = vpop.permute.xlu0 %1803
      %1805 = vrot.lane.b32.xlu0 %v874, 28
      %v1806 = vpop.permute.xlu0 %1805
      %1807 = vrot.lane.b32.xlu0 %v1348, 28
      %v1808 = vpop.permute.xlu0 %1807
      %1809 = vrot.lane.b32.xlu0 %v1350, 28
      %v1810 = vpop.permute.xlu0 %1809
      %1811 = vrot.lane.b32.xlu0 %v1748, 28
      %v1812 = vpop.permute.xlu0 %1811
      %1813 = vrot.lane.b32.xlu0 %v1750, 28
      %v1814 = vpop.permute.xlu0 %1813
      %vm1847 = vcmask 261344
      %1848 = vst.msk [vmem:[#allocation4] sm:$0xff] %vm1847, %v1752
      %1849 = vst.msk [vmem:[#allocation4 + $0x8] sm:$0xff] %vm1847, %v1754
      %1850 = vst.msk [vmem:[#allocation4 + $0x10] sm:$0xff] %vm1847, %v1756
      %1851 = vst.msk [vmem:[#allocation4 + $0x18] sm:$0xff] %vm1847, %v1758
      %1852 = vst.msk [vmem:[#allocation4 + $0x20] sm:$0xff] %vm1847, %v1760
      %1853 = vst.msk [vmem:[#allocation4 + $0x28] sm:$0xff] %vm1847, %v1762
      %1854 = vst.msk [vmem:[#allocation4 + $0x30] sm:$0xff] %vm1847, %v1764
      %1855 = vst.msk [vmem:[#allocation4 + $0x38] sm:$0xff] %vm1847, %v1766
      %1856 = vst.msk [vmem:[#allocation4 + $0x40] sm:$0xff] %vm1847, %v1768
      %1857 = vst.msk [vmem:[#allocation4 + $0x48] sm:$0xff] %vm1847, %v1770
      %1858 = vst.msk [vmem:[#allocation4 + $0x50] sm:$0xff] %vm1847, %v1772
      %1859 = vst.msk [vmem:[#allocation4 + $0x58] sm:$0xff] %vm1847, %v1774
      %1860 = vst.msk [vmem:[#allocation4 + $0x60] sm:$0xff] %vm1847, %v1776
      %1861 = vst.msk [vmem:[#allocation4 + $0x68] sm:$0xff] %vm1847, %v1778
      %1862 = vst.msk [vmem:[#allocation4 + $0x70] sm:$0xff] %vm1847, %v1780
      %1863 = vst.msk [vmem:[#allocation4 + $0x78] sm:$0xff] %vm1847, %v1782
      %1864 = vst.msk [vmem:[#allocation4 + $0x80] sm:$0xff] %vm1847, %v1784
      %1865 = vst.msk [vmem:[#allocation4 + $0x88] sm:$0xff] %vm1847, %v1786
      %1866 = vst.msk [vmem:[#allocation4 + $0x90] sm:$0xff] %vm1847, %v1788
      %1867 = vst.msk [vmem:[#allocation4 + $0x98] sm:$0xff] %vm1847, %v1790
      %1868 = vst.msk [vmem:[#allocation4 + $0xa0] sm:$0xff] %vm1847, %v1792
      %1869 = vst.msk [vmem:[#allocation4 + $0xa8] sm:$0xff] %vm1847, %v1794
      %1870 = vst.msk [vmem:[#allocation4 + $0xb0] sm:$0xff] %vm1847, %v1796
      %1871 = vst.msk [vmem:[#allocation4 + $0xb8] sm:$0xff] %vm1847, %v1798
      %1872 = vst.msk [vmem:[#allocation4 + $0xc0] sm:$0xff] %vm1847, %v1800
      %1873 = vst.msk [vmem:[#allocation4 + $0xc8] sm:$0xff] %vm1847, %v1802
      %1874 = vst.msk [vmem:[#allocation4 + $0xd0] sm:$0xff] %vm1847, %v1804
      %1875 = vst.msk [vmem:[#allocation4 + $0xd8] sm:$0xff] %vm1847, %v1806
      %1876 = vst.msk [vmem:[#allocation4 + $0xe0] sm:$0xff] %vm1847, %v1808
      %1877 = vst.msk [vmem:[#allocation4 + $0xe8] sm:$0xff] %vm1847, %v1810
      %1878 = vst.msk [vmem:[#allocation4 + $0xf0] sm:$0xff] %vm1847, %v1812
      %1879 = vst.msk [vmem:[#allocation4 + $0xf8] sm:$0xff] %vm1847, %v1814
      %v1880 = vrot.slane %v711, 2
      %v1881 = vrot.slane %v712, 2
      %v1882 = vsel %vm1004, %v1880, %v1881
      %v1883 = vrot.slane %v713, 2
      %v1884 = vsel %vm1004, %v1881, %v1883
      %1885 = vrot.lane.b32.xlu0 %v1017, 32
      %v1886 = vpop.permute.xlu0 %1885
      %1887 = vrot.lane.b32.xlu0 %v1019, 32
      %v1888 = vpop.permute.xlu0 %1887
      %1889 = vrot.lane.b32.xlu0 %v1022, 32
      %v1890 = vpop.permute.xlu0 %1889
      %1891 = vrot.lane.b32.xlu0 %v1024, 32
      %v1892 = vpop.permute.xlu0 %1891
      %1893 = vrot.lane.b32.xlu0 %v1027, 32
      %v1894 = vpop.permute.xlu0 %1893
      %1895 = vrot.lane.b32.xlu0 %v1029, 32
      %v1896 = vpop.permute.xlu0 %1895
      %1897 = vrot.lane.b32.xlu0 %v1032, 32
      %v1898 = vpop.permute.xlu0 %1897
      %1899 = vrot.lane.b32.xlu0 %v1034, 32
      %v1900 = vpop.permute.xlu0 %1899
      %1901 = vrot.lane.b32.xlu0 %v1037, 32
      %v1902 = vpop.permute.xlu0 %1901
      %1903 = vrot.lane.b32.xlu0 %v1039, 32
      %v1904 = vpop.permute.xlu0 %1903
      %1905 = vrot.lane.b32.xlu0 %v1042, 32
      %v1906 = vpop.permute.xlu0 %1905
      %1907 = vrot.lane.b32.xlu0 %v1044, 32
      %v1908 = vpop.permute.xlu0 %1907
      %1909 = vrot.lane.b32.xlu0 %v1047, 32
      %v1910 = vpop.permute.xlu0 %1909
      %1911 = vrot.lane.b32.xlu0 %v1049, 32
      %v1912 = vpop.permute.xlu0 %1911
      %1913 = vrot.lane.b32.xlu0 %v1052, 32
      %v1914 = vpop.permute.xlu0 %1913
      %1915 = vrot.lane.b32.xlu0 %v1054, 32
      %v1916 = vpop.permute.xlu0 %1915
      %1917 = vrot.lane.b32.xlu0 %v1057, 32
      %v1918 = vpop.permute.xlu0 %1917
      %1919 = vrot.lane.b32.xlu0 %v1059, 32
      %v1920 = vpop.permute.xlu0 %1919
      %1921 = vrot.lane.b32.xlu0 %v1062, 32
      %v1922 = vpop.permute.xlu0 %1921
      %1923 = vrot.lane.b32.xlu0 %v1064, 32
      %v1924 = vpop.permute.xlu0 %1923
      %1925 = vrot.lane.b32.xlu0 %v1067, 32
      %v1926 = vpop.permute.xlu0 %1925
      %1927 = vrot.lane.b32.xlu0 %v1069, 32
      %v1928 = vpop.permute.xlu0 %1927
      %1929 = vrot.lane.b32.xlu0 %v1072, 32
      %v1930 = vpop.permute.xlu0 %1929
      %1931 = vrot.lane.b32.xlu0 %v1074, 32
      %v1932 = vpop.permute.xlu0 %1931
      %1933 = vrot.lane.b32.xlu0 %v1077, 32
      %v1934 = vpop.permute.xlu0 %1933
      %1935 = vrot.lane.b32.xlu0 %v1079, 32
      %v1936 = vpop.permute.xlu0 %1935
      %1937 = vrot.lane.b32.xlu0 %v1082, 32
      %v1938 = vpop.permute.xlu0 %1937
      %1939 = vrot.lane.b32.xlu0 %v1084, 32
      %v1940 = vpop.permute.xlu0 %1939
      %1941 = vrot.lane.b32.xlu0 %v1482, 32
      %v1942 = vpop.permute.xlu0 %1941
      %1943 = vrot.lane.b32.xlu0 %v1484, 32
      %v1944 = vpop.permute.xlu0 %1943
      %1945 = vrot.lane.b32.xlu0 %v1882, 32
      %v1946 = vpop.permute.xlu0 %1945
      %1947 = vrot.lane.b32.xlu0 %v1884, 32
      %v1948 = vpop.permute.xlu0 %1947
      %vm1981 = vcmask 294144
      %1982 = vst.msk [vmem:[#allocation4] sm:$0xff] %vm1981, %v1886
      %1983 = vst.msk [vmem:[#allocation4 + $0x8] sm:$0xff] %vm1981, %v1888
      %1984 = vst.msk [vmem:[#allocation4 + $0x10] sm:$0xff] %vm1981, %v1890
      %1985 = vst.msk [vmem:[#allocation4 + $0x18] sm:$0xff] %vm1981, %v1892
      %1986 = vst.msk [vmem:[#allocation4 + $0x20] sm:$0xff] %vm1981, %v1894
      %1987 = vst.msk [vmem:[#allocation4 + $0x28] sm:$0xff] %vm1981, %v1896
      %1988 = vst.msk [vmem:[#allocation4 + $0x30] sm:$0xff] %vm1981, %v1898
      %1989 = vst.msk [vmem:[#allocation4 + $0x38] sm:$0xff] %vm1981, %v1900
      %1990 = vst.msk [vmem:[#allocation4 + $0x40] sm:$0xff] %vm1981, %v1902
      %1991 = vst.msk [vmem:[#allocation4 + $0x48] sm:$0xff] %vm1981, %v1904
      %1992 = vst.msk [vmem:[#allocation4 + $0x50] sm:$0xff] %vm1981, %v1906
      %1993 = vst.msk [vmem:[#allocation4 + $0x58] sm:$0xff] %vm1981, %v1908
      %1994 = vst.msk [vmem:[#allocation4 + $0x60] sm:$0xff] %vm1981, %v1910
      %1995 = vst.msk [vmem:[#allocation4 + $0x68] sm:$0xff] %vm1981, %v1912
      %1996 = vst.msk [vmem:[#allocation4 + $0x70] sm:$0xff] %vm1981, %v1914
      %1997 = vst.msk [vmem:[#allocation4 + $0x78] sm:$0xff] %vm1981, %v1916
      %1998 = vst.msk [vmem:[#allocation4 + $0x80] sm:$0xff] %vm1981, %v1918
      %1999 = vst.msk [vmem:[#allocation4 + $0x88] sm:$0xff] %vm1981, %v1920
      %2000 = vst.msk [vmem:[#allocation4 + $0x90] sm:$0xff] %vm1981, %v1922
      %2001 = vst.msk [vmem:[#allocation4 + $0x98] sm:$0xff] %vm1981, %v1924
      %2002 = vst.msk [vmem:[#allocation4 + $0xa0] sm:$0xff] %vm1981, %v1926
      %2003 = vst.msk [vmem:[#allocation4 + $0xa8] sm:$0xff] %vm1981, %v1928
      %2004 = vst.msk [vmem:[#allocation4 + $0xb0] sm:$0xff] %vm1981, %v1930
      %2005 = vst.msk [vmem:[#allocation4 + $0xb8] sm:$0xff] %vm1981, %v1932
      %2006 = vst.msk [vmem:[#allocation4 + $0xc0] sm:$0xff] %vm1981, %v1934
      %2007 = vst.msk [vmem:[#allocation4 + $0xc8] sm:$0xff] %vm1981, %v1936
      %2008 = vst.msk [vmem:[#allocation4 + $0xd0] sm:$0xff] %vm1981, %v1938
      %2009 = vst.msk [vmem:[#allocation4 + $0xd8] sm:$0xff] %vm1981, %v1940
      %2010 = vst.msk [vmem:[#allocation4 + $0xe0] sm:$0xff] %vm1981, %v1942
      %2011 = vst.msk [vmem:[#allocation4 + $0xe8] sm:$0xff] %vm1981, %v1944
      %2012 = vst.msk [vmem:[#allocation4 + $0xf0] sm:$0xff] %vm1981, %v1946
      %2013 = vst.msk [vmem:[#allocation4 + $0xf8] sm:$0xff] %vm1981, %v1948
      %v2014 = vld [vmem:[#allocation4] sm:$0xff]
      %v2015 = vld [vmem:[#allocation4 + $0x8] sm:$0xff]
      %v2016 = vld [vmem:[#allocation4 + $0x10] sm:$0xff]
      %v2017 = vld [vmem:[#allocation4 + $0x18] sm:$0xff]
      %v2018 = vld [vmem:[#allocation4 + $0x20] sm:$0xff]
      %v2019 = vld [vmem:[#allocation4 + $0x28] sm:$0xff]
      %v2020 = vld [vmem:[#allocation4 + $0x30] sm:$0xff]
      %v2021 = vld [vmem:[#allocation4 + $0x38] sm:$0xff]
      %v2022 = vld [vmem:[#allocation4 + $0x40] sm:$0xff]
      %v2023 = vld [vmem:[#allocation4 + $0x48] sm:$0xff]
      %v2024 = vld [vmem:[#allocation4 + $0x50] sm:$0xff]
      %v2025 = vld [vmem:[#allocation4 + $0x58] sm:$0xff]
      %v2026 = vld [vmem:[#allocation4 + $0x60] sm:$0xff]
      %v2027 = vld [vmem:[#allocation4 + $0x68] sm:$0xff]
      %v2028 = vld [vmem:[#allocation4 + $0x70] sm:$0xff]
      %v2029 = vld [vmem:[#allocation4 + $0x78] sm:$0xff]
      %v2030 = vld [vmem:[#allocation4 + $0x80] sm:$0xff]
      %v2031 = vld [vmem:[#allocation4 + $0x88] sm:$0xff]
      %v2032 = vld [vmem:[#allocation4 + $0x90] sm:$0xff]
      %v2033 = vld [vmem:[#allocation4 + $0x98] sm:$0xff]
      %v2034 = vld [vmem:[#allocation4 + $0xa0] sm:$0xff]
      %v2035 = vld [vmem:[#allocation4 + $0xa8] sm:$0xff]
      %v2036 = vld [vmem:[#allocation4 + $0xb0] sm:$0xff]
      %v2037 = vld [vmem:[#allocation4 + $0xb8] sm:$0xff]
      %v2038 = vld [vmem:[#allocation4 + $0xc0] sm:$0xff]
      %v2039 = vld [vmem:[#allocation4 + $0xc8] sm:$0xff]
      %v2040 = vld [vmem:[#allocation4 + $0xd0] sm:$0xff]
      %v2041 = vld [vmem:[#allocation4 + $0xd8] sm:$0xff]
      %v2042 = vld [vmem:[#allocation4 + $0xe0] sm:$0xff]
      %v2043 = vld [vmem:[#allocation4 + $0xe8] sm:$0xff]
      %v2044 = vld [vmem:[#allocation4 + $0xf0] sm:$0xff]
      %v2045 = vld [vmem:[#allocation4 + $0xf8] sm:$0xff]
      %v2046 = vld [vmem:[%s6] sm:$0xff]
      %v2047 = vld [vmem:[%s6 + $0x8] sm:$0xff]
      %v2048 = vld [vmem:[%s6 + $0x10] sm:$0xff]
      %v2049 = vld [vmem:[%s6 + $0x18] sm:$0xff]
      %v2050 = vld [vmem:[%s6 + $0x20] sm:$0xf]
      %v2051 = vld [vmem:[%s7] sm:$0x1]
      %v2053 = vlaneseq
      %v2054 = vshrl.u32 %v2053, 7
      %v2055 = vsub.s32 0, %v2054
      %v2056 = vrot.slane %v2051, %v2055
      %vm2058 = vcmask 293888
      %v2060 = vsel %vm2058, %v2014, 0
      %v2063 = vsel %vm2058, %v2015, 0
      %v2066 = vsel %vm2058, %v2016, 0
      %v2069 = vsel %vm2058, %v2017, 0
      %v2072 = vsel %vm2058, %v2018, 0
      %v2075 = vsel %vm2058, %v2019, 0
      %v2078 = vsel %vm2058, %v2020, 0
      %v2081 = vsel %vm2058, %v2021, 0
      %v2084 = vsel %vm2058, %v2022, 0
      %v2087 = vsel %vm2058, %v2023, 0
      %v2090 = vsel %vm2058, %v2024, 0
      %v2093 = vsel %vm2058, %v2025, 0
      %v2096 = vsel %vm2058, %v2026, 0
      %v2099 = vsel %vm2058, %v2027, 0
      %v2102 = vsel %vm2058, %v2028, 0
      %v2105 = vsel %vm2058, %v2029, 0
      %v2108 = vsel %vm2058, %v2030, 0
      %v2111 = vsel %vm2058, %v2031, 0
      %v2114 = vsel %vm2058, %v2032, 0
      %v2117 = vsel %vm2058, %v2033, 0
      %v2120 = vsel %vm2058, %v2034, 0
      %v2123 = vsel %vm2058, %v2035, 0
      %v2126 = vsel %vm2058, %v2036, 0
      %v2129 = vsel %vm2058, %v2037, 0
      %v2132 = vsel %vm2058, %v2038, 0
      %v2135 = vsel %vm2058, %v2039, 0
      %v2138 = vsel %vm2058, %v2040, 0
      %v2141 = vsel %vm2058, %v2041, 0
      %v2144 = vsel %vm2058, %v2042, 0
      %v2147 = vsel %vm2058, %v2043, 0
      %v2150 = vsel %vm2058, %v2044, 0
      %v2153 = vsel %vm2058, %v2045, 0
      %vm2155 = vcmask 1043456
      %v2157 = vsel %vm2155, %v2050, 0
      %2159 = vmatprep.subr.mxu0 0.0
      %2160 = vmatpush1.msra.mxu0 %v2046
      %2161 = vmatprep.subr.mxu0 0.0
      %2162 = vmatpush1.msra.mxu0 %v2047
      %2163 = vmatprep.subr.mxu0 0.0
      %2164 = vmatpush1.msra.mxu0 %v2048
      %2165 = vmatprep.subr.mxu0 0.0
      %2166 = vmatpush1.msra.mxu0 %v2049
      %2167 = vmatprep.subr.mxu0 0.0
      %2168 = vmatpush1.msra.mxu0 %v2157
      %2169 = vmatprep.subr.mxu0 0.0
      %2170 = vmatpush1.msra.mxu0 0.0
      %2171 = vmatprep.subr.mxu0 0.0
      %2172 = vmatpush1.msra.mxu0 0.0
      %2173 = vmatprep.subr.mxu0 0.0
      %2174 = vmatpush1.msra.mxu0 0.0
      %2175 = vmatprep.subr.mxu0 0.0
      %2176 = vmatpush1.msra.mxu0 0.0
      %2177 = vmatprep.subr.mxu0 0.0
      %2178 = vmatpush1.msra.mxu0 0.0
      %2179 = vmatprep.subr.mxu0 0.0
      %2180 = vmatpush1.msra.mxu0 0.0
      %2181 = vmatprep.subr.mxu0 0.0
      %2182 = vmatpush1.msra.mxu0 0.0
      %2183 = vmatprep.subr.mxu0 0.0
      %2184 = vmatpush1.msra.mxu0 0.0
      %2185 = vmatprep.subr.mxu0 0.0
      %2186 = vmatpush1.msra.mxu0 0.0
      %2187 = vmatprep.subr.mxu0 0.0
      %2188 = vmatpush1.msra.mxu0 0.0
      %2189 = vmatprep.subr.mxu0 0.0
      %2190 = vmatpush1.msra.mxu0 0.0
      %2191 = vmatprep.subr.mxu0 0.0
      %2192 = vmatpush1.msra.mxu0 0.0
      %2193 = vmatprep.subr.mxu0 0.0
      %2194 = vmatpush1.msra.mxu0 0.0
      %2195 = vmatprep.subr.mxu0 0.0
      %2196 = vmatpush1.msra.mxu0 0.0
      %2197 = vmatprep.subr.mxu0 0.0
      %2198 = vmatpush1.msra.mxu0 0.0
      %2199 = vmatprep.subr.mxu0 0.0
      %2200 = vmatpush1.msra.mxu0 0.0
      %2201 = vmatprep.subr.mxu0 0.0
      %2202 = vmatpush1.msra.mxu0 0.0
      %2203 = vmatprep.subr.mxu0 0.0
      %2204 = vmatpush1.msra.mxu0 0.0
      %2205 = vmatprep.subr.mxu0 0.0
      %2206 = vmatpush1.msra.mxu0 0.0
      %2207 = vmatprep.subr.mxu0 0.0
      %2208 = vmatpush1.msra.mxu0 0.0
      %2209 = vmatprep.subr.mxu0 0.0
      %2210 = vmatpush1.msra.mxu0 0.0
      %2211 = vmatprep.subr.mxu0 0.0
      %2212 = vmatpush1.msra.mxu0 0.0
      %2213 = vmatprep.subr.mxu0 0.0
      %2214 = vmatpush1.msra.mxu0 0.0
      %2215 = vmatprep.subr.mxu0 0.0
      %2216 = vmatpush1.msra.mxu0 0.0
      %2217 = vmatprep.subr.mxu0 0.0
      %2218 = vmatpush1.msra.mxu0 0.0
      %2219 = vmatprep.subr.mxu0 0.0
      %2220 = vmatpush1.msra.mxu0 0.0
      %2221 = vmatprep.subr.mxu0 0.0
      %2222 = vmatpush1.msra.mxu0 0.0
      %2223 = vmatprep.mubr.f32.mxu0 0.0
      %2224 = vmatmul.mubr.f32.gmra.mrb[0].mxu0 %v2060
      %v2225 = vpop.f32.mrb[0].mxu0
      %v2226 = vadd.f32 %v2056, %v2225
      %v2227 = vpop.f32.mrb[0].mxu0
      %2228 = vmatprep.mubr.f32.mxu0 0.0
      %2229 = vmatmul.mubr.f32.gmra.mrb[0].mxu0 %v2063
      %v2230 = vpop.f32.mrb[0].mxu0
      %v2231 = vadd.f32 %v2056, %v2230
      %v2232 = vpop.f32.mrb[0].mxu0
      %2233 = vmatprep.mubr.f32.mxu0 0.0
      %2234 = vmatmul.mubr.f32.gmra.mrb[0].mxu0 %v2066
      %v2235 = vpop.f32.mrb[0].mxu0
      %v2236 = vadd.f32 %v2056, %v2235
      %v2237 = vpop.f32.mrb[0].mxu0
      %2238 = vmatprep.mubr.f32.mxu0 0.0
      %2239 = vmatmul.mubr.f32.gmra.mrb[0].mxu0 %v2069
      %v2240 = vpop.f32.mrb[0].mxu0
      %v2241 = vadd.f32 %v2056, %v2240
      %v2242 = vpop.f32.mrb[0].mxu0
      %2243 = vmatprep.mubr.f32.mxu0 0.0
      %2244 = vmatmul.mubr.f32.gmra.mrb[0].mxu0 %v2072
      %v2245 = vpop.f32.mrb[0].mxu0
      %v2246 = vadd.f32 %v2056, %v2245
      %v2247 = vpop.f32.mrb[0].mxu0
      %2248 = vmatprep.mubr.f32.mxu0 0.0
      %2249 = vmatmul.mubr.f32.gmra.mrb[0].mxu0 %v2075
      %v2250 = vpop.f32.mrb[0].mxu0
      %v2251 = vadd.f32 %v2056, %v2250
      %v2252 = vpop.f32.mrb[0].mxu0
      %2253 = vmatprep.mubr.f32.mxu0 0.0
      %2254 = vmatmul.mubr.f32.gmra.mrb[0].mxu0 %v2078
      %v2255 = vpop.f32.mrb[0].mxu0
      %v2256 = vadd.f32 %v2056, %v2255
      %v2257 = vpop.f32.mrb[0].mxu0
      %2258 = vmatprep.mubr.f32.mxu0 0.0
      %2259 = vmatmul.mubr.f32.gmra.mrb[0].mxu0 %v2081
      %v2260 = vpop.f32.mrb[0].mxu0
      %v2261 = vadd.f32 %v2056, %v2260
      %v2262 = vpop.f32.mrb[0].mxu0
      %2263 = vmatprep.mubr.f32.mxu0 0.0
      %2264 = vmatmul.mubr.f32.gmra.mrb[0].mxu0 %v2084
      %v2265 = vpop.f32.mrb[0].mxu0
      %v2266 = vadd.f32 %v2056, %v2265
      %v2267 = vpop.f32.mrb[0].mxu0
      %2268 = vmatprep.mubr.f32.mxu0 0.0
      %2269 = vmatmul.mubr.f32.gmra.mrb[0].mxu0 %v2087
      %v2270 = vpop.f32.mrb[0].mxu0
      %v2271 = vadd.f32 %v2056, %v2270
      %v2272 = vpop.f32.mrb[0].mxu0
      %2273 = vmatprep.mubr.f32.mxu0 0.0
      %2274 = vmatmul.mubr.f32.gmra.mrb[0].mxu0 %v2090
      %v2275 = vpop.f32.mrb[0].mxu0
      %v2276 = vadd.f32 %v2056, %v2275
      %v2277 = vpop.f32.mrb[0].mxu0
      %2278 = vmatprep.mubr.f32.mxu0 0.0
      %2279 = vmatmul.mubr.f32.gmra.mrb[0].mxu0 %v2093
      %v2280 = vpop.f32.mrb[0].mxu0
      %v2281 = vadd.f32 %v2056, %v2280
      %v2282 = vpop.f32.mrb[0].mxu0
      %2283 = vmatprep.mubr.f32.mxu0 0.0
      %2284 = vmatmul.mubr.f32.gmra.mrb[0].mxu0 %v2096
      %v2285 = vpop.f32.mrb[0].mxu0
      %v2286 = vadd.f32 %v2056, %v2285
      %v2287 = vpop.f32.mrb[0].mxu0
      %2288 = vmatprep.mubr.f32.mxu0 0.0
      %2289 = vmatmul.mubr.f32.gmra.mrb[0].mxu0 %v2099
      %v2290 = vpop.f32.mrb[0].mxu0
      %v2291 = vadd.f32 %v2056, %v2290
      %v2292 = vpop.f32.mrb[0].mxu0
      %2293 = vmatprep.mubr.f32.mxu0 0.0
      %2294 = vmatmul.mubr.f32.gmra.mrb[0].mxu0 %v2102
      %v2295 = vpop.f32.mrb[0].mxu0
      %v2296 = vadd.f32 %v2056, %v2295
      %v2297 = vpop.f32.mrb[0].mxu0
      %2298 = vmatprep.mubr.f32.mxu0 0.0
      %2299 = vmatmul.mubr.f32.gmra.mrb[0].mxu0 %v2105
      %v2300 = vpop.f32.mrb[0].mxu0
      %v2301 = vadd.f32 %v2056, %v2300
      %v2302 = vpop.f32.mrb[0].mxu0
      %2303 = vmatprep.mubr.f32.mxu0 0.0
      %2304 = vmatmul.mubr.f32.gmra.mrb[0].mxu0 %v2108
      %v2305 = vpop.f32.mrb[0].mxu0
      %v2306 = vadd.f32 %v2056, %v2305
      %v2307 = vpop.f32.mrb[0].mxu0
      %2308 = vmatprep.mubr.f32.mxu0 0.0
      %2309 = vmatmul.mubr.f32.gmra.mrb[0].mxu0 %v2111
      %v2310 = vpop.f32.mrb[0].mxu0
      %v2311 = vadd.f32 %v2056, %v2310
      %v2312 = vpop.f32.mrb[0].mxu0
      %2313 = vmatprep.mubr.f32.mxu0 0.0
      %2314 = vmatmul.mubr.f32.gmra.mrb[0].mxu0 %v2114
      %v2315 = vpop.f32.mrb[0].mxu0
      %v2316 = vadd.f32 %v2056, %v2315
      %v2317 = vpop.f32.mrb[0].mxu0
      %2318 = vmatprep.mubr.f32.mxu0 0.0
      %2319 = vmatmul.mubr.f32.gmra.mrb[0].mxu0 %v2117
      %v2320 = vpop.f32.mrb[0].mxu0
      %v2321 = vadd.f32 %v2056, %v2320
      %v2322 = vpop.f32.mrb[0].mxu0
      %2323 = vmatprep.mubr.f32.mxu0 0.0
      %2324 = vmatmul.mubr.f32.gmra.mrb[0].mxu0 %v2120
      %v2325 = vpop.f32.mrb[0].mxu0
      %v2326 = vadd.f32 %v2056, %v2325
      %v2327 = vpop.f32.mrb[0].mxu0
      %2328 = vmatprep.mubr.f32.mxu0 0.0
      %2329 = vmatmul.mubr.f32.gmra.mrb[0].mxu0 %v2123
      %v2330 = vpop.f32.mrb[0].mxu0
      %v2331 = vadd.f32 %v2056, %v2330
      %v2332 = vpop.f32.mrb[0].mxu0
      %2333 = vmatprep.mubr.f32.mxu0 0.0
      %2334 = vmatmul.mubr.f32.gmra.mrb[0].mxu0 %v2126
      %v2335 = vpop.f32.mrb[0].mxu0
      %v2336 = vadd.f32 %v2056, %v2335
      %v2337 = vpop.f32.mrb[0].mxu0
      %2338 = vmatprep.mubr.f32.mxu0 0.0
      %2339 = vmatmul.mubr.f32.gmra.mrb[0].mxu0 %v2129
      %v2340 = vpop.f32.mrb[0].mxu0
      %v2341 = vadd.f32 %v2056, %v2340
      %v2342 = vpop.f32.mrb[0].mxu0
      %2343 = vmatprep.mubr.f32.mxu0 0.0
      %2344 = vmatmul.mubr.f32.gmra.mrb[0].mxu0 %v2132
      %v2345 = vpop.f32.mrb[0].mxu0
      %v2346 = vadd.f32 %v2056, %v2345
      %v2347 = vpop.f32.mrb[0].mxu0
      %2348 = vmatprep.mubr.f32.mxu0 0.0
      %2349 = vmatmul.mubr.f32.gmra.mrb[0].mxu0 %v2135
      %v2350 = vpop.f32.mrb[0].mxu0
      %v2351 = vadd.f32 %v2056, %v2350
      %v2352 = vpop.f32.mrb[0].mxu0
      %2353 = vmatprep.mubr.f32.mxu0 0.0
      %2354 = vmatmul.mubr.f32.gmra.mrb[0].mxu0 %v2138
      %v2355 = vpop.f32.mrb[0].mxu0
      %v2356 = vadd.f32 %v2056, %v2355
      %v2357 = vpop.f32.mrb[0].mxu0
      %2358 = vmatprep.mubr.f32.mxu0 0.0
      %2359 = vmatmul.mubr.f32.gmra.mrb[0].mxu0 %v2141
      %v2360 = vpop.f32.mrb[0].mxu0
      %v2361 = vadd.f32 %v2056, %v2360
      %v2362 = vpop.f32.mrb[0].mxu0
      %2363 = vmatprep.mubr.f32.mxu0 0.0
      %2364 = vmatmul.mubr.f32.gmra.mrb[0].mxu0 %v2144
      %v2365 = vpop.f32.mrb[0].mxu0
      %v2366 = vadd.f32 %v2056, %v2365
      %v2367 = vpop.f32.mrb[0].mxu0
      %2368 = vmatprep.mubr.f32.mxu0 0.0
      %2369 = vmatmul.mubr.f32.gmra.mrb[0].mxu0 %v2147
      %v2370 = vpop.f32.mrb[0].mxu0
      %v2371 = vadd.f32 %v2056, %v2370
      %v2372 = vpop.f32.mrb[0].mxu0
      %2373 = vmatprep.mubr.f32.mxu0 0.0
      %2374 = vmatmul.mubr.f32.gmra.mrb[0].mxu0 %v2150
      %v2375 = vpop.f32.mrb[0].mxu0
      %v2376 = vadd.f32 %v2056, %v2375
      %v2377 = vpop.f32.mrb[0].mxu0
      %2378 = vmatprep.mubr.f32.mxu0 0.0
      %2379 = vmatmul.mubr.f32.gmra.mrb[0].mxu0 %v2153
      %v2380 = vpop.f32.mrb[0].mxu0
      %v2381 = vadd.f32 %v2056, %v2380
      %v2382 = vpop.f32.mrb[0].mxu0
      %2383 = vdwg.mxu0
      %v2384 = vlaneseq
      %v2385 = vshrl.u32 %v2384, 7
      %v2386 = vsub.s32 0, %v2385
      %v2387 = vrot.slane %v536, %v2386
      %v2388 = vadd.f32 %v2226, %v2387
      %v2389 = vadd.f32 %v2231, %v2387
      %v2390 = vadd.f32 %v2236, %v2387
      %v2391 = vadd.f32 %v2241, %v2387
      %v2392 = vadd.f32 %v2246, %v2387
      %v2393 = vadd.f32 %v2251, %v2387
      %v2394 = vadd.f32 %v2256, %v2387
      %v2395 = vadd.f32 %v2261, %v2387
      %v2396 = vadd.f32 %v2266, %v2387
      %v2397 = vadd.f32 %v2271, %v2387
      %v2398 = vadd.f32 %v2276, %v2387
      %v2399 = vadd.f32 %v2281, %v2387
      %v2400 = vadd.f32 %v2286, %v2387
      %v2401 = vadd.f32 %v2291, %v2387
      %v2402 = vadd.f32 %v2296, %v2387
      %v2403 = vadd.f32 %v2301, %v2387
      %v2404 = vadd.f32 %v2306, %v2387
      %v2405 = vadd.f32 %v2311, %v2387
      %v2406 = vadd.f32 %v2316, %v2387
      %v2407 = vadd.f32 %v2321, %v2387
      %v2408 = vadd.f32 %v2326, %v2387
      %v2409 = vadd.f32 %v2331, %v2387
      %v2410 = vadd.f32 %v2336, %v2387
      %v2411 = vadd.f32 %v2341, %v2387
      %v2412 = vadd.f32 %v2346, %v2387
      %v2413 = vadd.f32 %v2351, %v2387
      %v2414 = vadd.f32 %v2356, %v2387
      %v2415 = vadd.f32 %v2361, %v2387
      %v2416 = vadd.f32 %v2366, %v2387
      %v2417 = vadd.f32 %v2371, %v2387
      %v2418 = vadd.f32 %v2376, %v2387
      %v2419 = vadd.f32 %v2381, %v2387
      %v2420 = vxor.u32 %v2388, 2147483648
      %v2421 = vxor.u32 %v2389, 2147483648
      %v2422 = vxor.u32 %v2390, 2147483648
      %v2423 = vxor.u32 %v2391, 2147483648
      %v2424 = vxor.u32 %v2392, 2147483648
      %v2425 = vxor.u32 %v2393, 2147483648
      %v2426 = vxor.u32 %v2394, 2147483648
      %v2427 = vxor.u32 %v2395, 2147483648
      %v2428 = vxor.u32 %v2396, 2147483648
      %v2429 = vxor.u32 %v2397, 2147483648
      %v2430 = vxor.u32 %v2398, 2147483648
      %v2431 = vxor.u32 %v2399, 2147483648
      %v2432 = vxor.u32 %v2400, 2147483648
      %v2433 = vxor.u32 %v2401, 2147483648
      %v2434 = vxor.u32 %v2402, 2147483648
      %v2435 = vxor.u32 %v2403, 2147483648
      %v2436 = vxor.u32 %v2404, 2147483648
      %v2437 = vxor.u32 %v2405, 2147483648
      %v2438 = vxor.u32 %v2406, 2147483648
      %v2439 = vxor.u32 %v2407, 2147483648
      %v2440 = vxor.u32 %v2408, 2147483648
      %v2441 = vxor.u32 %v2409, 2147483648
      %v2442 = vxor.u32 %v2410, 2147483648
      %v2443 = vxor.u32 %v2411, 2147483648
      %v2444 = vxor.u32 %v2412, 2147483648
      %v2445 = vxor.u32 %v2413, 2147483648
      %v2446 = vxor.u32 %v2414, 2147483648
      %v2447 = vxor.u32 %v2415, 2147483648
      %v2448 = vxor.u32 %v2416, 2147483648
      %v2449 = vxor.u32 %v2417, 2147483648
      %v2450 = vxor.u32 %v2418, 2147483648
      %v2451 = vxor.u32 %v2419, 2147483648
      %v2452 = vmul.f32 %v2420, 1.442695
      %v2453 = vpow.pop %v2452
      %v2454 = vmul.f32 %v2421, 1.442695
      %v2455 = vpow.pop %v2454
      %v2456 = vmul.f32 %v2422, 1.442695
      %v2457 = vpow.pop %v2456
      %v2458 = vmul.f32 %v2423, 1.442695
      %v2459 = vpow.pop %v2458
      %v2460 = vmul.f32 %v2424, 1.442695
      %v2461 = vpow.pop %v2460
      %v2462 = vmul.f32 %v2425, 1.442695
      %v2463 = vpow.pop %v2462
      %v2464 = vmul.f32 %v2426, 1.442695
      %v2465 = vpow.pop %v2464
      %v2466 = vmul.f32 %v2427, 1.442695
      %v2467 = vpow.pop %v2466
      %v2468 = vmul.f32 %v2428, 1.442695
      %v2469 = vpow.pop %v2468
      %v2470 = vmul.f32 %v2429, 1.442695
      %v2471 = vpow.pop %v2470
      %v2472 = vmul.f32 %v2430, 1.442695
      %v2473 = vpow.pop %v2472
      %v2474 = vmul.f32 %v2431, 1.442695
      %v2475 = vpow.pop %v2474
      %v2476 = vmul.f32 %v2432, 1.442695
      %v2477 = vpow.pop %v2476
      %v2478 = vmul.f32 %v2433, 1.442695
      %v2479 = vpow.pop %v2478
      %v2480 = vmul.f32 %v2434, 1.442695
      %v2481 = vpow.pop %v2480
      %v2482 = vmul.f32 %v2435, 1.442695
      %v2483 = vpow.pop %v2482
      %v2484 = vmul.f32 %v2436, 1.442695
      %v2485 = vpow.pop %v2484
      %v2486 = vmul.f32 %v2437, 1.442695
      %v2487 = vpow.pop %v2486
      %v2488 = vmul.f32 %v2438, 1.442695
      %v2489 = vpow.pop %v2488
      %v2490 = vmul.f32 %v2439, 1.442695
      %v2491 = vpow.pop %v2490
      %v2492 = vmul.f32 %v2440, 1.442695
      %v2493 = vpow.pop %v2492
      %v2494 = vmul.f32 %v2441, 1.442695
      %v2495 = vpow.pop %v2494
      %v2496 = vmul.f32 %v2442, 1.442695
      %v2497 = vpow.pop %v2496
      %v2498 = vmul.f32 %v2443, 1.442695
      %v2499 = vpow.pop %v2498
      %v2500 = vmul.f32 %v2444, 1.442695
      %v2501 = vpow.pop %v2500
      %v2502 = vmul.f32 %v2445, 1.442695
      %v2503 = vpow.pop %v2502
      %v2504 = vmul.f32 %v2446, 1.442695
      %v2505 = vpow.pop %v2504
      %v2506 = vmul.f32 %v2447, 1.442695
      %v2507 = vpow.pop %v2506
      %v2508 = vmul.f32 %v2448, 1.442695
      %v2509 = vpow.pop %v2508
      %v2510 = vmul.f32 %v2449, 1.442695
      %v2511 = vpow.pop %v2510
      %v2512 = vmul.f32 %v2450, 1.442695
      %v2513 = vpow.pop %v2512
      %v2514 = vmul.f32 %v2451, 1.442695
      %v2515 = vpow.pop %v2514
      %v2516 = vadd.f32 %v2453, 1.0
      %v2517 = vadd.f32 %v2455, 1.0
      %v2518 = vadd.f32 %v2457, 1.0
      %v2519 = vadd.f32 %v2459, 1.0
      %v2520 = vadd.f32 %v2461, 1.0
      %v2521 = vadd.f32 %v2463, 1.0
      %v2522 = vadd.f32 %v2465, 1.0
      %v2523 = vadd.f32 %v2467, 1.0
      %v2524 = vadd.f32 %v2469, 1.0
      %v2525 = vadd.f32 %v2471, 1.0
      %v2526 = vadd.f32 %v2473, 1.0
      %v2527 = vadd.f32 %v2475, 1.0
      %v2528 = vadd.f32 %v2477, 1.0
      %v2529 = vadd.f32 %v2479, 1.0
      %v2530 = vadd.f32 %v2481, 1.0
      %v2531 = vadd.f32 %v2483, 1.0
      %v2532 = vadd.f32 %v2485, 1.0
      %v2533 = vadd.f32 %v2487, 1.0
      %v2534 = vadd.f32 %v2489, 1.0
      %v2535 = vadd.f32 %v2491, 1.0
      %v2536 = vadd.f32 %v2493, 1.0
      %v2537 = vadd.f32 %v2495, 1.0
      %v2538 = vadd.f32 %v2497, 1.0
      %v2539 = vadd.f32 %v2499, 1.0
      %v2540 = vadd.f32 %v2501, 1.0
      %v2541 = vadd.f32 %v2503, 1.0
      %v2542 = vadd.f32 %v2505, 1.0
      %v2543 = vadd.f32 %v2507, 1.0
      %v2544 = vadd.f32 %v2509, 1.0
      %v2545 = vadd.f32 %v2511, 1.0
      %v2546 = vadd.f32 %v2513, 1.0
      %v2547 = vadd.f32 %v2515, 1.0
      %v2548 = vrcp.pop %v2516
      %v2549 = vmul.f32 1.0, %v2548
      %v2550 = vrcp.pop %v2517
      %v2551 = vmul.f32 1.0, %v2550
      %v2552 = vrcp.pop %v2518
      %v2553 = vmul.f32 1.0, %v2552
      %v2554 = vrcp.pop %v2519
      %v2555 = vmul.f32 1.0, %v2554
      %v2556 = vrcp.pop %v2520
      %v2557 = vmul.f32 1.0, %v2556
      %v2558 = vrcp.pop %v2521
      %v2559 = vmul.f32 1.0, %v2558
      %v2560 = vrcp.pop %v2522
      %v2561 = vmul.f32 1.0, %v2560
      %v2562 = vrcp.pop %v2523
      %v2563 = vmul.f32 1.0, %v2562
      %v2564 = vrcp.pop %v2524
      %v2565 = vmul.f32 1.0, %v2564
      %v2566 = vrcp.pop %v2525
      %v2567 = vmul.f32 1.0, %v2566
      %v2568 = vrcp.pop %v2526
      %v2569 = vmul.f32 1.0, %v2568
      %v2570 = vrcp.pop %v2527
      %v2571 = vmul.f32 1.0, %v2570
      %v2572 = vrcp.pop %v2528
      %v2573 = vmul.f32 1.0, %v2572
      %v2574 = vrcp.pop %v2529
      %v2575 = vmul.f32 1.0, %v2574
      %v2576 = vrcp.pop %v2530
      %v2577 = vmul.f32 1.0, %v2576
      %v2578 = vrcp.pop %v2531
      %v2579 = vmul.f32 1.0, %v2578
      %v2580 = vrcp.pop %v2532
      %v2581 = vmul.f32 1.0, %v2580
      %v2582 = vrcp.pop %v2533
      %v2583 = vmul.f32 1.0, %v2582
      %v2584 = vrcp.pop %v2534
      %v2585 = vmul.f32 1.0, %v2584
      %v2586 = vrcp.pop %v2535
      %v2587 = vmul.f32 1.0, %v2586
      %v2588 = vrcp.pop %v2536
      %v2589 = vmul.f32 1.0, %v2588
      %v2590 = vrcp.pop %v2537
      %v2591 = vmul.f32 1.0, %v2590
      %v2592 = vrcp.pop %v2538
      %v2593 = vmul.f32 1.0, %v2592
      %v2594 = vrcp.pop %v2539
      %v2595 = vmul.f32 1.0, %v2594
      %v2596 = vrcp.pop %v2540
      %v2597 = vmul.f32 1.0, %v2596
      %v2598 = vrcp.pop %v2541
      %v2599 = vmul.f32 1.0, %v2598
      %v2600 = vrcp.pop %v2542
      %v2601 = vmul.f32 1.0, %v2600
      %v2602 = vrcp.pop %v2543
      %v2603 = vmul.f32 1.0, %v2602
      %v2604 = vrcp.pop %v2544
      %v2605 = vmul.f32 1.0, %v2604
      %v2606 = vrcp.pop %v2545
      %v2607 = vmul.f32 1.0, %v2606
      %v2608 = vrcp.pop %v2546
      %v2609 = vmul.f32 1.0, %v2608
      %v2610 = vrcp.pop %v2547
      %v2611 = vmul.f32 1.0, %v2610
      %v2612 = vmul.f32 %v2388, %v2549
      %v2613 = vmul.f32 %v2389, %v2551
      %v2614 = vmul.f32 %v2390, %v2553
      %v2615 = vmul.f32 %v2391, %v2555
      %v2616 = vmul.f32 %v2392, %v2557
      %v2617 = vmul.f32 %v2393, %v2559
      %v2618 = vmul.f32 %v2394, %v2561
      %v2619 = vmul.f32 %v2395, %v2563
      %v2620 = vmul.f32 %v2396, %v2565
      %v2621 = vmul.f32 %v2397, %v2567
      %v2622 = vmul.f32 %v2398, %v2569
      %v2623 = vmul.f32 %v2399, %v2571
      %v2624 = vmul.f32 %v2400, %v2573
      %v2625 = vmul.f32 %v2401, %v2575
      %v2626 = vmul.f32 %v2402, %v2577
      %v2627 = vmul.f32 %v2403, %v2579
      %v2628 = vmul.f32 %v2404, %v2581
      %v2629 = vmul.f32 %v2405, %v2583
      %v2630 = vmul.f32 %v2406, %v2585
      %v2631 = vmul.f32 %v2407, %v2587
      %v2632 = vmul.f32 %v2408, %v2589
      %v2633 = vmul.f32 %v2409, %v2591
      %v2634 = vmul.f32 %v2410, %v2593
      %v2635 = vmul.f32 %v2411, %v2595
      %v2636 = vmul.f32 %v2412, %v2597
      %v2637 = vmul.f32 %v2413, %v2599
      %v2638 = vmul.f32 %v2414, %v2601
      %v2639 = vmul.f32 %v2415, %v2603
      %v2640 = vmul.f32 %v2416, %v2605
      %v2641 = vmul.f32 %v2417, %v2607
      %v2642 = vmul.f32 %v2418, %v2609
      %v2643 = vmul.f32 %v2419, %v2611
      %2644 = vst.msk [vmem:[#allocation3] sm:$0xff] %vm380, 0.0
      %2645 = vst.msk [vmem:[#allocation3 + $0x8] sm:$0xff] %vm380, 0.0
      %vm2646 = vcmask 254976
      %2647 = vst.msk [vmem:[#allocation3 + $0x10] sm:$0x3] %vm2646, 0.0
      %2648 = vst.msk [vmem:[#allocation3 + $0x18] sm:$0xff] %vm380, 0.0
      %2649 = vst.msk [vmem:[#allocation3 + $0x20] sm:$0xff] %vm380, 0.0
      %2650 = vst.msk [vmem:[#allocation3 + $0x28] sm:$0x3] %vm2646, 0.0
      %2651 = vst.msk [vmem:[#allocation3 + $0x30] sm:$0xff] %vm380, 0.0
      %2652 = vst.msk [vmem:[#allocation3 + $0x38] sm:$0xff] %vm380, 0.0
      %2653 = vst.msk [vmem:[#allocation3 + $0x40] sm:$0x3] %vm2646, 0.0
      %2654 = vst.msk [vmem:[#allocation3 + $0x48] sm:$0xff] %vm380, 0.0
      %2655 = vst.msk [vmem:[#allocation3 + $0x50] sm:$0xff] %vm380, 0.0
      %2656 = vst.msk [vmem:[#allocation3 + $0x58] sm:$0x3] %vm2646, 0.0
      %2657 = vst.msk [vmem:[#allocation3 + $0x60] sm:$0xff] %vm380, 0.0
      %2658 = vst.msk [vmem:[#allocation3 + $0x68] sm:$0xff] %vm380, 0.0
      %2659 = vst.msk [vmem:[#allocation3 + $0x70] sm:$0x3] %vm2646, 0.0
      %2660 = vst.msk [vmem:[#allocation3 + $0x78] sm:$0xff] %vm380, 0.0
      %2661 = vst.msk [vmem:[#allocation3 + $0x80] sm:$0xff] %vm380, 0.0
      %2662 = vst.msk [vmem:[#allocation3 + $0x88] sm:$0x3] %vm2646, 0.0
      %2663 = vst.msk [vmem:[#allocation3 + $0x90] sm:$0xff] %vm380, 0.0
      %2664 = vst.msk [vmem:[#allocation3 + $0x98] sm:$0xff] %vm380, 0.0
      %2665 = vst.msk [vmem:[#allocation3 + $0xa0] sm:$0x3] %vm2646, 0.0
      %2666 = vst.msk [vmem:[#allocation3 + $0xa8] sm:$0xff] %vm380, 0.0
      %2667 = vst.msk [vmem:[#allocation3 + $0xb0] sm:$0xff] %vm380, 0.0
      %2668 = vst.msk [vmem:[#allocation3 + $0xb8] sm:$0x3] %vm2646, 0.0
      %2669 = vst.msk [vmem:[#allocation3 + $0xc0] sm:$0xff] %vm380, 0.0
      %2670 = vst.msk [vmem:[#allocation3 + $0xc8] sm:$0xff] %vm380, 0.0
      %2671 = vst.msk [vmem:[#allocation3 + $0xd0] sm:$0x3] %vm2646, 0.0
      %2672 = vst.msk [vmem:[#allocation3 + $0xd8] sm:$0xff] %vm380, 0.0
      %2673 = vst.msk [vmem:[#allocation3 + $0xe0] sm:$0xff] %vm380, 0.0
      %2674 = vst.msk [vmem:[#allocation3 + $0xe8] sm:$0x3] %vm2646, 0.0
      %2675 = vst.msk [vmem:[#allocation3 + $0xf0] sm:$0xff] %vm380, 0.0
      %2676 = vst.msk [vmem:[#allocation3 + $0xf8] sm:$0xff] %vm380, 0.0
      %2677 = vst.msk [vmem:[#allocation3 + $0x100] sm:$0x3] %vm2646, 0.0
      %2678 = vst.msk [vmem:[#allocation3 + $0x108] sm:$0xff] %vm380, 0.0
      %2679 = vst.msk [vmem:[#allocation3 + $0x110] sm:$0xff] %vm380, 0.0
      %2680 = vst.msk [vmem:[#allocation3 + $0x118] sm:$0x3] %vm2646, 0.0
      %2681 = vst.msk [vmem:[#allocation3 + $0x120] sm:$0xff] %vm380, 0.0
      %2682 = vst.msk [vmem:[#allocation3 + $0x128] sm:$0xff] %vm380, 0.0
      %2683 = vst.msk [vmem:[#allocation3 + $0x130] sm:$0x3] %vm2646, 0.0
      %2684 = vst.msk [vmem:[#allocation3 + $0x138] sm:$0xff] %vm380, 0.0
      %2685 = vst.msk [vmem:[#allocation3 + $0x140] sm:$0xff] %vm380, 0.0
      %2686 = vst.msk [vmem:[#allocation3 + $0x148] sm:$0x3] %vm2646, 0.0
      %2687 = vst.msk [vmem:[#allocation3 + $0x150] sm:$0xff] %vm380, 0.0
      %2688 = vst.msk [vmem:[#allocation3 + $0x158] sm:$0xff] %vm380, 0.0
      %2689 = vst.msk [vmem:[#allocation3 + $0x160] sm:$0x3] %vm2646, 0.0
      %2690 = vst.msk [vmem:[#allocation3 + $0x168] sm:$0xff] %vm380, 0.0
      %2691 = vst.msk [vmem:[#allocation3 + $0x170] sm:$0xff] %vm380, 0.0
      %2692 = vst.msk [vmem:[#allocation3 + $0x178] sm:$0x3] %vm2646, 0.0
      %2693 = vst.msk [vmem:[#allocation3 + $0x180] sm:$0xff] %vm380, 0.0
      %2694 = vst.msk [vmem:[#allocation3 + $0x188] sm:$0xff] %vm380, 0.0
      %2695 = vst.msk [vmem:[#allocation3 + $0x190] sm:$0x3] %vm2646, 0.0
      %2696 = vst.msk [vmem:[#allocation3 + $0x198] sm:$0xff] %vm380, 0.0
      %2697 = vst.msk [vmem:[#allocation3 + $0x1a0] sm:$0xff] %vm380, 0.0
      %2698 = vst.msk [vmem:[#allocation3 + $0x1a8] sm:$0x3] %vm2646, 0.0
      %s2699 = scalar_lea.vmem [#allocation3], 24
      %2700 = vst.msk [vmem:[%s2699 + $0x1] sm:$0xff] %vm380, %v2612
      %2701 = vst.msk [vmem:[%s2699 + $0x9] sm:$0xff] %vm380, %v2613
      %2702 = vst.msk [vmem:[%s2699 + $0x19] sm:$0xff] %vm380, %v2614
      %2703 = vst.msk [vmem:[%s2699 + $0x21] sm:$0xff] %vm380, %v2615
      %2704 = vst.msk [vmem:[%s2699 + $0x31] sm:$0xff] %vm380, %v2616
      %2705 = vst.msk [vmem:[%s2699 + $0x39] sm:$0xff] %vm380, %v2617
      %2706 = vst.msk [vmem:[%s2699 + $0x49] sm:$0xff] %vm380, %v2618
      %2707 = vst.msk [vmem:[%s2699 + $0x51] sm:$0xff] %vm380, %v2619
      %2708 = vst.msk [vmem:[%s2699 + $0x61] sm:$0xff] %vm380, %v2620
      %2709 = vst.msk [vmem:[%s2699 + $0x69] sm:$0xff] %vm380, %v2621
      %2710 = vst.msk [vmem:[%s2699 + $0x79] sm:$0xff] %vm380, %v2622
      %2711 = vst.msk [vmem:[%s2699 + $0x81] sm:$0xff] %vm380, %v2623
      %2712 = vst.msk [vmem:[%s2699 + $0x91] sm:$0xff] %vm380, %v2624
      %2713 = vst.msk [vmem:[%s2699 + $0x99] sm:$0xff] %vm380, %v2625
      %2714 = vst.msk [vmem:[%s2699 + $0xa9] sm:$0xff] %vm380, %v2626
      %2715 = vst.msk [vmem:[%s2699 + $0xb1] sm:$0xff] %vm380, %v2627
      %2716 = vst.msk [vmem:[%s2699 + $0xc1] sm:$0xff] %vm380, %v2628
      %2717 = vst.msk [vmem:[%s2699 + $0xc9] sm:$0xff] %vm380, %v2629
      %2718 = vst.msk [vmem:[%s2699 + $0xd9] sm:$0xff] %vm380, %v2630
      %2719 = vst.msk [vmem:[%s2699 + $0xe1] sm:$0xff] %vm380, %v2631
      %2720 = vst.msk [vmem:[%s2699 + $0xf1] sm:$0xff] %vm380, %v2632
      %2721 = vst.msk [vmem:[%s2699 + $0xf9] sm:$0xff] %vm380, %v2633
      %2722 = vst.msk [vmem:[%s2699 + $0x109] sm:$0xff] %vm380, %v2634
      %2723 = vst.msk [vmem:[%s2699 + $0x111] sm:$0xff] %vm380, %v2635
      %2724 = vst.msk [vmem:[%s2699 + $0x121] sm:$0xff] %vm380, %v2636
      %2725 = vst.msk [vmem:[%s2699 + $0x129] sm:$0xff] %vm380, %v2637
      %2726 = vst.msk [vmem:[%s2699 + $0x139] sm:$0xff] %vm380, %v2638
      %2727 = vst.msk [vmem:[%s2699 + $0x141] sm:$0xff] %vm380, %v2639
      %2728 = vst.msk [vmem:[%s2699 + $0x151] sm:$0xff] %vm380, %v2640
      %2729 = vst.msk [vmem:[%s2699 + $0x159] sm:$0xff] %vm380, %v2641
      %2730 = vst.msk [vmem:[%s2699 + $0x169] sm:$0xff] %vm380, %v2642
      %2731 = vst.msk [vmem:[%s2699 + $0x171] sm:$0xff] %vm380, %v2643
      %v2732 = vld [vmem:[#allocation3] sm:$0xff]
      %v2733 = vld [vmem:[#allocation3 + $0x8] sm:$0xff]
      %v2734 = vld [vmem:[#allocation3 + $0x10] sm:$0x3]
      %v2735 = vld [vmem:[#allocation3 + $0x18] sm:$0xff]
      %v2736 = vld [vmem:[#allocation3 + $0x20] sm:$0xff]
      %v2737 = vld [vmem:[#allocation3 + $0x28] sm:$0x3]
      %v2738 = vld [vmem:[#allocation3 + $0x30] sm:$0xff]
      %v2739 = vld [vmem:[#allocation3 + $0x38] sm:$0xff]
      %v2740 = vld [vmem:[#allocation3 + $0x40] sm:$0x3]
      %v2741 = vld [vmem:[#allocation3 + $0x48] sm:$0xff]
      %v2742 = vld [vmem:[#allocation3 + $0x50] sm:$0xff]
      %v2743 = vld [vmem:[#allocation3 + $0x58] sm:$0x3]
      %v2744 = vld [vmem:[#allocation3 + $0x60] sm:$0xff]
      %v2745 = vld [vmem:[#allocation3 + $0x68] sm:$0xff]
      %v2746 = vld [vmem:[#allocation3 + $0x70] sm:$0x3]
      %v2747 = vld [vmem:[#allocation3 + $0x78] sm:$0xff]
      %v2748 = vld [vmem:[#allocation3 + $0x80] sm:$0xff]
      %v2749 = vld [vmem:[#allocation3 + $0x88] sm:$0x3]
      %v2750 = vld [vmem:[#allocation3 + $0x90] sm:$0xff]
      %v2751 = vld [vmem:[#allocation3 + $0x98] sm:$0xff]
      %v2752 = vld [vmem:[#allocation3 + $0xa0] sm:$0x3]
      %v2753 = vld [vmem:[#allocation3 + $0xa8] sm:$0xff]
      %v2754 = vld [vmem:[#allocation3 + $0xb0] sm:$0xff]
      %v2755 = vld [vmem:[#allocation3 + $0xb8] sm:$0x3]
      %v2756 = vld [vmem:[#allocation3 + $0xc0] sm:$0xff]
      %v2757 = vld [vmem:[#allocation3 + $0xc8] sm:$0xff]
      %v2758 = vld [vmem:[#allocation3 + $0xd0] sm:$0x3]
      %v2759 = vld [vmem:[#allocation3 + $0xd8] sm:$0xff]
      %v2760 = vld [vmem:[#allocation3 + $0xe0] sm:$0xff]
      %v2761 = vld [vmem:[#allocation3 + $0xe8] sm:$0x3]
      %v2762 = vld [vmem:[#allocation3 + $0xf0] sm:$0xff]
      %v2763 = vld [vmem:[#allocation3 + $0xf8] sm:$0xff]
      %v2764 = vld [vmem:[#allocation3 + $0x100] sm:$0x3]
      %v2765 = vld [vmem:[#allocation3 + $0x108] sm:$0xff]
      %v2766 = vld [vmem:[#allocation3 + $0x110] sm:$0xff]
      %v2767 = vld [vmem:[#allocation3 + $0x118] sm:$0x3]
      %v2768 = vld [vmem:[#allocation3 + $0x120] sm:$0xff]
      %v2769 = vld [vmem:[#allocation3 + $0x128] sm:$0xff]
      %v2770 = vld [vmem:[#allocation3 + $0x130] sm:$0x3]
      %v2771 = vld [vmem:[#allocation3 + $0x138] sm:$0xff]
      %v2772 = vld [vmem:[#allocation3 + $0x140] sm:$0xff]
      %v2773 = vld [vmem:[#allocation3 + $0x148] sm:$0x3]
      %v2774 = vld [vmem:[#allocation3 + $0x150] sm:$0xff]
      %v2775 = vld [vmem:[#allocation3 + $0x158] sm:$0xff]
      %v2776 = vld [vmem:[#allocation3 + $0x160] sm:$0x3]
      %v2777 = vld [vmem:[#allocation3 + $0x168] sm:$0xff]
      %v2778 = vld [vmem:[#allocation3 + $0x170] sm:$0xff]
      %v2779 = vld [vmem:[#allocation3 + $0x178] sm:$0x3]
      %v2780 = vld [vmem:[#allocation3 + $0x180] sm:$0xff]
      %v2781 = vld [vmem:[#allocation3 + $0x188] sm:$0xff]
      %v2782 = vld [vmem:[#allocation3 + $0x190] sm:$0x3]
      %v2783 = vld [vmem:[#allocation3 + $0x198] sm:$0xff]
      %v2784 = vld [vmem:[#allocation3 + $0x1a0] sm:$0xff]
      %v2785 = vld [vmem:[#allocation3 + $0x1a8] sm:$0x3]
      %2786 = vst.msk [vmem:[#allocation5] sm:$0xff] %vm380, %v2732
      %2787 = vst.msk [vmem:[#allocation5 + $0x18] sm:$0xff] %vm380, %v2733
      %2788 = vst.msk [vmem:[#allocation5 + $0x30] sm:$0xff] %vm380, %v2735
      %2789 = vst.msk [vmem:[#allocation5 + $0x48] sm:$0xff] %vm380, %v2736
      %2790 = vst.msk [vmem:[#allocation5 + $0x60] sm:$0xff] %vm380, %v2738
      %2791 = vst.msk [vmem:[#allocation5 + $0x78] sm:$0xff] %vm380, %v2739
      %2792 = vst.msk [vmem:[#allocation5 + $0x90] sm:$0xff] %vm380, %v2741
      %2793 = vst.msk [vmem:[#allocation5 + $0xa8] sm:$0xff] %vm380, %v2742
      %2794 = vst.msk [vmem:[#allocation5 + $0xc0] sm:$0xff] %vm380, %v2744
      %2795 = vst.msk [vmem:[#allocation5 + $0xd8] sm:$0xff] %vm380, %v2745
      %2796 = vst.msk [vmem:[#allocation5 + $0xf0] sm:$0xff] %vm380, %v2747
      %2797 = vst.msk [vmem:[#allocation5 + $0x108] sm:$0xff] %vm380, %v2748
      %2798 = vst.msk [vmem:[#allocation5 + $0x120] sm:$0xff] %vm380, %v2750
      %2799 = vst.msk [vmem:[#allocation5 + $0x138] sm:$0xff] %vm380, %v2751
      %2800 = vst.msk [vmem:[#allocation5 + $0x150] sm:$0xff] %vm380, %v2753
      %2801 = vst.msk [vmem:[#allocation5 + $0x168] sm:$0xff] %vm380, %v2754
      %2802 = vst.msk [vmem:[#allocation5 + $0x180] sm:$0xff] %vm380, %v2756
      %2803 = vst.msk [vmem:[#allocation5 + $0x198] sm:$0xff] %vm380, %v2757
      %2804 = vst.msk [vmem:[#allocation5 + $0x1b0] sm:$0xff] %vm380, %v2759
      %2805 = vst.msk [vmem:[#allocation5 + $0x1c8] sm:$0xff] %vm380, %v2760
      %2806 = vst.msk [vmem:[#allocation5 + $0x1e0] sm:$0xff] %vm380, %v2762
      %2807 = vst.msk [vmem:[#allocation5 + $0x1f8] sm:$0xff] %vm380, %v2763
      %2808 = vst.msk [vmem:[#allocation5 + $0x210] sm:$0xff] %vm380, %v2765
      %2809 = vst.msk [vmem:[#allocation5 + $0x228] sm:$0xff] %vm380, %v2766
      %2810 = vst.msk [vmem:[#allocation5 + $0x240] sm:$0xff] %vm380, %v2768
      %2811 = vst.msk [vmem:[#allocation5 + $0x258] sm:$0xff] %vm380, %v2769
      %2812 = vst.msk [vmem:[#allocation5 + $0x270] sm:$0xff] %vm380, %v2771
      %2813 = vst.msk [vmem:[#allocation5 + $0x288] sm:$0xff] %vm380, %v2772
      %2814 = vst.msk [vmem:[#allocation5 + $0x2a0] sm:$0xff] %vm380, %v2774
      %2815 = vst.msk [vmem:[#allocation5 + $0x2b8] sm:$0xff] %vm380, %v2775
      %2816 = vst.msk [vmem:[#allocation5 + $0x2d0] sm:$0xff] %vm380, %v2777
      %2817 = vst.msk [vmem:[#allocation5 + $0x2e8] sm:$0xff] %vm380, %v2778
      %v2866 = vrot.slane %v2732, 1
      %v2867 = vrot.slane %v2733, 1
      %v2868 = vsel %vm794, %v2866, %v2867
      %v2869 = vrot.slane %v2734, 1
      %v2870 = vsel %vm794, %v2867, %v2869
      %v2871 = vrot.slane %v2735, 1
      %v2872 = vrot.slane %v2736, 1
      %v2873 = vsel %vm794, %v2871, %v2872
      %v2874 = vrot.slane %v2737, 1
      %v2875 = vsel %vm794, %v2872, %v2874
      %v2876 = vrot.slane %v2738, 1
      %v2877 = vrot.slane %v2739, 1
      %v2878 = vsel %vm794, %v2876, %v2877
      %v2879 = vrot.slane %v2740, 1
      %v2880 = vsel %vm794, %v2877, %v2879
      %v2881 = vrot.slane %v2741, 1
      %v2882 = vrot.slane %v2742, 1
      %v2883 = vsel %vm794, %v2881, %v2882
      %v2884 = vrot.slane %v2743, 1
      %v2885 = vsel %vm794, %v2882, %v2884
      %v2886 = vrot.slane %v2744, 1
      %v2887 = vrot.slane %v2745, 1
      %v2888 = vsel %vm794, %v2886, %v2887
      %v2889 = vrot.slane %v2746, 1
      %v2890 = vsel %vm794, %v2887, %v2889
      %v2891 = vrot.slane %v2747, 1
      %v2892 = vrot.slane %v2748, 1
      %v2893 = vsel %vm794, %v2891, %v2892
      %v2894 = vrot.slane %v2749, 1
      %v2895 = vsel %vm794, %v2892, %v2894
      %v2896 = vrot.slane %v2750, 1
      %v2897 = vrot.slane %v2751, 1
      %v2898 = vsel %vm794, %v2896, %v2897
      %v2899 = vrot.slane %v2752, 1
      %v2900 = vsel %vm794, %v2897, %v2899
      %v2901 = vrot.slane %v2753, 1
      %v2902 = vrot.slane %v2754, 1
      %v2903 = vsel %vm794, %v2901, %v2902
      %v2904 = vrot.slane %v2755, 1
      %v2905 = vsel %vm794, %v2902, %v2904
      %v2906 = vrot.slane %v2756, 1
      %v2907 = vrot.slane %v2757, 1
      %v2908 = vsel %vm794, %v2906, %v2907
      %v2909 = vrot.slane %v2758, 1
      %v2910 = vsel %vm794, %v2907, %v2909
      %v2911 = vrot.slane %v2759, 1
      %v2912 = vrot.slane %v2760, 1
      %v2913 = vsel %vm794, %v2911, %v2912
      %v2914 = vrot.slane %v2761, 1
      %v2915 = vsel %vm794, %v2912, %v2914
      %v2916 = vrot.slane %v2762, 1
      %v2917 = vrot.slane %v2763, 1
      %v2918 = vsel %vm794, %v2916, %v2917
      %v2919 = vrot.slane %v2764, 1
      %v2920 = vsel %vm794, %v2917, %v2919
      %v2921 = vrot.slane %v2765, 1
      %v2922 = vrot.slane %v2766, 1
      %v2923 = vsel %vm794, %v2921, %v2922
      %v2924 = vrot.slane %v2767, 1
      %v2925 = vsel %vm794, %v2922, %v2924
      %v2926 = vrot.slane %v2768, 1
      %v2927 = vrot.slane %v2769, 1
      %v2928 = vsel %vm794, %v2926, %v2927
      %v2929 = vrot.slane %v2770, 1
      %v2930 = vsel %vm794, %v2927, %v2929
      %v2931 = vrot.slane %v2771, 1
      %v2932 = vrot.slane %v2772, 1
      %v2933 = vsel %vm794, %v2931, %v2932
      %v2934 = vrot.slane %v2773, 1
      %v2935 = vsel %vm794, %v2932, %v2934
      %v2936 = vrot.slane %v2774, 1
      %v2937 = vrot.slane %v2775, 1
      %v2938 = vsel %vm794, %v2936, %v2937
      %v2939 = vrot.slane %v2776, 1
      %v2940 = vsel %vm794, %v2937, %v2939
      %v2941 = vrot.slane %v2777, 1
      %v2942 = vrot.slane %v2778, 1
      %v2943 = vsel %vm794, %v2941, %v2942
      %v2944 = vrot.slane %v2779, 1
      %v2945 = vsel %vm794, %v2942, %v2944
      %2946 = vrot.lane.b32.xlu0 %v2868, 32
      %v2947 = vpop.permute.xlu0 %2946
      %2948 = vrot.lane.b32.xlu0 %v2870, 32
      %v2949 = vpop.permute.xlu0 %2948
      %2950 = vrot.lane.b32.xlu0 %v2873, 32
      %v2951 = vpop.permute.xlu0 %2950
      %2952 = vrot.lane.b32.xlu0 %v2875, 32
      %v2953 = vpop.permute.xlu0 %2952
      %2954 = vrot.lane.b32.xlu0 %v2878, 32
      %v2955 = vpop.permute.xlu0 %2954
      %2956 = vrot.lane.b32.xlu0 %v2880, 32
      %v2957 = vpop.permute.xlu0 %2956
      %2958 = vrot.lane.b32.xlu0 %v2883, 32
      %v2959 = vpop.permute.xlu0 %2958
      %2960 = vrot.lane.b32.xlu0 %v2885, 32
      %v2961 = vpop.permute.xlu0 %2960
      %2962 = vrot.lane.b32.xlu0 %v2888, 32
      %v2963 = vpop.permute.xlu0 %2962
      %2964 = vrot.lane.b32.xlu0 %v2890, 32
      %v2965 = vpop.permute.xlu0 %2964
      %2966 = vrot.lane.b32.xlu0 %v2893, 32
      %v2967 = vpop.permute.xlu0 %2966
      %2968 = vrot.lane.b32.xlu0 %v2895, 32
      %v2969 = vpop.permute.xlu0 %2968
      %2970 = vrot.lane.b32.xlu0 %v2898, 32
      %v2971 = vpop.permute.xlu0 %2970
      %2972 = vrot.lane.b32.xlu0 %v2900, 32
      %v2973 = vpop.permute.xlu0 %2972
      %2974 = vrot.lane.b32.xlu0 %v2903, 32
      %v2975 = vpop.permute.xlu0 %2974
      %2976 = vrot.lane.b32.xlu0 %v2905, 32
      %v2977 = vpop.permute.xlu0 %2976
      %2978 = vrot.lane.b32.xlu0 %v2908, 32
      %v2979 = vpop.permute.xlu0 %2978
      %2980 = vrot.lane.b32.xlu0 %v2910, 32
      %v2981 = vpop.permute.xlu0 %2980
      %2982 = vrot.lane.b32.xlu0 %v2913, 32
      %v2983 = vpop.permute.xlu0 %2982
      %2984 = vrot.lane.b32.xlu0 %v2915, 32
      %v2985 = vpop.permute.xlu0 %2984
      %2986 = vrot.lane.b32.xlu0 %v2918, 32
      %v2987 = vpop.permute.xlu0 %2986
      %2988 = vrot.lane.b32.xlu0 %v2920, 32
      %v2989 = vpop.permute.xlu0 %2988
      %2990 = vrot.lane.b32.xlu0 %v2923, 32
      %v2991 = vpop.permute.xlu0 %2990
      %2992 = vrot.lane.b32.xlu0 %v2925, 32
      %v2993 = vpop.permute.xlu0 %2992
      %2994 = vrot.lane.b32.xlu0 %v2928, 32
      %v2995 = vpop.permute.xlu0 %2994
      %2996 = vrot.lane.b32.xlu0 %v2930, 32
      %v2997 = vpop.permute.xlu0 %2996
      %2998 = vrot.lane.b32.xlu0 %v2933, 32
      %v2999 = vpop.permute.xlu0 %2998
      %3000 = vrot.lane.b32.xlu0 %v2935, 32
      %v3001 = vpop.permute.xlu0 %3000
      %3002 = vrot.lane.b32.xlu0 %v2938, 32
      %v3003 = vpop.permute.xlu0 %3002
      %3004 = vrot.lane.b32.xlu0 %v2940, 32
      %v3005 = vpop.permute.xlu0 %3004
      %3006 = vrot.lane.b32.xlu0 %v2943, 32
      %v3007 = vpop.permute.xlu0 %3006
      %3008 = vrot.lane.b32.xlu0 %v2945, 32
      %v3009 = vpop.permute.xlu0 %3008
      %vm3042 = vcmask 523520
      %3043 = vst.msk [vmem:[#allocation5] sm:$0xff] %vm3042, %v2947
      %3044 = vst.msk [vmem:[#allocation5 + $0x18] sm:$0xff] %vm3042, %v2949
      %3045 = vst.msk [vmem:[#allocation5 + $0x30] sm:$0xff] %vm3042, %v2951
      %3046 = vst.msk [vmem:[#allocation5 + $0x48] sm:$0xff] %vm3042, %v2953
      %3047 = vst.msk [vmem:[#allocation5 + $0x60] sm:$0xff] %vm3042, %v2955
      %3048 = vst.msk [vmem:[#allocation5 + $0x78] sm:$0xff] %vm3042, %v2957
      %3049 = vst.msk [vmem:[#allocation5 + $0x90] sm:$0xff] %vm3042, %v2959
      %3050 = vst.msk [vmem:[#allocation5 + $0xa8] sm:$0xff] %vm3042, %v2961
      %3051 = vst.msk [vmem:[#allocation5 + $0xc0] sm:$0xff] %vm3042, %v2963
      %3052 = vst.msk [vmem:[#allocation5 + $0xd8] sm:$0xff] %vm3042, %v2965
      %3053 = vst.msk [vmem:[#allocation5 + $0xf0] sm:$0xff] %vm3042, %v2967
      %3054 = vst.msk [vmem:[#allocation5 + $0x108] sm:$0xff] %vm3042, %v2969
      %3055 = vst.msk [vmem:[#allocation5 + $0x120] sm:$0xff] %vm3042, %v2971
      %3056 = vst.msk [vmem:[#allocation5 + $0x138] sm:$0xff] %vm3042, %v2973
      %3057 = vst.msk [vmem:[#allocation5 + $0x150] sm:$0xff] %vm3042, %v2975
      %3058 = vst.msk [vmem:[#allocation5 + $0x168] sm:$0xff] %vm3042, %v2977
      %3059 = vst.msk [vmem:[#allocation5 + $0x180] sm:$0xff] %vm3042, %v2979
      %3060 = vst.msk [vmem:[#allocation5 + $0x198] sm:$0xff] %vm3042, %v2981
      %3061 = vst.msk [vmem:[#allocation5 + $0x1b0] sm:$0xff] %vm3042, %v2983
      %3062 = vst.msk [vmem:[#allocation5 + $0x1c8] sm:$0xff] %vm3042, %v2985
      %3063 = vst.msk [vmem:[#allocation5 + $0x1e0] sm:$0xff] %vm3042, %v2987
      %3064 = vst.msk [vmem:[#allocation5 + $0x1f8] sm:$0xff] %vm3042, %v2989
      %3065 = vst.msk [vmem:[#allocation5 + $0x210] sm:$0xff] %vm3042, %v2991
      %3066 = vst.msk [vmem:[#allocation5 + $0x228] sm:$0xff] %vm3042, %v2993
      %3067 = vst.msk [vmem:[#allocation5 + $0x240] sm:$0xff] %vm3042, %v2995
      %3068 = vst.msk [vmem:[#allocation5 + $0x258] sm:$0xff] %vm3042, %v2997
      %3069 = vst.msk [vmem:[#allocation5 + $0x270] sm:$0xff] %vm3042, %v2999
      %3070 = vst.msk [vmem:[#allocation5 + $0x288] sm:$0xff] %vm3042, %v3001
      %3071 = vst.msk [vmem:[#allocation5 + $0x2a0] sm:$0xff] %vm3042, %v3003
      %3072 = vst.msk [vmem:[#allocation5 + $0x2b8] sm:$0xff] %vm3042, %v3005
      %3073 = vst.msk [vmem:[#allocation5 + $0x2d0] sm:$0xff] %vm3042, %v3007
      %3074 = vst.msk [vmem:[#allocation5 + $0x2e8] sm:$0xff] %vm3042, %v3009
      %v3075 = vrot.slane %v2732, 2
      %v3076 = vrot.slane %v2733, 2
      %v3077 = vsel %vm1004, %v3075, %v3076
      %v3078 = vrot.slane %v2734, 2
      %v3079 = vsel %vm1004, %v3076, %v3078
      %v3080 = vrot.slane %v2735, 2
      %v3081 = vrot.slane %v2736, 2
      %v3082 = vsel %vm1004, %v3080, %v3081
      %v3083 = vrot.slane %v2737, 2
      %v3084 = vsel %vm1004, %v3081, %v3083
      %v3085 = vrot.slane %v2738, 2
      %v3086 = vrot.slane %v2739, 2
      %v3087 = vsel %vm1004, %v3085, %v3086
      %v3088 = vrot.slane %v2740, 2
      %v3089 = vsel %vm1004, %v3086, %v3088
      %v3090 = vrot.slane %v2741, 2
      %v3091 = vrot.slane %v2742, 2
      %v3092 = vsel %vm1004, %v3090, %v3091
      %v3093 = vrot.slane %v2743, 2
      %v3094 = vsel %vm1004, %v3091, %v3093
      %v3095 = vrot.slane %v2744, 2
      %v3096 = vrot.slane %v2745, 2
      %v3097 = vsel %vm1004, %v3095, %v3096
      %v3098 = vrot.slane %v2746, 2
      %v3099 = vsel %vm1004, %v3096, %v3098
      %v3100 = vrot.slane %v2747, 2
      %v3101 = vrot.slane %v2748, 2
      %v3102 = vsel %vm1004, %v3100, %v3101
      %v3103 = vrot.slane %v2749, 2
      %v3104 = vsel %vm1004, %v3101, %v3103
      %v3105 = vrot.slane %v2750, 2
      %v3106 = vrot.slane %v2751, 2
      %v3107 = vsel %vm1004, %v3105, %v3106
      %v3108 = vrot.slane %v2752, 2
      %v3109 = vsel %vm1004, %v3106, %v3108
      %v3110 = vrot.slane %v2753, 2
      %v3111 = vrot.slane %v2754, 2
      %v3112 = vsel %vm1004, %v3110, %v3111
      %v3113 = vrot.slane %v2755, 2
      %v3114 = vsel %vm1004, %v3111, %v3113
      %v3115 = vrot.slane %v2756, 2
      %v3116 = vrot.slane %v2757, 2
      %v3117 = vsel %vm1004, %v3115, %v3116
      %v3118 = vrot.slane %v2758, 2
      %v3119 = vsel %vm1004, %v3116, %v3118
      %v3120 = vrot.slane %v2759, 2
      %v3121 = vrot.slane %v2760, 2
      %v3122 = vsel %vm1004, %v3120, %v3121
      %v3123 = vrot.slane %v2761, 2
      %v3124 = vsel %vm1004, %v3121, %v3123
      %v3125 = vrot.slane %v2762, 2
      %v3126 = vrot.slane %v2763, 2
      %v3127 = vsel %vm1004, %v3125, %v3126
      %v3128 = vrot.slane %v2764, 2
      %v3129 = vsel %vm1004, %v3126, %v3128
      %v3130 = vrot.slane %v2765, 2
      %v3131 = vrot.slane %v2766, 2
      %v3132 = vsel %vm1004, %v3130, %v3131
      %v3133 = vrot.slane %v2767, 2
      %v3134 = vsel %vm1004, %v3131, %v3133
      %v3135 = vrot.slane %v2768, 2
      %v3136 = vrot.slane %v2769, 2
      %v3137 = vsel %vm1004, %v3135, %v3136
      %v3138 = vrot.slane %v2770, 2
      %v3139 = vsel %vm1004, %v3136, %v3138
      %v3140 = vrot.slane %v2771, 2
      %v3141 = vrot.slane %v2772, 2
      %v3142 = vsel %vm1004, %v3140, %v3141
      %v3143 = vrot.slane %v2773, 2
      %v3144 = vsel %vm1004, %v3141, %v3143
      %v3145 = vrot.slane %v2774, 2
      %v3146 = vrot.slane %v2775, 2
      %v3147 = vsel %vm1004, %v3145, %v3146
      %v3148 = vrot.slane %v2776, 2
      %v3149 = vsel %vm1004, %v3146, %v3148
      %v3150 = vrot.slane %v2777, 2
      %v3151 = vrot.slane %v2778, 2
      %v3152 = vsel %vm1004, %v3150, %v3151
      %v3153 = vrot.slane %v2779, 2
      %v3154 = vsel %vm1004, %v3151, %v3153
      %3155 = vrot.lane.b32.xlu0 %v3077, 64
      %v3156 = vpop.permute.xlu0 %3155
      %3157 = vrot.lane.b32.xlu0 %v3079, 64
      %v3158 = vpop.permute.xlu0 %3157
      %3159 = vrot.lane.b32.xlu0 %v3082, 64
      %v3160 = vpop.permute.xlu0 %3159
      %3161 = vrot.lane.b32.xlu0 %v3084, 64
      %v3162 = vpop.permute.xlu0 %3161
      %3163 = vrot.lane.b32.xlu0 %v3087, 64
      %v3164 = vpop.permute.xlu0 %3163
      %3165 = vrot.lane.b32.xlu0 %v3089, 64
      %v3166 = vpop.permute.xlu0 %3165
      %3167 = vrot.lane.b32.xlu0 %v3092, 64
      %v3168 = vpop.permute.xlu0 %3167
      %3169 = vrot.lane.b32.xlu0 %v3094, 64
      %v3170 = vpop.permute.xlu0 %3169
      %3171 = vrot.lane.b32.xlu0 %v3097, 64
      %v3172 = vpop.permute.xlu0 %3171
      %3173 = vrot.lane.b32.xlu0 %v3099, 64
      %v3174 = vpop.permute.xlu0 %3173
      %3175 = vrot.lane.b32.xlu0 %v3102, 64
      %v3176 = vpop.permute.xlu0 %3175
      %3177 = vrot.lane.b32.xlu0 %v3104, 64
      %v3178 = vpop.permute.xlu0 %3177
      %3179 = vrot.lane.b32.xlu0 %v3107, 64
      %v3180 = vpop.permute.xlu0 %3179
      %3181 = vrot.lane.b32.xlu0 %v3109, 64
      %v3182 = vpop.permute.xlu0 %3181
      %3183 = vrot.lane.b32.xlu0 %v3112, 64
      %v3184 = vpop.permute.xlu0 %3183
      %3185 = vrot.lane.b32.xlu0 %v3114, 64
      %v3186 = vpop.permute.xlu0 %3185
      %3187 = vrot.lane.b32.xlu0 %v3117, 64
      %v3188 = vpop.permute.xlu0 %3187
      %3189 = vrot.lane.b32.xlu0 %v3119, 64
      %v3190 = vpop.permute.xlu0 %3189
      %3191 = vrot.lane.b32.xlu0 %v3122, 64
      %v3192 = vpop.permute.xlu0 %3191
      %3193 = vrot.lane.b32.xlu0 %v3124, 64
      %v3194 = vpop.permute.xlu0 %3193
      %3195 = vrot.lane.b32.xlu0 %v3127, 64
      %v3196 = vpop.permute.xlu0 %3195
      %3197 = vrot.lane.b32.xlu0 %v3129, 64
      %v3198 = vpop.permute.xlu0 %3197
      %3199 = vrot.lane.b32.xlu0 %v3132, 64
      %v3200 = vpop.permute.xlu0 %3199
      %3201 = vrot.lane.b32.xlu0 %v3134, 64
      %v3202 = vpop.permute.xlu0 %3201
      %3203 = vrot.lane.b32.xlu0 %v3137, 64
      %v3204 = vpop.permute.xlu0 %3203
      %3205 = vrot.lane.b32.xlu0 %v3139, 64
      %v3206 = vpop.permute.xlu0 %3205
      %3207 = vrot.lane.b32.xlu0 %v3142, 64
      %v3208 = vpop.permute.xlu0 %3207
      %3209 = vrot.lane.b32.xlu0 %v3144, 64
      %v3210 = vpop.permute.xlu0 %3209
      %3211 = vrot.lane.b32.xlu0 %v3147, 64
      %v3212 = vpop.permute.xlu0 %3211
      %3213 = vrot.lane.b32.xlu0 %v3149, 64
      %v3214 = vpop.permute.xlu0 %3213
      %3215 = vrot.lane.b32.xlu0 %v3152, 64
      %v3216 = vpop.permute.xlu0 %3215
      %3217 = vrot.lane.b32.xlu0 %v3154, 64
      %v3218 = vpop.permute.xlu0 %3217
      %vm3251 = vcmask 785920
      %3252 = vst.msk [vmem:[#allocation5] sm:$0xff] %vm3251, %v3156
      %3253 = vst.msk [vmem:[#allocation5 + $0x18] sm:$0xff] %vm3251, %v3158
      %3254 = vst.msk [vmem:[#allocation5 + $0x30] sm:$0xff] %vm3251, %v3160
      %3255 = vst.msk [vmem:[#allocation5 + $0x48] sm:$0xff] %vm3251, %v3162
      %3256 = vst.msk [vmem:[#allocation5 + $0x60] sm:$0xff] %vm3251, %v3164
      %3257 = vst.msk [vmem:[#allocation5 + $0x78] sm:$0xff] %vm3251, %v3166
      %3258 = vst.msk [vmem:[#allocation5 + $0x90] sm:$0xff] %vm3251, %v3168
      %3259 = vst.msk [vmem:[#allocation5 + $0xa8] sm:$0xff] %vm3251, %v3170
      %3260 = vst.msk [vmem:[#allocation5 + $0xc0] sm:$0xff] %vm3251, %v3172
      %3261 = vst.msk [vmem:[#allocation5 + $0xd8] sm:$0xff] %vm3251, %v3174
      %3262 = vst.msk [vmem:[#allocation5 + $0xf0] sm:$0xff] %vm3251, %v3176
      %3263 = vst.msk [vmem:[#allocation5 + $0x108] sm:$0xff] %vm3251, %v3178
      %3264 = vst.msk [vmem:[#allocation5 + $0x120] sm:$0xff] %vm3251, %v3180
      %3265 = vst.msk [vmem:[#allocation5 + $0x138] sm:$0xff] %vm3251, %v3182
      %3266 = vst.msk [vmem:[#allocation5 + $0x150] sm:$0xff] %vm3251, %v3184
      %3267 = vst.msk [vmem:[#allocation5 + $0x168] sm:$0xff] %vm3251, %v3186
      %3268 = vst.msk [vmem:[#allocation5 + $0x180] sm:$0xff] %vm3251, %v3188
      %3269 = vst.msk [vmem:[#allocation5 + $0x198] sm:$0xff] %vm3251, %v3190
      %3270 = vst.msk [vmem:[#allocation5 + $0x1b0] sm:$0xff] %vm3251, %v3192
      %3271 = vst.msk [vmem:[#allocation5 + $0x1c8] sm:$0xff] %vm3251, %v3194
      %3272 = vst.msk [vmem:[#allocation5 + $0x1e0] sm:$0xff] %vm3251, %v3196
      %3273 = vst.msk [vmem:[#allocation5 + $0x1f8] sm:$0xff] %vm3251, %v3198
      %3274 = vst.msk [vmem:[#allocation5 + $0x210] sm:$0xff] %vm3251, %v3200
      %3275 = vst.msk [vmem:[#allocation5 + $0x228] sm:$0xff] %vm3251, %v3202
      %3276 = vst.msk [vmem:[#allocation5 + $0x240] sm:$0xff] %vm3251, %v3204
      %3277 = vst.msk [vmem:[#allocation5 + $0x258] sm:$0xff] %vm3251, %v3206
      %3278 = vst.msk [vmem:[#allocation5 + $0x270] sm:$0xff] %vm3251, %v3208
      %3279 = vst.msk [vmem:[#allocation5 + $0x288] sm:$0xff] %vm3251, %v3210
      %3280 = vst.msk [vmem:[#allocation5 + $0x2a0] sm:$0xff] %vm3251, %v3212
      %3281 = vst.msk [vmem:[#allocation5 + $0x2b8] sm:$0xff] %vm3251, %v3214
      %3282 = vst.msk [vmem:[#allocation5 + $0x2d0] sm:$0xff] %vm3251, %v3216
      %3283 = vst.msk [vmem:[#allocation5 + $0x2e8] sm:$0xff] %vm3251, %v3218
      %3286 = vrot.lane.b32.xlu0 %v2735, 96
      %v3287 = vpop.permute.xlu0 %3286
      %3288 = vrot.lane.b32.xlu0 %v2736, 96
      %v3289 = vpop.permute.xlu0 %3288
      %3290 = vrot.lane.b32.xlu0 %v2738, 96
      %v3291 = vpop.permute.xlu0 %3290
      %3292 = vrot.lane.b32.xlu0 %v2739, 96
      %v3293 = vpop.permute.xlu0 %3292
      %3294 = vrot.lane.b32.xlu0 %v2741, 96
      %v3295 = vpop.permute.xlu0 %3294
      %3296 = vrot.lane.b32.xlu0 %v2742, 96
      %v3297 = vpop.permute.xlu0 %3296
      %3298 = vrot.lane.b32.xlu0 %v2744, 96
      %v3299 = vpop.permute.xlu0 %3298
      %3300 = vrot.lane.b32.xlu0 %v2745, 96
      %v3301 = vpop.permute.xlu0 %3300
      %3302 = vrot.lane.b32.xlu0 %v2747, 96
      %v3303 = vpop.permute.xlu0 %3302
      %3304 = vrot.lane.b32.xlu0 %v2748, 96
      %v3305 = vpop.permute.xlu0 %3304
      %3306 = vrot.lane.b32.xlu0 %v2750, 96
      %v3307 = vpop.permute.xlu0 %3306
      %3308 = vrot.lane.b32.xlu0 %v2751, 96
      %v3309 = vpop.permute.xlu0 %3308
      %3310 = vrot.lane.b32.xlu0 %v2753, 96
      %v3311 = vpop.permute.xlu0 %3310
      %3312 = vrot.lane.b32.xlu0 %v2754, 96
      %v3313 = vpop.permute.xlu0 %3312
      %3314 = vrot.lane.b32.xlu0 %v2756, 96
      %v3315 = vpop.permute.xlu0 %3314
      %3316 = vrot.lane.b32.xlu0 %v2757, 96
      %v3317 = vpop.permute.xlu0 %3316
      %3318 = vrot.lane.b32.xlu0 %v2759, 96
      %v3319 = vpop.permute.xlu0 %3318
      %3320 = vrot.lane.b32.xlu0 %v2760, 96
      %v3321 = vpop.permute.xlu0 %3320
      %3322 = vrot.lane.b32.xlu0 %v2762, 96
      %v3323 = vpop.permute.xlu0 %3322
      %3324 = vrot.lane.b32.xlu0 %v2763, 96
      %v3325 = vpop.permute.xlu0 %3324
      %3326 = vrot.lane.b32.xlu0 %v2765, 96
      %v3327 = vpop.permute.xlu0 %3326
      %3328 = vrot.lane.b32.xlu0 %v2766, 96
      %v3329 = vpop.permute.xlu0 %3328
      %3330 = vrot.lane.b32.xlu0 %v2768, 96
      %v3331 = vpop.permute.xlu0 %3330
      %3332 = vrot.lane.b32.xlu0 %v2769, 96
      %v3333 = vpop.permute.xlu0 %3332
      %3334 = vrot.lane.b32.xlu0 %v2771, 96
      %v3335 = vpop.permute.xlu0 %3334
      %3336 = vrot.lane.b32.xlu0 %v2772, 96
      %v3337 = vpop.permute.xlu0 %3336
      %3338 = vrot.lane.b32.xlu0 %v2774, 96
      %v3339 = vpop.permute.xlu0 %3338
      %3340 = vrot.lane.b32.xlu0 %v2775, 96
      %v3341 = vpop.permute.xlu0 %3340
      %3342 = vrot.lane.b32.xlu0 %v2777, 96
      %v3343 = vpop.permute.xlu0 %3342
      %3344 = vrot.lane.b32.xlu0 %v2778, 96
      %v3345 = vpop.permute.xlu0 %3344
      %3346 = vrot.lane.b32.xlu0 %v2780, 96
      %v3347 = vpop.permute.xlu0 %3346
      %3348 = vrot.lane.b32.xlu0 %v2781, 96
      %v3349 = vpop.permute.xlu0 %3348
      %vm3382 = vcmask 1048320
      %3383 = vst.msk [vmem:[#allocation5] sm:$0xff] %vm3382, %v3287
      %3384 = vst.msk [vmem:[#allocation5 + $0x18] sm:$0xff] %vm3382, %v3289
      %3385 = vst.msk [vmem:[#allocation5 + $0x30] sm:$0xff] %vm3382, %v3291
      %3386 = vst.msk [vmem:[#allocation5 + $0x48] sm:$0xff] %vm3382, %v3293
      %3387 = vst.msk [vmem:[#allocation5 + $0x60] sm:$0xff] %vm3382, %v3295
      %3388 = vst.msk [vmem:[#allocation5 + $0x78] sm:$0xff] %vm3382, %v3297
      %3389 = vst.msk [vmem:[#allocation5 + $0x90] sm:$0xff] %vm3382, %v3299
      %3390 = vst.msk [vmem:[#allocation5 + $0xa8] sm:$0xff] %vm3382, %v3301
      %3391 = vst.msk [vmem:[#allocation5 + $0xc0] sm:$0xff] %vm3382, %v3303
      %3392 = vst.msk [vmem:[#allocation5 + $0xd8] sm:$0xff] %vm3382, %v3305
      %3393 = vst.msk [vmem:[#allocation5 + $0xf0] sm:$0xff] %vm3382, %v3307
      %3394 = vst.msk [vmem:[#allocation5 + $0x108] sm:$0xff] %vm3382, %v3309
      %3395 = vst.msk [vmem:[#allocation5 + $0x120] sm:$0xff] %vm3382, %v3311
      %3396 = vst.msk [vmem:[#allocation5 + $0x138] sm:$0xff] %vm3382, %v3313
      %3397 = vst.msk [vmem:[#allocation5 + $0x150] sm:$0xff] %vm3382, %v3315
      %3398 = vst.msk [vmem:[#allocation5 + $0x168] sm:$0xff] %vm3382, %v3317
      %3399 = vst.msk [vmem:[#allocation5 + $0x180] sm:$0xff] %vm3382, %v3319
      %3400 = vst.msk [vmem:[#allocation5 + $0x198] sm:$0xff] %vm3382, %v3321
      %3401 = vst.msk [vmem:[#allocation5 + $0x1b0] sm:$0xff] %vm3382, %v3323
      %3402 = vst.msk [vmem:[#allocation5 + $0x1c8] sm:$0xff] %vm3382, %v3325
      %3403 = vst.msk [vmem:[#allocation5 + $0x1e0] sm:$0xff] %vm3382, %v3327
      %3404 = vst.msk [vmem:[#allocation5 + $0x1f8] sm:$0xff] %vm3382, %v3329
      %3405 = vst.msk [vmem:[#allocation5 + $0x210] sm:$0xff] %vm3382, %v3331
      %3406 = vst.msk [vmem:[#allocation5 + $0x228] sm:$0xff] %vm3382, %v3333
      %3407 = vst.msk [vmem:[#allocation5 + $0x240] sm:$0xff] %vm3382, %v3335
      %3408 = vst.msk [vmem:[#allocation5 + $0x258] sm:$0xff] %vm3382, %v3337
      %3409 = vst.msk [vmem:[#allocation5 + $0x270] sm:$0xff] %vm3382, %v3339
      %3410 = vst.msk [vmem:[#allocation5 + $0x288] sm:$0xff] %vm3382, %v3341
      %3411 = vst.msk [vmem:[#allocation5 + $0x2a0] sm:$0xff] %vm3382, %v3343
      %3412 = vst.msk [vmem:[#allocation5 + $0x2b8] sm:$0xff] %vm3382, %v3345
      %3413 = vst.msk [vmem:[#allocation5 + $0x2d0] sm:$0xff] %vm3382, %v3347
      %3414 = vst.msk [vmem:[#allocation5 + $0x2e8] sm:$0xff] %vm3382, %v3349
      %v3416 = vrot.slane %v2780, 1
      %v3417 = vrot.slane %v2781, 1
      %v3418 = vsel %vm794, %v3416, %v3417
      %v3419 = vrot.slane %v2782, 1
      %v3420 = vsel %vm794, %v3417, %v3419
      %3453 = vst.msk [vmem:[#allocation5 + $0x8] sm:$0xff] %vm380, %v2873
      %3454 = vst.msk [vmem:[#allocation5 + $0x20] sm:$0xff] %vm380, %v2875
      %3455 = vst.msk [vmem:[#allocation5 + $0x38] sm:$0xff] %vm380, %v2878
      %3456 = vst.msk [vmem:[#allocation5 + $0x50] sm:$0xff] %vm380, %v2880
      %3457 = vst.msk [vmem:[#allocation5 + $0x68] sm:$0xff] %vm380, %v2883
      %3458 = vst.msk [vmem:[#allocation5 + $0x80] sm:$0xff] %vm380, %v2885
      %3459 = vst.msk [vmem:[#allocation5 + $0x98] sm:$0xff] %vm380, %v2888
      %3460 = vst.msk [vmem:[#allocation5 + $0xb0] sm:$0xff] %vm380, %v2890
      %3461 = vst.msk [vmem:[#allocation5 + $0xc8] sm:$0xff] %vm380, %v2893
      %3462 = vst.msk [vmem:[#allocation5 + $0xe0] sm:$0xff] %vm380, %v2895
      %3463 = vst.msk [vmem:[#allocation5 + $0xf8] sm:$0xff] %vm380, %v2898
      %3464 = vst.msk [vmem:[#allocation5 + $0x110] sm:$0xff] %vm380, %v2900
      %3465 = vst.msk [vmem:[#allocation5 + $0x128] sm:$0xff] %vm380, %v2903
      %3466 = vst.msk [vmem:[#allocation5 + $0x140] sm:$0xff] %vm380, %v2905
      %3467 = vst.msk [vmem:[#allocation5 + $0x158] sm:$0xff] %vm380, %v2908
      %3468 = vst.msk [vmem:[#allocation5 + $0x170] sm:$0xff] %vm380, %v2910
      %3469 = vst.msk [vmem:[#allocation5 + $0x188] sm:$0xff] %vm380, %v2913
      %3470 = vst.msk [vmem:[#allocation5 + $0x1a0] sm:$0xff] %vm380, %v2915
      %3471 = vst.msk [vmem:[#allocation5 + $0x1b8] sm:$0xff] %vm380, %v2918
      %3472 = vst.msk [vmem:[#allocation5 + $0x1d0] sm:$0xff] %vm380, %v2920
      %3473 = vst.msk [vmem:[#allocation5 + $0x1e8] sm:$0xff] %vm380, %v2923
      %3474 = vst.msk [vmem:[#allocation5 + $0x200] sm:$0xff] %vm380, %v2925
      %3475 = vst.msk [vmem:[#allocation5 + $0x218] sm:$0xff] %vm380, %v2928
      %3476 = vst.msk [vmem:[#allocation5 + $0x230] sm:$0xff] %vm380, %v2930
      %3477 = vst.msk [vmem:[#allocation5 + $0x248] sm:$0xff] %vm380, %v2933
      %3478 = vst.msk [vmem:[#allocation5 + $0x260] sm:$0xff] %vm380, %v2935
      %3479 = vst.msk [vmem:[#allocation5 + $0x278] sm:$0xff] %vm380, %v2938
      %3480 = vst.msk [vmem:[#allocation5 + $0x290] sm:$0xff] %vm380, %v2940
      %3481 = vst.msk [vmem:[#allocation5 + $0x2a8] sm:$0xff] %vm380, %v2943
      %3482 = vst.msk [vmem:[#allocation5 + $0x2c0] sm:$0xff] %vm380, %v2945
      %3483 = vst.msk [vmem:[#allocation5 + $0x2d8] sm:$0xff] %vm380, %v3418
      %3484 = vst.msk [vmem:[#allocation5 + $0x2f0] sm:$0xff] %vm380, %v3420
      %v3485 = vrot.slane %v2780, 2
      %v3486 = vrot.slane %v2781, 2
      %v3487 = vsel %vm1004, %v3485, %v3486
      %v3488 = vrot.slane %v2782, 2
      %v3489 = vsel %vm1004, %v3486, %v3488
      %3490 = vrot.lane.b32.xlu0 %v3082, 32
      %v3491 = vpop.permute.xlu0 %3490
      %3492 = vrot.lane.b32.xlu0 %v3084, 32
      %v3493 = vpop.permute.xlu0 %3492
      %3494 = vrot.lane.b32.xlu0 %v3087, 32
      %v3495 = vpop.permute.xlu0 %3494
      %3496 = vrot.lane.b32.xlu0 %v3089, 32
      %v3497 = vpop.permute.xlu0 %3496
      %3498 = vrot.lane.b32.xlu0 %v3092, 32
      %v3499 = vpop.permute.xlu0 %3498
      %3500 = vrot.lane.b32.xlu0 %v3094, 32
      %v3501 = vpop.permute.xlu0 %3500
      %3502 = vrot.lane.b32.xlu0 %v3097, 32
      %v3503 = vpop.permute.xlu0 %3502
      %3504 = vrot.lane.b32.xlu0 %v3099, 32
      %v3505 = vpop.permute.xlu0 %3504
      %3506 = vrot.lane.b32.xlu0 %v3102, 32
      %v3507 = vpop.permute.xlu0 %3506
      %3508 = vrot.lane.b32.xlu0 %v3104, 32
      %v3509 = vpop.permute.xlu0 %3508
      %3510 = vrot.lane.b32.xlu0 %v3107, 32
      %v3511 = vpop.permute.xlu0 %3510
      %3512 = vrot.lane.b32.xlu0 %v3109, 32
      %v3513 = vpop.permute.xlu0 %3512
      %3514 = vrot.lane.b32.xlu0 %v3112, 32
      %v3515 = vpop.permute.xlu0 %3514
      %3516 = vrot.lane.b32.xlu0 %v3114, 32
      %v3517 = vpop.permute.xlu0 %3516
      %3518 = vrot.lane.b32.xlu0 %v3117, 32
      %v3519 = vpop.permute.xlu0 %3518
      %3520 = vrot.lane.b32.xlu0 %v3119, 32
      %v3521 = vpop.permute.xlu0 %3520
      %3522 = vrot.lane.b32.xlu0 %v3122, 32
      %v3523 = vpop.permute.xlu0 %3522
      %3524 = vrot.lane.b32.xlu0 %v3124, 32
      %v3525 = vpop.permute.xlu0 %3524
      %3526 = vrot.lane.b32.xlu0 %v3127, 32
      %v3527 = vpop.permute.xlu0 %3526
      %3528 = vrot.lane.b32.xlu0 %v3129, 32
      %v3529 = vpop.permute.xlu0 %3528
      %3530 = vrot.lane.b32.xlu0 %v3132, 32
      %v3531 = vpop.permute.xlu0 %3530
      %3532 = vrot.lane.b32.xlu0 %v3134, 32
      %v3533 = vpop.permute.xlu0 %3532
      %3534 = vrot.lane.b32.xlu0 %v3137, 32
      %v3535 = vpop.permute.xlu0 %3534
      %3536 = vrot.lane.b32.xlu0 %v3139, 32
      %v3537 = vpop.permute.xlu0 %3536
      %3538 = vrot.lane.b32.xlu0 %v3142, 32
      %v3539 = vpop.permute.xlu0 %3538
      %3540 = vrot.lane.b32.xlu0 %v3144, 32
      %v3541 = vpop.permute.xlu0 %3540
      %3542 = vrot.lane.b32.xlu0 %v3147, 32
      %v3543 = vpop.permute.xlu0 %3542
      %3544 = vrot.lane.b32.xlu0 %v3149, 32
      %v3545 = vpop.permute.xlu0 %3544
      %3546 = vrot.lane.b32.xlu0 %v3152, 32
      %v3547 = vpop.permute.xlu0 %3546
      %3548 = vrot.lane.b32.xlu0 %v3154, 32
      %v3549 = vpop.permute.xlu0 %3548
      %3550 = vrot.lane.b32.xlu0 %v3487, 32
      %v3551 = vpop.permute.xlu0 %3550
      %3552 = vrot.lane.b32.xlu0 %v3489, 32
      %v3553 = vpop.permute.xlu0 %3552
      %3586 = vst.msk [vmem:[#allocation5 + $0x8] sm:$0xff] %vm3042, %v3491
      %3587 = vst.msk [vmem:[#allocation5 + $0x20] sm:$0xff] %vm3042, %v3493
      %3588 = vst.msk [vmem:[#allocation5 + $0x38] sm:$0xff] %vm3042, %v3495
      %3589 = vst.msk [vmem:[#allocation5 + $0x50] sm:$0xff] %vm3042, %v3497
      %3590 = vst.msk [vmem:[#allocation5 + $0x68] sm:$0xff] %vm3042, %v3499
      %3591 = vst.msk [vmem:[#allocation5 + $0x80] sm:$0xff] %vm3042, %v3501
      %3592 = vst.msk [vmem:[#allocation5 + $0x98] sm:$0xff] %vm3042, %v3503
      %3593 = vst.msk [vmem:[#allocation5 + $0xb0] sm:$0xff] %vm3042, %v3505
      %3594 = vst.msk [vmem:[#allocation5 + $0xc8] sm:$0xff] %vm3042, %v3507
      %3595 = vst.msk [vmem:[#allocation5 + $0xe0] sm:$0xff] %vm3042, %v3509
      %3596 = vst.msk [vmem:[#allocation5 + $0xf8] sm:$0xff] %vm3042, %v3511
      %3597 = vst.msk [vmem:[#allocation5 + $0x110] sm:$0xff] %vm3042, %v3513
      %3598 = vst.msk [vmem:[#allocation5 + $0x128] sm:$0xff] %vm3042, %v3515
      %3599 = vst.msk [vmem:[#allocation5 + $0x140] sm:$0xff] %vm3042, %v3517
      %3600 = vst.msk [vmem:[#allocation5 + $0x158] sm:$0xff] %vm3042, %v3519
      %3601 = vst.msk [vmem:[#allocation5 + $0x170] sm:$0xff] %vm3042, %v3521
      %3602 = vst.msk [vmem:[#allocation5 + $0x188] sm:$0xff] %vm3042, %v3523
      %3603 = vst.msk [vmem:[#allocation5 + $0x1a0] sm:$0xff] %vm3042, %v3525
      %3604 = vst.msk [vmem:[#allocation5 + $0x1b8] sm:$0xff] %vm3042, %v3527
      %3605 = vst.msk [vmem:[#allocation5 + $0x1d0] sm:$0xff] %vm3042, %v3529
      %3606 = vst.msk [vmem:[#allocation5 + $0x1e8] sm:$0xff] %vm3042, %v3531
      %3607 = vst.msk [vmem:[#allocation5 + $0x200] sm:$0xff] %vm3042, %v3533
      %3608 = vst.msk [vmem:[#allocation5 + $0x218] sm:$0xff] %vm3042, %v3535
      %3609 = vst.msk [vmem:[#allocation5 + $0x230] sm:$0xff] %vm3042, %v3537
      %3610 = vst.msk [vmem:[#allocation5 + $0x248] sm:$0xff] %vm3042, %v3539
      %3611 = vst.msk [vmem:[#allocation5 + $0x260] sm:$0xff] %vm3042, %v3541
      %3612 = vst.msk [vmem:[#allocation5 + $0x278] sm:$0xff] %vm3042, %v3543
      %3613 = vst.msk [vmem:[#allocation5 + $0x290] sm:$0xff] %vm3042, %v3545
      %3614 = vst.msk [vmem:[#allocation5 + $0x2a8] sm:$0xff] %vm3042, %v3547
      %3615 = vst.msk [vmem:[#allocation5 + $0x2c0] sm:$0xff] %vm3042, %v3549
      %3616 = vst.msk [vmem:[#allocation5 + $0x2d8] sm:$0xff] %vm3042, %v3551
      %3617 = vst.msk [vmem:[#allocation5 + $0x2f0] sm:$0xff] %vm3042, %v3553
      %3620 = vrot.lane.b32.xlu0 %v2738, 64
      %v3621 = vpop.permute.xlu0 %3620
      %3622 = vrot.lane.b32.xlu0 %v2739, 64
      %v3623 = vpop.permute.xlu0 %3622
      %3624 = vrot.lane.b32.xlu0 %v2741, 64
      %v3625 = vpop.permute.xlu0 %3624
      %3626 = vrot.lane.b32.xlu0 %v2742, 64
      %v3627 = vpop.permute.xlu0 %3626
      %3628 = vrot.lane.b32.xlu0 %v2744, 64
      %v3629 = vpop.permute.xlu0 %3628
      %3630 = vrot.lane.b32.xlu0 %v2745, 64
      %v3631 = vpop.permute.xlu0 %3630
      %3632 = vrot.lane.b32.xlu0 %v2747, 64
      %v3633 = vpop.permute.xlu0 %3632
      %3634 = vrot.lane.b32.xlu0 %v2748, 64
      %v3635 = vpop.permute.xlu0 %3634
      %3636 = vrot.lane.b32.xlu0 %v2750, 64
      %v3637 = vpop.permute.xlu0 %3636
      %3638 = vrot.lane.b32.xlu0 %v2751, 64
      %v3639 = vpop.permute.xlu0 %3638
      %3640 = vrot.lane.b32.xlu0 %v2753, 64
      %v3641 = vpop.permute.xlu0 %3640
      %3642 = vrot.lane.b32.xlu0 %v2754, 64
      %v3643 = vpop.permute.xlu0 %3642
      %3644 = vrot.lane.b32.xlu0 %v2756, 64
      %v3645 = vpop.permute.xlu0 %3644
      %3646 = vrot.lane.b32.xlu0 %v2757, 64
      %v3647 = vpop.permute.xlu0 %3646
      %3648 = vrot.lane.b32.xlu0 %v2759, 64
      %v3649 = vpop.permute.xlu0 %3648
      %3650 = vrot.lane.b32.xlu0 %v2760, 64
      %v3651 = vpop.permute.xlu0 %3650
      %3652 = vrot.lane.b32.xlu0 %v2762, 64
      %v3653 = vpop.permute.xlu0 %3652
      %3654 = vrot.lane.b32.xlu0 %v2763, 64
      %v3655 = vpop.permute.xlu0 %3654
      %3656 = vrot.lane.b32.xlu0 %v2765, 64
      %v3657 = vpop.permute.xlu0 %3656
      %3658 = vrot.lane.b32.xlu0 %v2766, 64
      %v3659 = vpop.permute.xlu0 %3658
      %3660 = vrot.lane.b32.xlu0 %v2768, 64
      %v3661 = vpop.permute.xlu0 %3660
      %3662 = vrot.lane.b32.xlu0 %v2769, 64
      %v3663 = vpop.permute.xlu0 %3662
      %3664 = vrot.lane.b32.xlu0 %v2771, 64
      %v3665 = vpop.permute.xlu0 %3664
      %3666 = vrot.lane.b32.xlu0 %v2772, 64
      %v3667 = vpop.permute.xlu0 %3666
      %3668 = vrot.lane.b32.xlu0 %v2774, 64
      %v3669 = vpop.permute.xlu0 %3668
      %3670 = vrot.lane.b32.xlu0 %v2775, 64
      %v3671 = vpop.permute.xlu0 %3670
      %3672 = vrot.lane.b32.xlu0 %v2777, 64
      %v3673 = vpop.permute.xlu0 %3672
      %3674 = vrot.lane.b32.xlu0 %v2778, 64
      %v3675 = vpop.permute.xlu0 %3674
      %3676 = vrot.lane.b32.xlu0 %v2780, 64
      %v3677 = vpop.permute.xlu0 %3676
      %3678 = vrot.lane.b32.xlu0 %v2781, 64
      %v3679 = vpop.permute.xlu0 %3678
      %3680 = vrot.lane.b32.xlu0 %v2783, 64
      %v3681 = vpop.permute.xlu0 %3680
      %3682 = vrot.lane.b32.xlu0 %v2784, 64
      %v3683 = vpop.permute.xlu0 %3682
      %3716 = vst.msk [vmem:[#allocation5 + $0x8] sm:$0xff] %vm3251, %v3621
      %3717 = vst.msk [vmem:[#allocation5 + $0x20] sm:$0xff] %vm3251, %v3623
      %3718 = vst.msk [vmem:[#allocation5 + $0x38] sm:$0xff] %vm3251, %v3625
      %3719 = vst.msk [vmem:[#allocation5 + $0x50] sm:$0xff] %vm3251, %v3627
      %3720 = vst.msk [vmem:[#allocation5 + $0x68] sm:$0xff] %vm3251, %v3629
      %3721 = vst.msk [vmem:[#allocation5 + $0x80] sm:$0xff] %vm3251, %v3631
      %3722 = vst.msk [vmem:[#allocation5 + $0x98] sm:$0xff] %vm3251, %v3633
      %3723 = vst.msk [vmem:[#allocation5 + $0xb0] sm:$0xff] %vm3251, %v3635
      %3724 = vst.msk [vmem:[#allocation5 + $0xc8] sm:$0xff] %vm3251, %v3637
      %3725 = vst.msk [vmem:[#allocation5 + $0xe0] sm:$0xff] %vm3251, %v3639
      %3726 = vst.msk [vmem:[#allocation5 + $0xf8] sm:$0xff] %vm3251, %v3641
      %3727 = vst.msk [vmem:[#allocation5 + $0x110] sm:$0xff] %vm3251, %v3643
      %3728 = vst.msk [vmem:[#allocation5 + $0x128] sm:$0xff] %vm3251, %v3645
      %3729 = vst.msk [vmem:[#allocation5 + $0x140] sm:$0xff] %vm3251, %v3647
      %3730 = vst.msk [vmem:[#allocation5 + $0x158] sm:$0xff] %vm3251, %v3649
      %3731 = vst.msk [vmem:[#allocation5 + $0x170] sm:$0xff] %vm3251, %v3651
      %3732 = vst.msk [vmem:[#allocation5 + $0x188] sm:$0xff] %vm3251, %v3653
      %3733 = vst.msk [vmem:[#allocation5 + $0x1a0] sm:$0xff] %vm3251, %v3655
      %3734 = vst.msk [vmem:[#allocation5 + $0x1b8] sm:$0xff] %vm3251, %v3657
      %3735 = vst.msk [vmem:[#allocation5 + $0x1d0] sm:$0xff] %vm3251, %v3659
      %3736 = vst.msk [vmem:[#allocation5 + $0x1e8] sm:$0xff] %vm3251, %v3661
      %3737 = vst.msk [vmem:[#allocation5 + $0x200] sm:$0xff] %vm3251, %v3663
      %3738 = vst.msk [vmem:[#allocation5 + $0x218] sm:$0xff] %vm3251, %v3665
      %3739 = vst.msk [vmem:[#allocation5 + $0x230] sm:$0xff] %vm3251, %v3667
      %3740 = vst.msk [vmem:[#allocation5 + $0x248] sm:$0xff] %vm3251, %v3669
      %3741 = vst.msk [vmem:[#allocation5 + $0x260] sm:$0xff] %vm3251, %v3671
      %3742 = vst.msk [vmem:[#allocation5 + $0x278] sm:$0xff] %vm3251, %v3673
      %3743 = vst.msk [vmem:[#allocation5 + $0x290] sm:$0xff] %vm3251, %v3675
      %3744 = vst.msk [vmem:[#allocation5 + $0x2a8] sm:$0xff] %vm3251, %v3677
      %3745 = vst.msk [vmem:[#allocation5 + $0x2c0] sm:$0xff] %vm3251, %v3679
      %3746 = vst.msk [vmem:[#allocation5 + $0x2d8] sm:$0xff] %vm3251, %v3681
      %3747 = vst.msk [vmem:[#allocation5 + $0x2f0] sm:$0xff] %vm3251, %v3683
      %v3749 = vrot.slane %v2783, 1
      %v3750 = vrot.slane %v2784, 1
      %v3751 = vsel %vm794, %v3749, %v3750
      %v3752 = vrot.slane %v2785, 1
      %v3753 = vsel %vm794, %v3750, %v3752
      %3754 = vrot.lane.b32.xlu0 %v2878, 96
      %v3755 = vpop.permute.xlu0 %3754
      %3756 = vrot.lane.b32.xlu0 %v2880, 96
      %v3757 = vpop.permute.xlu0 %3756
      %3758 = vrot.lane.b32.xlu0 %v2883, 96
      %v3759 = vpop.permute.xlu0 %3758
      %3760 = vrot.lane.b32.xlu0 %v2885, 96
      %v3761 = vpop.permute.xlu0 %3760
      %3762 = vrot.lane.b32.xlu0 %v2888, 96
      %v3763 = vpop.permute.xlu0 %3762
      %3764 = vrot.lane.b32.xlu0 %v2890, 96
      %v3765 = vpop.permute.xlu0 %3764
      %3766 = vrot.lane.b32.xlu0 %v2893, 96
      %v3767 = vpop.permute.xlu0 %3766
      %3768 = vrot.lane.b32.xlu0 %v2895, 96
      %v3769 = vpop.permute.xlu0 %3768
      %3770 = vrot.lane.b32.xlu0 %v2898, 96
      %v3771 = vpop.permute.xlu0 %3770
      %3772 = vrot.lane.b32.xlu0 %v2900, 96
      %v3773 = vpop.permute.xlu0 %3772
      %3774 = vrot.lane.b32.xlu0 %v2903, 96
      %v3775 = vpop.permute.xlu0 %3774
      %3776 = vrot.lane.b32.xlu0 %v2905, 96
      %v3777 = vpop.permute.xlu0 %3776
      %3778 = vrot.lane.b32.xlu0 %v2908, 96
      %v3779 = vpop.permute.xlu0 %3778
      %3780 = vrot.lane.b32.xlu0 %v2910, 96
      %v3781 = vpop.permute.xlu0 %3780
      %3782 = vrot.lane.b32.xlu0 %v2913, 96
      %v3783 = vpop.permute.xlu0 %3782
      %3784 = vrot.lane.b32.xlu0 %v2915, 96
      %v3785 = vpop.permute.xlu0 %3784
      %3786 = vrot.lane.b32.xlu0 %v2918, 96
      %v3787 = vpop.permute.xlu0 %3786
      %3788 = vrot.lane.b32.xlu0 %v2920, 96
      %v3789 = vpop.permute.xlu0 %3788
      %3790 = vrot.lane.b32.xlu0 %v2923, 96
      %v3791 = vpop.permute.xlu0 %3790
      %3792 = vrot.lane.b32.xlu0 %v2925, 96
      %v3793 = vpop.permute.xlu0 %3792
      %3794 = vrot.lane.b32.xlu0 %v2928, 96
      %v3795 = vpop.permute.xlu0 %3794
      %3796 = vrot.lane.b32.xlu0 %v2930, 96
      %v3797 = vpop.permute.xlu0 %3796
      %3798 = vrot.lane.b32.xlu0 %v2933, 96
      %v3799 = vpop.permute.xlu0 %3798
      %3800 = vrot.lane.b32.xlu0 %v2935, 96
      %v3801 = vpop.permute.xlu0 %3800
      %3802 = vrot.lane.b32.xlu0 %v2938, 96
      %v3803 = vpop.permute.xlu0 %3802
      %3804 = vrot.lane.b32.xlu0 %v2940, 96
      %v3805 = vpop.permute.xlu0 %3804
      %3806 = vrot.lane.b32.xlu0 %v2943, 96
      %v3807 = vpop.permute.xlu0 %3806
      %3808 = vrot.lane.b32.xlu0 %v2945, 96
      %v3809 = vpop.permute.xlu0 %3808
      %3810 = vrot.lane.b32.xlu0 %v3418, 96
      %v3811 = vpop.permute.xlu0 %3810
      %3812 = vrot.lane.b32.xlu0 %v3420, 96
      %v3813 = vpop.permute.xlu0 %3812
      %3814 = vrot.lane.b32.xlu0 %v3751, 96
      %v3815 = vpop.permute.xlu0 %3814
      %3816 = vrot.lane.b32.xlu0 %v3753, 96
      %v3817 = vpop.permute.xlu0 %3816
      %3850 = vst.msk [vmem:[#allocation5 + $0x8] sm:$0xff] %vm3382, %v3755
      %3851 = vst.msk [vmem:[#allocation5 + $0x20] sm:$0xff] %vm3382, %v3757
      %3852 = vst.msk [vmem:[#allocation5 + $0x38] sm:$0xff] %vm3382, %v3759
      %3853 = vst.msk [vmem:[#allocation5 + $0x50] sm:$0xff] %vm3382, %v3761
      %3854 = vst.msk [vmem:[#allocation5 + $0x68] sm:$0xff] %vm3382, %v3763
      %3855 = vst.msk [vmem:[#allocation5 + $0x80] sm:$0xff] %vm3382, %v3765
      %3856 = vst.msk [vmem:[#allocation5 + $0x98] sm:$0xff] %vm3382, %v3767
      %3857 = vst.msk [vmem:[#allocation5 + $0xb0] sm:$0xff] %vm3382, %v3769
      %3858 = vst.msk [vmem:[#allocation5 + $0xc8] sm:$0xff] %vm3382, %v3771
      %3859 = vst.msk [vmem:[#allocation5 + $0xe0] sm:$0xff] %vm3382, %v3773
      %3860 = vst.msk [vmem:[#allocation5 + $0xf8] sm:$0xff] %vm3382, %v3775
      %3861 = vst.msk [vmem:[#allocation5 + $0x110] sm:$0xff] %vm3382, %v3777
      %3862 = vst.msk [vmem:[#allocation5 + $0x128] sm:$0xff] %vm3382, %v3779
      %3863 = vst.msk [vmem:[#allocation5 + $0x140] sm:$0xff] %vm3382, %v3781
      %3864 = vst.msk [vmem:[#allocation5 + $0x158] sm:$0xff] %vm3382, %v3783
      %3865 = vst.msk [vmem:[#allocation5 + $0x170] sm:$0xff] %vm3382, %v3785
      %3866 = vst.msk [vmem:[#allocation5 + $0x188] sm:$0xff] %vm3382, %v3787
      %3867 = vst.msk [vmem:[#allocation5 + $0x1a0] sm:$0xff] %vm3382, %v3789
      %3868 = vst.msk [vmem:[#allocation5 + $0x1b8] sm:$0xff] %vm3382, %v3791
      %3869 = vst.msk [vmem:[#allocation5 + $0x1d0] sm:$0xff] %vm3382, %v3793
      %3870 = vst.msk [vmem:[#allocation5 + $0x1e8] sm:$0xff] %vm3382, %v3795
      %3871 = vst.msk [vmem:[#allocation5 + $0x200] sm:$0xff] %vm3382, %v3797
      %3872 = vst.msk [vmem:[#allocation5 + $0x218] sm:$0xff] %vm3382, %v3799
      %3873 = vst.msk [vmem:[#allocation5 + $0x230] sm:$0xff] %vm3382, %v3801
      %3874 = vst.msk [vmem:[#allocation5 + $0x248] sm:$0xff] %vm3382, %v3803
      %3875 = vst.msk [vmem:[#allocation5 + $0x260] sm:$0xff] %vm3382, %v3805
      %3876 = vst.msk [vmem:[#allocation5 + $0x278] sm:$0xff] %vm3382, %v3807
      %3877 = vst.msk [vmem:[#allocation5 + $0x290] sm:$0xff] %vm3382, %v3809
      %3878 = vst.msk [vmem:[#allocation5 + $0x2a8] sm:$0xff] %vm3382, %v3811
      %3879 = vst.msk [vmem:[#allocation5 + $0x2c0] sm:$0xff] %vm3382, %v3813
      %3880 = vst.msk [vmem:[#allocation5 + $0x2d8] sm:$0xff] %vm3382, %v3815
      %3881 = vst.msk [vmem:[#allocation5 + $0x2f0] sm:$0xff] %vm3382, %v3817
      %v3882 = vrot.slane %v2783, 2
      %v3883 = vrot.slane %v2784, 2
      %v3884 = vsel %vm1004, %v3882, %v3883
      %v3885 = vrot.slane %v2785, 2
      %v3886 = vsel %vm1004, %v3883, %v3885
      %3919 = vst.msk [vmem:[#allocation5 + $0x10] sm:$0xff] %vm380, %v3087
      %3920 = vst.msk [vmem:[#allocation5 + $0x28] sm:$0xff] %vm380, %v3089
      %3921 = vst.msk [vmem:[#allocation5 + $0x40] sm:$0xff] %vm380, %v3092
      %3922 = vst.msk [vmem:[#allocation5 + $0x58] sm:$0xff] %vm380, %v3094
      %3923 = vst.msk [vmem:[#allocation5 + $0x70] sm:$0xff] %vm380, %v3097
      %3924 = vst.msk [vmem:[#allocation5 + $0x88] sm:$0xff] %vm380, %v3099
      %3925 = vst.msk [vmem:[#allocation5 + $0xa0] sm:$0xff] %vm380, %v3102
      %3926 = vst.msk [vmem:[#allocation5 + $0xb8] sm:$0xff] %vm380, %v3104
      %3927 = vst.msk [vmem:[#allocation5 + $0xd0] sm:$0xff] %vm380, %v3107
      %3928 = vst.msk [vmem:[#allocation5 + $0xe8] sm:$0xff] %vm380, %v3109
      %3929 = vst.msk [vmem:[#allocation5 + $0x100] sm:$0xff] %vm380, %v3112
      %3930 = vst.msk [vmem:[#allocation5 + $0x118] sm:$0xff] %vm380, %v3114
      %3931 = vst.msk [vmem:[#allocation5 + $0x130] sm:$0xff] %vm380, %v3117
      %3932 = vst.msk [vmem:[#allocation5 + $0x148] sm:$0xff] %vm380, %v3119
      %3933 = vst.msk [vmem:[#allocation5 + $0x160] sm:$0xff] %vm380, %v3122
      %3934 = vst.msk [vmem:[#allocation5 + $0x178] sm:$0xff] %vm380, %v3124
      %3935 = vst.msk [vmem:[#allocation5 + $0x190] sm:$0xff] %vm380, %v3127
      %3936 = vst.msk [vmem:[#allocation5 + $0x1a8] sm:$0xff] %vm380, %v3129
      %3937 = vst.msk [vmem:[#allocation5 + $0x1c0] sm:$0xff] %vm380, %v3132
      %3938 = vst.msk [vmem:[#allocation5 + $0x1d8] sm:$0xff] %vm380, %v3134
      %3939 = vst.msk [vmem:[#allocation5 + $0x1f0] sm:$0xff] %vm380, %v3137
      %3940 = vst.msk [vmem:[#allocation5 + $0x208] sm:$0xff] %vm380, %v3139
      %3941 = vst.msk [vmem:[#allocation5 + $0x220] sm:$0xff] %vm380, %v3142
      %3942 = vst.msk [vmem:[#allocation5 + $0x238] sm:$0xff] %vm380, %v3144
      %3943 = vst.msk [vmem:[#allocation5 + $0x250] sm:$0xff] %vm380, %v3147
      %3944 = vst.msk [vmem:[#allocation5 + $0x268] sm:$0xff] %vm380, %v3149
      %3945 = vst.msk [vmem:[#allocation5 + $0x280] sm:$0xff] %vm380, %v3152
      %3946 = vst.msk [vmem:[#allocation5 + $0x298] sm:$0xff] %vm380, %v3154
      %3947 = vst.msk [vmem:[#allocation5 + $0x2b0] sm:$0xff] %vm380, %v3487
      %3948 = vst.msk [vmem:[#allocation5 + $0x2c8] sm:$0xff] %vm380, %v3489
      %3949 = vst.msk [vmem:[#allocation5 + $0x2e0] sm:$0xff] %vm380, %v3884
      %3950 = vst.msk [vmem:[#allocation5 + $0x2f8] sm:$0xff] %vm380, %v3886
      %v3951 = vld [vmem:[%s8] sm:$0xff]
      %v3952 = vld [vmem:[%s8 + $0x8] sm:$0xf]
      %v3953 = vld [vmem:[#allocation5] sm:$0xff]
      %v3954 = vld [vmem:[#allocation5 + $0x8] sm:$0xff]
      %v3955 = vld [vmem:[#allocation5 + $0x10] sm:$0xff]
      %v3956 = vld [vmem:[#allocation5 + $0x18] sm:$0xff]
      %v3957 = vld [vmem:[#allocation5 + $0x20] sm:$0xff]
      %v3958 = vld [vmem:[#allocation5 + $0x28] sm:$0xff]
      %v3959 = vld [vmem:[#allocation5 + $0x30] sm:$0xff]
      %v3960 = vld [vmem:[#allocation5 + $0x38] sm:$0xff]
      %v3961 = vld [vmem:[#allocation5 + $0x40] sm:$0xff]
      %v3962 = vld [vmem:[#allocation5 + $0x48] sm:$0xff]
      %v3963 = vld [vmem:[#allocation5 + $0x50] sm:$0xff]
      %v3964 = vld [vmem:[#allocation5 + $0x58] sm:$0xff]
      %v3965 = vld [vmem:[#allocation5 + $0x60] sm:$0xff]
      %v3966 = vld [vmem:[#allocation5 + $0x68] sm:$0xff]
      %v3967 = vld [vmem:[#allocation5 + $0x70] sm:$0xff]
      %v3968 = vld [vmem:[#allocation5 + $0x78] sm:$0xff]
      %v3969 = vld [vmem:[#allocation5 + $0x80] sm:$0xff]
      %v3970 = vld [vmem:[#allocation5 + $0x88] sm:$0xff]
      %v3971 = vld [vmem:[#allocation5 + $0x90] sm:$0xff]
      %v3972 = vld [vmem:[#allocation5 + $0x98] sm:$0xff]
      %v3973 = vld [vmem:[#allocation5 + $0xa0] sm:$0xff]
      %v3974 = vld [vmem:[#allocation5 + $0xa8] sm:$0xff]
      %v3975 = vld [vmem:[#allocation5 + $0xb0] sm:$0xff]
      %v3976 = vld [vmem:[#allocation5 + $0xb8] sm:$0xff]
      %v3977 = vld [vmem:[#allocation5 + $0xc0] sm:$0xff]
      %v3978 = vld [vmem:[#allocation5 + $0xc8] sm:$0xff]
      %v3979 = vld [vmem:[#allocation5 + $0xd0] sm:$0xff]
      %v3980 = vld [vmem:[#allocation5 + $0xd8] sm:$0xff]
      %v3981 = vld [vmem:[#allocation5 + $0xe0] sm:$0xff]
      %v3982 = vld [vmem:[#allocation5 + $0xe8] sm:$0xff]
      %v3983 = vld [vmem:[#allocation5 + $0xf0] sm:$0xff]
      %v3984 = vld [vmem:[#allocation5 + $0xf8] sm:$0xff]
      %v3985 = vld [vmem:[#allocation5 + $0x100] sm:$0xff]
      %v3986 = vld [vmem:[#allocation5 + $0x108] sm:$0xff]
      %v3987 = vld [vmem:[#allocation5 + $0x110] sm:$0xff]
      %v3988 = vld [vmem:[#allocation5 + $0x118] sm:$0xff]
      %v3989 = vld [vmem:[#allocation5 + $0x120] sm:$0xff]
      %v3990 = vld [vmem:[#allocation5 + $0x128] sm:$0xff]
      %v3991 = vld [vmem:[#allocation5 + $0x130] sm:$0xff]
      %v3992 = vld [vmem:[#allocation5 + $0x138] sm:$0xff]
      %v3993 = vld [vmem:[#allocation5 + $0x140] sm:$0xff]
      %v3994 = vld [vmem:[#allocation5 + $0x148] sm:$0xff]
      %v3995 = vld [vmem:[#allocation5 + $0x150] sm:$0xff]
      %v3996 = vld [vmem:[#allocation5 + $0x158] sm:$0xff]
      %v3997 = vld [vmem:[#allocation5 + $0x160] sm:$0xff]
      %v3998 = vld [vmem:[#allocation5 + $0x168] sm:$0xff]
      %v3999 = vld [vmem:[#allocation5 + $0x170] sm:$0xff]
      %v4000 = vld [vmem:[#allocation5 + $0x178] sm:$0xff]
      %v4001 = vld [vmem:[#allocation5 + $0x180] sm:$0xff]
      %v4002 = vld [vmem:[#allocation5 + $0x188] sm:$0xff]
      %v4003 = vld [vmem:[#allocation5 + $0x190] sm:$0xff]
      %v4004 = vld [vmem:[#allocation5 + $0x198] sm:$0xff]
      %v4005 = vld [vmem:[#allocation5 + $0x1a0] sm:$0xff]
      %v4006 = vld [vmem:[#allocation5 + $0x1a8] sm:$0xff]
      %v4007 = vld [vmem:[#allocation5 + $0x1b0] sm:$0xff]
      %v4008 = vld [vmem:[#allocation5 + $0x1b8] sm:$0xff]
      %v4009 = vld [vmem:[#allocation5 + $0x1c0] sm:$0xff]
      %v4010 = vld [vmem:[#allocation5 + $0x1c8] sm:$0xff]
      %v4011 = vld [vmem:[#allocation5 + $0x1d0] sm:$0xff]
      %v4012 = vld [vmem:[#allocation5 + $0x1d8] sm:$0xff]
      %v4013 = vld [vmem:[#allocation5 + $0x1e0] sm:$0xff]
      %v4014 = vld [vmem:[#allocation5 + $0x1e8] sm:$0xff]
      %v4015 = vld [vmem:[#allocation5 + $0x1f0] sm:$0xff]
      %v4016 = vld [vmem:[#allocation5 + $0x1f8] sm:$0xff]
      %v4017 = vld [vmem:[#allocation5 + $0x200] sm:$0xff]
      %v4018 = vld [vmem:[#allocation5 + $0x208] sm:$0xff]
      %v4019 = vld [vmem:[#allocation5 + $0x210] sm:$0xff]
      %v4020 = vld [vmem:[#allocation5 + $0x218] sm:$0xff]
      %v4021 = vld [vmem:[#allocation5 + $0x220] sm:$0xff]
      %v4022 = vld [vmem:[#allocation5 + $0x228] sm:$0xff]
      %v4023 = vld [vmem:[#allocation5 + $0x230] sm:$0xff]
      %v4024 = vld [vmem:[#allocation5 + $0x238] sm:$0xff]
      %v4025 = vld [vmem:[#allocation5 + $0x240] sm:$0xff]
      %v4026 = vld [vmem:[#allocation5 + $0x248] sm:$0xff]
      %v4027 = vld [vmem:[#allocation5 + $0x250] sm:$0xff]
      %v4028 = vld [vmem:[#allocation5 + $0x258] sm:$0xff]
      %v4029 = vld [vmem:[#allocation5 + $0x260] sm:$0xff]
      %v4030 = vld [vmem:[#allocation5 + $0x268] sm:$0xff]
      %v4031 = vld [vmem:[#allocation5 + $0x270] sm:$0xff]
      %v4032 = vld [vmem:[#allocation5 + $0x278] sm:$0xff]
      %v4033 = vld [vmem:[#allocation5 + $0x280] sm:$0xff]
      %v4034 = vld [vmem:[#allocation5 + $0x288] sm:$0xff]
      %v4035 = vld [vmem:[#allocation5 + $0x290] sm:$0xff]
      %v4036 = vld [vmem:[#allocation5 + $0x298] sm:$0xff]
      %v4037 = vld [vmem:[#allocation5 + $0x2a0] sm:$0xff]
      %v4038 = vld [vmem:[#allocation5 + $0x2a8] sm:$0xff]
      %v4039 = vld [vmem:[#allocation5 + $0x2b0] sm:$0xff]
      %v4040 = vld [vmem:[#allocation5 + $0x2b8] sm:$0xff]
      %v4041 = vld [vmem:[#allocation5 + $0x2c0] sm:$0xff]
      %v4042 = vld [vmem:[#allocation5 + $0x2c8] sm:$0xff]
      %v4043 = vld [vmem:[#allocation5 + $0x2d0] sm:$0xff]
      %v4044 = vld [vmem:[#allocation5 + $0x2d8] sm:$0xff]
      %v4045 = vld [vmem:[#allocation5 + $0x2e0] sm:$0xff]
      %v4046 = vld [vmem:[#allocation5 + $0x2e8] sm:$0xff]
      %v4047 = vld [vmem:[#allocation5 + $0x2f0] sm:$0xff]
      %v4048 = vld [vmem:[#allocation5 + $0x2f8] sm:$0xff]
      %v4049 = vld [vmem:[%s9] sm:$0xf]
      %4051 = vset.pattern.permute.xlu0 0
      %4052 = vperm.xlu0 %4051, %v4049
      %v4053 = vpop.permute.xlu0 %4052
      %v4057 = vcombine.high %v3951, %v3951
      %v4059 = vsel %vm380, %v3952, 0
      %v4062 = vsel %vm380, %v3955, 0
      %v4065 = vsel %vm380, %v3958, 0
      %v4068 = vsel %vm380, %v3961, 0
      %v4071 = vsel %vm380, %v3964, 0
      %v4074 = vsel %vm380, %v3967, 0
      %v4077 = vsel %vm380, %v3970, 0
      %v4080 = vsel %vm380, %v3973, 0
      %v4083 = vsel %vm380, %v3976, 0
      %v4086 = vsel %vm380, %v3979, 0
      %v4089 = vsel %vm380, %v3982, 0
      %v4092 = vsel %vm380, %v3985, 0
      %v4095 = vsel %vm380, %v3988, 0
      %v4098 = vsel %vm380, %v3991, 0
      %v4101 = vsel %vm380, %v3994, 0
      %v4104 = vsel %vm380, %v3997, 0
      %v4107 = vsel %vm380, %v4000, 0
      %v4110 = vsel %vm380, %v4003, 0
      %v4113 = vsel %vm380, %v4006, 0
      %v4116 = vsel %vm380, %v4009, 0
      %v4119 = vsel %vm380, %v4012, 0
      %v4122 = vsel %vm380, %v4015, 0
      %v4125 = vsel %vm380, %v4018, 0
      %v4128 = vsel %vm380, %v4021, 0
      %v4131 = vsel %vm380, %v4024, 0
      %v4134 = vsel %vm380, %v4027, 0
      %v4137 = vsel %vm380, %v4030, 0
      %v4140 = vsel %vm380, %v4033, 0
      %v4143 = vsel %vm380, %v4036, 0
      %v4146 = vsel %vm380, %v4039, 0
      %v4149 = vsel %vm380, %v4042, 0
      %v4152 = vsel %vm380, %v4045, 0
      %v4155 = vsel %vm380, %v4048, 0
      %4157 = vmatprep.subr.mxu0 %v3954
      %4158 = vmatpush1.xpose.msra.mxu0 %v3953
      %4159 = vmatprep.subr.mxu0 %v3957
      %4160 = vmatpush1.xpose.msra.mxu0 %v3956
      %4161 = vmatprep.subr.mxu0 %v3960
      %4162 = vmatpush1.xpose.msra.mxu0 %v3959
      %4163 = vmatprep.subr.mxu0 %v3963
      %4164 = vmatpush1.xpose.msra.mxu0 %v3962
      %4165 = vmatprep.subr.mxu0 %v3966
      %4166 = vmatpush1.xpose.msra.mxu0 %v3965
      %4167 = vmatprep.subr.mxu0 %v3969
      %4168 = vmatpush1.xpose.msra.mxu0 %v3968
      %4169 = vmatprep.subr.mxu0 %v3972
      %4170 = vmatpush1.xpose.msra.mxu0 %v3971
      %4171 = vmatprep.subr.mxu0 %v3975
      %4172 = vmatpush1.xpose.msra.mxu0 %v3974
      %4173 = vmatprep.subr.mxu0 %v3978
      %4174 = vmatpush1.xpose.msra.mxu0 %v3977
      %4175 = vmatprep.subr.mxu0 %v3981
      %4176 = vmatpush1.xpose.msra.mxu0 %v3980
      %4177 = vmatprep.subr.mxu0 %v3984
      %4178 = vmatpush1.xpose.msra.mxu0 %v3983
      %4179 = vmatprep.subr.mxu0 %v3987
      %4180 = vmatpush1.xpose.msra.mxu0 %v3986
      %4181 = vmatprep.subr.mxu0 %v3990
      %4182 = vmatpush1.xpose.msra.mxu0 %v3989
      %4183 = vmatprep.subr.mxu0 %v3993
      %4184 = vmatpush1.xpose.msra.mxu0 %v3992
      %4185 = vmatprep.subr.mxu0 %v3996
      %4186 = vmatpush1.xpose.msra.mxu0 %v3995
      %4187 = vmatprep.subr.mxu0 %v3999
      %4188 = vmatpush1.xpose.msra.mxu0 %v3998
      %4189 = vmatprep.subr.mxu0 %v4002
      %4190 = vmatpush1.xpose.msra.mxu0 %v4001
      %4191 = vmatprep.subr.mxu0 %v4005
      %4192 = vmatpush1.xpose.msra.mxu0 %v4004
      %4193 = vmatprep.subr.mxu0 %v4008
      %4194 = vmatpush1.xpose.msra.mxu0 %v4007
      %4195 = vmatprep.subr.mxu0 %v4011
      %4196 = vmatpush1.xpose.msra.mxu0 %v4010
      %4197 = vmatprep.subr.mxu0 %v4014
      %4198 = vmatpush1.xpose.msra.mxu0 %v4013
      %4199 = vmatprep.subr.mxu0 %v4017
      %4200 = vmatpush1.xpose.msra.mxu0 %v4016
      %4201 = vmatprep.subr.mxu0 %v4020
      %4202 = vmatpush1.xpose.msra.mxu0 %v4019
      %4203 = vmatprep.subr.mxu0 %v4023
      %4204 = vmatpush1.xpose.msra.mxu0 %v4022
      %4205 = vmatprep.subr.mxu0 %v4026
      %4206 = vmatpush1.xpose.msra.mxu0 %v4025
      %4207 = vmatprep.subr.mxu0 %v4029
      %4208 = vmatpush1.xpose.msra.mxu0 %v4028
      %4209 = vmatprep.subr.mxu0 %v4032
      %4210 = vmatpush1.xpose.msra.mxu0 %v4031
      %4211 = vmatprep.subr.mxu0 %v4035
      %4212 = vmatpush1.xpose.msra.mxu0 %v4034
      %4213 = vmatprep.subr.mxu0 %v4038
      %4214 = vmatpush1.xpose.msra.mxu0 %v4037
      %4215 = vmatprep.subr.mxu0 %v4041
      %4216 = vmatpush1.xpose.msra.mxu0 %v4040
      %4217 = vmatprep.subr.mxu0 %v4044
      %4218 = vmatpush1.xpose.msra.mxu0 %v4043
      %4219 = vmatprep.subr.mxu0 %v4047
      %4220 = vmatpush1.xpose.msra.mxu0 %v4046
      %4221 = vmatprep.mubr.f32.mxu0 %v4057
      %4222 = vmatmul.mubr.f32.gmra.mrb[0].mxu0 %v3951
      %v4223 = vpop.f32.mrb[0].mxu0
      %v4224 = vadd.f32 %v4053, %v4223
      %v4225 = vpop.f32.mrb[0].mxu0
      %v4226 = vadd.f32 %v4053, %v4225
      %4227 = vdwg.mxu0
      %4228 = vmatprep.subr.mxu0 0.0
      %4229 = vmatpush1.xpose.msra.mxu0 %v4062
      %4230 = vmatprep.subr.mxu0 0.0
      %4231 = vmatpush1.xpose.msra.mxu0 %v4065
      %4232 = vmatprep.subr.mxu0 0.0
      %4233 = vmatpush1.xpose.msra.mxu0 %v4068
      %4234 = vmatprep.subr.mxu0 0.0
      %4235 = vmatpush1.xpose.msra.mxu0 %v4071
      %4236 = vmatprep.subr.mxu0 0.0
      %4237 = vmatpush1.xpose.msra.mxu0 %v4074
      %4238 = vmatprep.subr.mxu0 0.0
      %4239 = vmatpush1.xpose.msra.mxu0 %v4077
      %4240 = vmatprep.subr.mxu0 0.0
      %4241 = vmatpush1.xpose.msra.mxu0 %v4080
      %4242 = vmatprep.subr.mxu0 0.0
      %4243 = vmatpush1.xpose.msra.mxu0 %v4083
      %4244 = vmatprep.subr.mxu0 0.0
      %4245 = vmatpush1.xpose.msra.mxu0 %v4086
      %4246 = vmatprep.subr.mxu0 0.0
      %4247 = vmatpush1.xpose.msra.mxu0 %v4089
      %4248 = vmatprep.subr.mxu0 0.0
      %4249 = vmatpush1.xpose.msra.mxu0 %v4092
      %4250 = vmatprep.subr.mxu0 0.0
      %4251 = vmatpush1.xpose.msra.mxu0 %v4095
      %4252 = vmatprep.subr.mxu0 0.0
      %4253 = vmatpush1.xpose.msra.mxu0 %v4098
      %4254 = vmatprep.subr.mxu0 0.0
      %4255 = vmatpush1.xpose.msra.mxu0 %v4101
      %4256 = vmatprep.subr.mxu0 0.0
      %4257 = vmatpush1.xpose.msra.mxu0 %v4104
      %4258 = vmatprep.subr.mxu0 0.0
      %4259 = vmatpush1.xpose.msra.mxu0 %v4107
      %4260 = vmatprep.subr.mxu0 0.0
      %4261 = vmatpush1.xpose.msra.mxu0 %v4110
      %4262 = vmatprep.subr.mxu0 0.0
      %4263 = vmatpush1.xpose.msra.mxu0 %v4113
      %4264 = vmatprep.subr.mxu0 0.0
      %4265 = vmatpush1.xpose.msra.mxu0 %v4116
      %4266 = vmatprep.subr.mxu0 0.0
      %4267 = vmatpush1.xpose.msra.mxu0 %v4119
      %4268 = vmatprep.subr.mxu0 0.0
      %4269 = vmatpush1.xpose.msra.mxu0 %v4122
      %4270 = vmatprep.subr.mxu0 0.0
      %4271 = vmatpush1.xpose.msra.mxu0 %v4125
      %4272 = vmatprep.subr.mxu0 0.0
      %4273 = vmatpush1.xpose.msra.mxu0 %v4128
      %4274 = vmatprep.subr.mxu0 0.0
      %4275 = vmatpush1.xpose.msra.mxu0 %v4131
      %4276 = vmatprep.subr.mxu0 0.0
      %4277 = vmatpush1.xpose.msra.mxu0 %v4134
      %4278 = vmatprep.subr.mxu0 0.0
      %4279 = vmatpush1.xpose.msra.mxu0 %v4137
      %4280 = vmatprep.subr.mxu0 0.0
      %4281 = vmatpush1.xpose.msra.mxu0 %v4140
      %4282 = vmatprep.subr.mxu0 0.0
      %4283 = vmatpush1.xpose.msra.mxu0 %v4143
      %4284 = vmatprep.subr.mxu0 0.0
      %4285 = vmatpush1.xpose.msra.mxu0 %v4146
      %4286 = vmatprep.subr.mxu0 0.0
      %4287 = vmatpush1.xpose.msra.mxu0 %v4149
      %4288 = vmatprep.subr.mxu0 0.0
      %4289 = vmatpush1.xpose.msra.mxu0 %v4152
      %4290 = vmatprep.subr.mxu0 0.0
      %4291 = vmatpush1.xpose.msra.mxu0 %v4155
      %4292 = vmatprep.mubr.f32.mxu0 0.0
      %4293 = vmatmul.mubr.f32.gmra.mrb[0].mxu0 %v4059
      %v4294 = vpop.f32.mrb[0].mxu0
      %v4295 = vadd.f32 %v4224, %v4294
      %v4296 = vpop.f32.mrb[0].mxu0
      %v4297 = vadd.f32 %v4226, %v4296
      %4298 = vdwg.mxu0
      %v4301 = vcombine.low %v4295, %v4297
      %4303 = vst [vmem:[%s373] sm:$0xff] %v4301
      %p4304 = scmp.lt.s32.totalorder %s21, 1
      %s4305 = scalar_select %p4304, %s21, 1
      %s4306 = smul.addr %s4305, 2
      %s4307 = smul.addr %s4306, 4
      %s4308 = scalar_lea.vmem %s10, %s4307
      // Predicated region
      $region61: #{diffusion_forward_pallas.1} parent=59 // pred_check
        %p4309 = pneg %p259
      $region62: #{diffusion_forward_pallas.1} parent=59 // pred_check_branch
        %4311 = sbr.rel (%p4309) target = $region64
      $region63: #{diffusion_forward_pallas.1} parent=59 // pred_region
        _
      $region64: #{diffusion_forward_pallas.1} parent=59 // pred_fallthru
        _
    $region60: #{diffusion_forward_pallas.1} parent=5 // pred_fallthru
      _
    %p4312 = scmp.le.s32.totalorder 2, %s16
    // Predicated region
    $region65: #{diffusion_forward_pallas.1} parent=5 // pred_check
      %p4313 = pneg %p4312
    $region66: #{diffusion_forward_pallas.1} parent=5 // pred_check_branch
      %4315 = sbr.rel (%p4313) target = $region68
    $region67: #{diffusion_forward_pallas.1} parent=5 // pred_region
      %s4316 = ssub.s32 %s16, 2
      // Predicated region
      $region69: #{diffusion_forward_pallas.1} parent=67 // pred_check
        %p4317 = pneg %p265
      $region70: #{diffusion_forward_pallas.1} parent=67 // pred_check_branch
        %4319 = sbr.rel (%p4317) target = $region72
      $region71: #{diffusion_forward_pallas.1} parent=67 // pred_region
        %p4320 = scmp.lt.s32.totalorder %s22, 1
        %s4321 = scalar_select %p4320, %s22, 1
        %s4322 = smul.addr %s4321, 2
        %s4323 = smul.addr %s4322, 4
        %s4324 = scalar_lea.vmem %s10, %s4323
      $region72: #{diffusion_forward_pallas.1} parent=67 // pred_fallthru
        _
    $region68: #{diffusion_forward_pallas.1} parent=5 // pred_fallthru
      _
  $region6: #{diffusion_forward_pallas.1} parent=0 // loop_footer
    %s20 = sadd.s32 1, %s16
  $region7: #{diffusion_forward_pallas.1} parent=0 // loop_footer_branch
    %15 = sbr.rel target = $region3
  $region8: #{diffusion_forward_pallas.1} parent=0 // loop_exit
    _

</llo_original>
